<compile_context>
chip_gen: v5e
topology: v5e:2x2
jax: 0.10.0
libtpu: 0.0.40
codegen_flags: <defaults>
</compile_context>

<pallas_src>
import functools

import jax
import jax.numpy as jnp
from jax.experimental import pallas as pl
from jax.experimental.pallas import tpu as pltpu


def _flash_attn_kernel(q_ref, k_ref, v_ref, o_ref, m_sc, l_sc, acc_sc, *,
                       kv_len, kv_tile, use_bf16_exp, need_mask):
    ki = pl.program_id(2)

    @pl.when(ki == 0)
    def _init():
        m_sc[...] = jnp.full_like(m_sc, -jnp.inf)
        l_sc[...] = jnp.zeros_like(l_sc)
        acc_sc[...] = jnp.zeros_like(acc_sc)

    q = q_ref[0]                               # (TQ, c8p)  bf16
    k = k_ref[0]                               # (c8p, TK)  bf16, channel-major
    v = v_ref[0]                               # (TK, C)    bf16

    # energy tile = Q @ K  (K already channel-major: native MXU orientation,
    # no per-step transpose, no transposed-RHS contraction).
    energy = jnp.dot(q, k, preferred_element_type=jnp.float32)   # (TQ, TK) f32

    if need_mask:
        # Mask padded key columns (pixel axis padded to a multiple of 128).
        col = jax.lax.broadcasted_iota(jnp.int32, (1, kv_tile), 1) + ki * kv_tile
        energy = jnp.where(col < kv_len, energy, -jnp.inf)

    # Online (flash) softmax; statistics stay f32.
    m_prev = m_sc[...]                                           # (TQ, 1)
    m_new = jnp.maximum(m_prev, jnp.max(energy, axis=-1, keepdims=True))
    alpha = jnp.exp(m_prev - m_new)                              # (TQ, 1)
    shifted = energy - m_new
    if use_bf16_exp:
        # bf16 EUP exp on v6e/v7x (~2x exp throughput); p is consumed in bf16
        # by the PV matmul anyway.  l is still accumulated in f32 below.
        p = jnp.exp(shifted.astype(jnp.bfloat16))                # (TQ, TK) bf16
    else:
        p = jnp.exp(shifted)                                     # (TQ, TK) f32

    l_sc[...] = alpha * l_sc[...] + jnp.sum(p.astype(jnp.float32),
                                            axis=-1, keepdims=True)
    acc_sc[...] = alpha * acc_sc[...] + jnp.dot(
        p.astype(jnp.bfloat16), v, preferred_element_type=jnp.float32)
    m_sc[...] = m_new

    @pl.when(ki == pl.num_programs(2) - 1)
    def _finalize():
        inv_l = pl.reciprocal(l_sc[...], approx=True)            # (TQ, 1)
        # Store channel-major (C, TQ): lane dim = TQ (multiple of 128).
        o_ref[0] = (acc_sc[...] * inv_l).T.astype(o_ref.dtype)


def _auto_tile(hw_padded):
    for t in (512, 256, 128):
        if hw_padded % t == 0:
            return t
    return 128  # unreachable: hw_padded is always a multiple of 128


def _pad_cols(a, n):
    pad = n - a.shape[-1]
    return a if pad <= 0 else jnp.pad(a, ((0, 0), (0, pad)))


def _bf16_exp_ok():
    # bf16 EUP/VPU exists on v6e / v7x only; fall back to f32 exp elsewhere.
    try:
        kind = jax.devices()[0].device_kind.lower()
    except Exception:
        return False
    return ("v6" in kind) or ("v7" in kind) or ("7x" in kind)


def self_attention_pallas(x, wq, bq, wk, bk, wv, bv, *, tq=None, tk=None):
    """x: (B, C, H, W) f32.  Conv1x1 weights in matmul form w*: (C_in, C_out),
    biases b*: (1, C_out).  Returns (B, C_in, H, W) f32."""
    B, C, H, W = x.shape
    HW = H * W
    C8 = wq.shape[1]
    assert C8 >= 1, "in_channels must be >= 8 for in_channels // 8 projections"

    # Pad the pixel axis to a multiple of 128 (lane-dense stores, aligned
    # tiles); padded keys are masked inside the kernel, padded query rows are
    # sliced off on the host.
    HWp = ((HW + 127) // 128) * 128
    need_mask = HWp != HW

    if tq is None:
        tq = _auto_tile(HWp)
        # v7x has 2 TensorCores: keep >= 2 steps on the parallel grid axes.
        if B * (HWp // tq) < 2 and tq > 128 and HWp % (tq // 2) == 0:
            tq //= 2
    if tk is None:
        tk = _auto_tile(HWp)
    assert HWp % tq == 0 and HWp % tk == 0, "tile must divide padded H*W"

    # Free reshape (channel-major pixels), plus zero-padding of the pixel axis.
    x_cm = x.reshape(B, C, HW)
    if need_mask:
        x_cm = jnp.pad(x_cm, ((0, 0), (0, 0), (0, HWp - HW)))

    # ---- Hoisted 1x1-conv projections: once per batch, tiny XLA matmuls. ----
    # Q/K width padded with zero columns to 128 lanes (mathematically exact).
    c8p = ((C8 + 127) // 128) * 128
    wq_p, wk_p = _pad_cols(wq, c8p), _pad_cols(wk, c8p)
    bq_p, bk_p = _pad_cols(bq, c8p), _pad_cols(bk, c8p)

    q = (jnp.einsum("bch,co->bho", x_cm, wq_p) + bq_p).astype(jnp.bfloat16)
    # K produced channel-major -> natural (TQ,c8p)@(c8p,TK) energy matmul.
    k_cm = (jnp.einsum("bch,co->boh", x_cm, wk_p)
            + bk_p[:, :, None]).astype(jnp.bfloat16)
    v = (jnp.einsum("bch,co->bho", x_cm, wv) + bv).astype(jnp.bfloat16)

    kernel = functools.partial(
        _flash_attn_kernel, kv_len=HW, kv_tile=tk,
        use_bf16_exp=_bf16_exp_ok(), need_mask=need_mask)

    grid = (B, HWp // tq, HWp // tk)

    out_cm = pl.pallas_call(
        kernel,
        out_shape=jax.ShapeDtypeStruct((B, C, HWp), jnp.float32),
        grid_spec=pltpu.PrefetchScalarGridSpec(
            num_scalar_prefetch=0,
            grid=grid,
            in_specs=[
                # Q tile: block index constant across ki -> fetched once/q-tile.
                pl.BlockSpec((1, tq, c8p), lambda b, qi, ki: (b, qi, 0)),
                # K tile (channel-major) and V tile: stream along ki.
                pl.BlockSpec((1, c8p, tk), lambda b, qi, ki: (b, 0, ki)),
                pl.BlockSpec((1, tk, C), lambda b, qi, ki: (b, ki, 0)),
            ],
            out_specs=pl.BlockSpec((1, C, tq), lambda b, qi, ki: (b, 0, qi)),
            scratch_shapes=[
                pltpu.VMEM((tq, 1), jnp.float32),   # running max m
                pltpu.VMEM((tq, 1), jnp.float32),   # running sum l
                pltpu.VMEM((tq, C), jnp.float32),   # output accumulator
            ]),
        compiler_params=pltpu.CompilerParams(
            dimension_semantics=("parallel", "parallel", "arbitrary"),
            vmem_limit_bytes=32 * 1024 * 1024),
    )(q, k_cm, v)

    out_cm = out_cm[:, :, :HW] if need_mask else out_cm
    return out_cm.reshape(B, C, H, W)   # free reshape back to NCHW


def _reference(x, wq, bq, wk, bk, wv, bv):
    B, C, H, W = x.shape
    HW = H * W
    xp = jnp.transpose(x.reshape(B, C, HW), (0, 2, 1))            # (B, HW, C)
    q = xp @ wq + bq                                              # (B, HW, C8)
    k = xp @ wk + bk
    v = xp @ wv + bv                                              # (B, HW, C)
    energy = jnp.einsum("bqc,bkc->bqk", q, k)
    attn = jax.nn.softmax(energy, axis=-1)
    out = jnp.einsum("bqk,bkc->bqc", attn, v)
    return jnp.transpose(out, (0, 2, 1)).reshape(B, C, H, W)


if __name__ == "__main__":
    key = jax.random.PRNGKey(0)
    B, Cin, H, W = 2, 16, 32, 32       # HW=1024 -> default tq=tk=512, grid (2,2,2)
    C8 = Cin // 8

    ks = jax.random.split(key, 8)
    x = jax.random.normal(ks[0], (B, Cin, H, W), dtype=jnp.float32)

    # Conv2d(kernel_size=1) weights (out, in, 1, 1) expressed directly as
    # matmul matrices of shape (C_in, C_out); biases as (1, C_out).
    wq = jax.random.normal(ks[1], (Cin, C8), dtype=jnp.float32) * 0.1
    bq = jax.random.normal(ks[2], (1, C8), dtype=jnp.float32) * 0.1
    wk = jax.random.normal(ks[3], (Cin, C8), dtype=jnp.float32) * 0.1
    bk = jax.random.normal(ks[4], (1, C8), dtype=jnp.float32) * 0.1
    wv = jax.random.normal(ks[5], (Cin, Cin), dtype=jnp.float32) * 0.1
    bv = jax.random.normal(ks[6], (1, Cin), dtype=jnp.float32) * 0.1

    # Main path: default 512 tiles, multi-KV-tile flash loop, 4 parallel steps.
    out = jax.block_until_ready(self_attention_pallas(x, wq, bq, wk, bk, wv, bv))
    ref = _reference(x, wq, bq, wk, bk, wv, bv)
    assert out.shape == (B, Cin, H, W)
    # Tolerance accounts for bf16 MXU operands (f32 accumulation / f32 stats).
    assert jnp.allclose(out, ref, atol=1e-2, rtol=1e-2), "mismatch vs reference"

    # Non-multiple-of-128 spatial size exercises the padded/masked KV path.
    H2 = W2 = 10
    x2 = jax.random.normal(ks[7], (1, Cin, H2, W2), dtype=jnp.float32)
    out2 = jax.block_until_ready(self_attention_pallas(x2, wq, bq, wk, bk, wv, bv))
    ref2 = _reference(x2, wq, bq, wk, bk, wv, bv)
    assert out2.shape == (1, Cin, H2, W2)
    assert jnp.allclose(out2, ref2, atol=1e-2, rtol=1e-2), "mismatch (masked path)"

    print("KERNEL_OK")
</pallas_src>

<mosaic_0001>
module attributes {stable_mosaic.version = 11 : i64} {
  func.func @_flash_attn_kernel(%arg0: i32, %arg1: i32, %arg2: i32, %arg3: memref<1x512x128xbf16, #tpu.memory_space<vmem>>, %arg4: memref<1x128x512xbf16, #tpu.memory_space<vmem>>, %arg5: memref<1x512x16xbf16, #tpu.memory_space<vmem>>, %arg6: memref<1x16x512xf32, #tpu.memory_space<vmem>>, %arg7: memref<512x1xf32, #tpu.memory_space<vmem>>, %arg8: memref<512x1xf32, #tpu.memory_space<vmem>>, %arg9: memref<512x16xf32, #tpu.memory_space<vmem>>) attributes {dimension_semantics = [#tpu.dimension_semantics<parallel>, #tpu.dimension_semantics<parallel>, #tpu.dimension_semantics<arbitrary>], iteration_bounds = array<i64: 2, 2, 2>, scalar_prefetch = 0 : i64, scratch_operands = 3 : i64, tpu.core_type = #tpu.core_type<tc>, window_params = [{transform_indices = @transform_0, window_bounds = array<i64: 1, 512, 128>}, {transform_indices = @transform_1, window_bounds = array<i64: 1, 128, 512>}, {transform_indices = @transform_2, window_bounds = array<i64: 1, 512, 16>}, {transform_indices = @transform_3, window_bounds = array<i64: 1, 16, 512>}]} {
    %c0_i32 = arith.constant 0 : i32
    %0 = arith.cmpi eq, %arg2, %c0_i32 : i32
    %1 = arith.extui %0 : i1 to i32
    %c0_i32_0 = arith.constant 0 : i32
    %2 = arith.cmpi ne, %1, %c0_i32_0 : i32
    scf.if %2 {
      %cst_25 = arith.constant 0xFF800000 : f32
      %36 = vector.broadcast %cst_25 : f32 to vector<512x1xf32>
      %c0_26 = arith.constant 0 : index
      %c0_27 = arith.constant 0 : index
      %37 = vector.load %arg7[%c0_26, %c0_27] : memref<512x1xf32, #tpu.memory_space<vmem>>, vector<512x1xf32>
      tpu.vector_store %arg7[%c0_26, %c0_27], %36 {strides = array<i32>} : memref<512x1xf32, #tpu.memory_space<vmem>>, vector<512x1xf32>,
      %cst_28 = arith.constant 0.000000e+00 : f32
      %38 = vector.broadcast %cst_28 : f32 to vector<512x1xf32>
      %c0_29 = arith.constant 0 : index
      %c0_30 = arith.constant 0 : index
      %39 = vector.load %arg8[%c0_29, %c0_30] : memref<512x1xf32, #tpu.memory_space<vmem>>, vector<512x1xf32>
      tpu.vector_store %arg8[%c0_29, %c0_30], %38 {strides = array<i32>} : memref<512x1xf32, #tpu.memory_space<vmem>>, vector<512x1xf32>,
      %cst_31 = arith.constant 0.000000e+00 : f32
      %40 = vector.broadcast %cst_31 : f32 to vector<512x16xf32>
      %c0_32 = arith.constant 0 : index
      %c0_33 = arith.constant 0 : index
      %41 = vector.load %arg9[%c0_32, %c0_33] : memref<512x16xf32, #tpu.memory_space<vmem>>, vector<512x16xf32>
      tpu.vector_store %arg9[%c0_32, %c0_33], %40 {strides = array<i32>} : memref<512x16xf32, #tpu.memory_space<vmem>>, vector<512x16xf32>,
    } else {
    }
    %c0 = arith.constant 0 : index
    %c0_1 = arith.constant 0 : index
    %c0_2 = arith.constant 0 : index
    %3 = vector.load %arg3[%c0, %c0_1, %c0_2] : memref<1x512x128xbf16, #tpu.memory_space<vmem>>, vector<1x512x128xbf16>
    %4 = vector.shape_cast %3 : vector<1x512x128xbf16> to vector<512x128xbf16>
    %c0_3 = arith.constant 0 : index
    %c0_4 = arith.constant 0 : index
    %c0_5 = arith.constant 0 : index
    %5 = vector.load %arg4[%c0_3, %c0_4, %c0_5] : memref<1x128x512xbf16, #tpu.memory_space<vmem>>, vector<1x128x512xbf16>
    %6 = vector.shape_cast %5 : vector<1x128x512xbf16> to vector<128x512xbf16>
    %c0_6 = arith.constant 0 : index
    %c0_7 = arith.constant 0 : index
    %c0_8 = arith.constant 0 : index
    %7 = vector.load %arg5[%c0_6, %c0_7, %c0_8] : memref<1x512x16xbf16, #tpu.memory_space<vmem>>, vector<1x512x16xbf16>
    %8 = vector.shape_cast %7 : vector<1x512x16xbf16> to vector<512x16xbf16>
    %cst = arith.constant dense<0.000000e+00> : vector<512x512xf32>
    %9 = tpu.matmul %4, %6, %cst {dimension_numbers = #tpu.dot_dimension_numbers<[1], [0], [0], [1], [0, 0, 1, 1], [], []>} : vector<512x128xbf16>, vector<128x512xbf16>, vector<512x512xf32> -> vector<512x512xf32>
    %c0_9 = arith.constant 0 : index
    %c0_10 = arith.constant 0 : index
    %10 = vector.load %arg7[%c0_9, %c0_10] : memref<512x1xf32, #tpu.memory_space<vmem>>, vector<512x1xf32>
    %cst_11 = arith.constant dense<0xFF800000> : vector<512xf32>
    %11 = vector.multi_reduction <maximumf>, %9, %cst_11 [1] : vector<512x512xf32> to vector<512xf32>
    %12 = vector.shape_cast %11 : vector<512xf32> to vector<512x1xf32>
    %13 = arith.maximumf %10, %12 : vector<512x1xf32>
    %14 = arith.subf %10, %13 : vector<512x1xf32>
    %15 = math.exp %14 : vector<512x1xf32>
    %16 = vector.broadcast %13 : vector<512x1xf32> to vector<512x512xf32>
    %17 = arith.subf %9, %16 : vector<512x512xf32>
    %18 = math.exp %17 : vector<512x512xf32>
    %c0_12 = arith.constant 0 : index
    %c0_13 = arith.constant 0 : index
    %19 = vector.load %arg8[%c0_12, %c0_13] : memref<512x1xf32, #tpu.memory_space<vmem>>, vector<512x1xf32>
    %20 = arith.mulf %15, %19 : vector<512x1xf32>
    %cst_14 = arith.constant dense<0.000000e+00> : vector<512xf32>
    %21 = vector.multi_reduction <add>, %18, %cst_14 [1] : vector<512x512xf32> to vector<512xf32>
    %22 = vector.shape_cast %21 : vector<512xf32> to vector<512x1xf32>
    %23 = arith.addf %20, %22 : vector<512x1xf32>
    %c0_15 = arith.constant 0 : index
    %c0_16 = arith.constant 0 : index
    %24 = vector.load %arg8[%c0_15, %c0_16] : memref<512x1xf32, #tpu.memory_space<vmem>>, vector<512x1xf32>
    tpu.vector_store %arg8[%c0_15, %c0_16], %23 {strides = array<i32>} : memref<512x1xf32, #tpu.memory_space<vmem>>, vector<512x1xf32>,
    %c0_17 = arith.constant 0 : index
    %c0_18 = arith.constant 0 : index
    %25 = vector.load %arg9[%c0_17, %c0_18] : memref<512x16xf32, #tpu.memory_space<vmem>>, vector<512x16xf32>
    %26 = vector.broadcast %15 : vector<512x1xf32> to vector<512x16xf32>
    %27 = arith.mulf %26, %25 : vector<512x16xf32>
    %28 = arith.truncf %18 : vector<512x512xf32> to vector<512x512xbf16>
    %cst_19 = arith.constant dense<0.000000e+00> : vector<512x16xf32>
    %29 = tpu.matmul %28, %8, %cst_19 {dimension_numbers = #tpu.dot_dimension_numbers<[1], [0], [0], [1], [0, 0, 1, 1], [], []>} : vector<512x512xbf16>, vector<512x16xbf16>, vector<512x16xf32> -> vector<512x16xf32>
    %30 = arith.addf %27, %29 : vector<512x16xf32>
    %c0_20 = arith.constant 0 : index
    %c0_21 = arith.constant 0 : index
    %31 = vector.load %arg9[%c0_20, %c0_21] : memref<512x16xf32, #tpu.memory_space<vmem>>, vector<512x16xf32>
    tpu.vector_store %arg9[%c0_20, %c0_21], %30 {strides = array<i32>} : memref<512x16xf32, #tpu.memory_space<vmem>>, vector<512x16xf32>,
    %c0_22 = arith.constant 0 : index
    %c0_23 = arith.constant 0 : index
    %32 = vector.load %arg7[%c0_22, %c0_23] : memref<512x1xf32, #tpu.memory_space<vmem>>, vector<512x1xf32>
    tpu.vector_store %arg7[%c0_22, %c0_23], %13 {strides = array<i32>} : memref<512x1xf32, #tpu.memory_space<vmem>>, vector<512x1xf32>,
    %c1_i32 = arith.constant 1 : i32
    %33 = arith.cmpi eq, %arg2, %c1_i32 : i32
    %34 = arith.extui %33 : i1 to i32
    %c0_i32_24 = arith.constant 0 : i32
    %35 = arith.cmpi ne, %34, %c0_i32_24 : i32
    scf.if %35 {
      %c0_25 = arith.constant 0 : index
      %c0_26 = arith.constant 0 : index
      %36 = vector.load %arg8[%c0_25, %c0_26] : memref<512x1xf32, #tpu.memory_space<vmem>>, vector<512x1xf32>
      %37 = tpu.reciprocal %36 {approx = true} : vector<512x1xf32> -> vector<512x1xf32>
      %c0_27 = arith.constant 0 : index
      %c0_28 = arith.constant 0 : index
      %38 = vector.load %arg9[%c0_27, %c0_28] : memref<512x16xf32, #tpu.memory_space<vmem>>, vector<512x16xf32>
      %39 = vector.broadcast %37 : vector<512x1xf32> to vector<512x16xf32>
      %40 = arith.mulf %38, %39 : vector<512x16xf32>
      %41 = tpu.transpose %40, [1, 0] : vector<512x16xf32> -> vector<16x512xf32>
      %c0_29 = arith.constant 0 : index
      %c0_30 = arith.constant 0 : index
      %c0_31 = arith.constant 0 : index
      %42 = vector.load %arg6[%c0_29, %c0_30, %c0_31] : memref<1x16x512xf32, #tpu.memory_space<vmem>>, vector<1x16x512xf32>
      %43 = vector.shape_cast %42 : vector<1x16x512xf32> to vector<16x512xf32>
      %44 = vector.shape_cast %41 : vector<16x512xf32> to vector<1x16x512xf32>
      tpu.vector_store %arg6[%c0_29, %c0_30, %c0_31], %44 {strides = array<i32>} : memref<1x16x512xf32, #tpu.memory_space<vmem>>, vector<1x16x512xf32>,
    } else {
    }
    return
  }
  func.func @transform_0(%arg0: i32, %arg1: i32, %arg2: i32) -> (i32, i32, i32) {
    %c0_i32 = arith.constant 0 : i32
    %c0_i32_0 = arith.constant 0 : i32
    return %arg0, %arg1, %c0_i32 : i32, i32, i32
  }
  func.func @transform_1(%arg0: i32, %arg1: i32, %arg2: i32) -> (i32, i32, i32) {
    %c0_i32 = arith.constant 0 : i32
    %c0_i32_0 = arith.constant 0 : i32
    return %arg0, %c0_i32, %arg2 : i32, i32, i32
  }
  func.func @transform_2(%arg0: i32, %arg1: i32, %arg2: i32) -> (i32, i32, i32) {
    %c0_i32 = arith.constant 0 : i32
    %c0_i32_0 = arith.constant 0 : i32
    return %arg0, %arg2, %c0_i32 : i32, i32, i32
  }
  func.func @transform_3(%arg0: i32, %arg1: i32, %arg2: i32) -> (i32, i32, i32) {
    %c0_i32 = arith.constant 0 : i32
    %c0_i32_0 = arith.constant 0 : i32
    return %arg0, %c0_i32, %arg1 : i32, i32, i32
  }
}

</mosaic_0001>

<llo_original>
// kernel: tpu_custom_call.1
$region0: #{tpu_custom_call.1}
  #allocation0 [shape = 'u32[]', space=smem, size = 0x4, offset = 0x4, fixed_abs, tag = 'smem constant byte address 0x4 - core index']
  #allocation1 [shape = 'u32[72,128]{1,0:T(1,128)}', space=vmem, size = 0x9000, scoped, tag = 'internal scratch']
  #allocation2 [shape = 'f32[512,1]{1,0:T(8,128)}', space=vmem, size = 0x40000, scoped, tag = 'scratch operand']
  #allocation3 [shape = 'f32[512,1]{1,0:T(8,128)}', space=vmem, size = 0x40000, scoped, tag = 'scratch operand']
  #allocation4 [shape = 'f32[512,16]{1,0:T(8,128)}', space=vmem, size = 0x40000, scoped, tag = 'scratch operand']
  %s0 = inlined_call_operand.vmem [shape: bf16[2,1024,128], index: 0, kind: input, shape index: {}]
  %s1 = inlined_call_operand.hbm [shape: bf16[2,128,1024], index: 1, kind: input, shape index: {}]
  %s2 = inlined_call_operand.vmem [shape: bf16[2,1024,16], index: 2, kind: input, shape index: {}]
  %s3 = inlined_call_operand.hbm [shape: f32[2,16,1024], index: 3, kind: output, shape index: {}]
  %s4 = sld [smem:[#allocation0]]
  $region57: #{tpu_custom_call.1} parent=0
    _
  %s6 = ssub.s32 1, %s4
  %s7 = scalar_select 0, %s6, %s4
  $region1: #{tpu_custom_call.1} parent=0
    #allocation5 [shape = 'u8[262144]{0}', space=vmem, size = 0x40000, scoped, tag = 'input window, operand 1']
    #allocation6 [shape = 's32[2]{0}', space=sflag, size = 0x8, scoped, tag = 'scoped memory for tpu_custom_call.1']
    #allocation7 [shape = 's32[2]{0}', space=sflag, size = 0x8, scoped, tag = 'scoped memory for tpu_custom_call.1']
    #allocation8 [shape = 'u8[65536]{0}', space=vmem, size = 0x10000, scoped, tag = 'output window, operand 0']
    %8 = vsyncpa [#allocation6], 0
    %s9 = scalar_lea.sflag [#allocation6], 1
    %10 = vsyncpa %s9, 0
    %11 = vsyncpa [#allocation7], 0
    %s12 = scalar_lea.sflag [#allocation7], 1
    %13 = vsyncpa %s12, 0
    loop: start=0, step=1, limit=10
    $region2: #{tpu_custom_call.1} parent=1 // loop_pre_header
      _
    $region3: #{tpu_custom_call.1} parent=1 // loop_header
      %s15 = sphi 0, %s19
      %p16 = scmp.ge.s32.totalorder %s15, 10
      %s22 = sphi 0, %s41
      %s23 = sphi 0, %s37
      %s24 = sphi 0, %s33
      %s25 = sphi 0, %s22
      %s26 = sphi 0, %s23
      %s27 = sphi 0, %s24
      %s28 = sphi 0, %s25
      %s29 = sphi 0, %s26
      %s30 = sphi 0, %s27
      %s46 = sphi 0, %s48
      %s49 = sphi 0, %s46
      %s50 = sphi 0, %s49
      %s66 = sphi 0, %s50
      %s74 = sphi 0, %s76
      %s77 = sphi 0, %s74
      %s78 = sphi 0, %s77
      %s94 = sphi 0, %s78
      %s102 = sphi 0, %s104
      %s105 = sphi 0, %s102
      %s106 = sphi 0, %s105
      %s122 = sphi 0, %s106
      %s130 = sphi 0, %s132
      %s133 = sphi 0, %s130
      %s134 = sphi 0, %s133
      %s150 = sphi 0, %s134
    $region4: #{tpu_custom_call.1} parent=1 // loop_header_branch
      %18 = sbr.rel (%p16) target = $region8
    $region5: #{tpu_custom_call.1} parent=1 // loop_body
      %s20 = ssub.s32 %s15, 1
      %s21 = ssub.s32 %s15, 2
      %s31 = sadd.s32 1, %s24
      %p32 = scmp.ge.s32.totalorder %s31, 2
      %s33 = scalar_select %p32, 0, %s31
      %s34 = sadd.s32 1, %s23
      %s35 = scalar_select %p32, %s34, %s23
      %p36 = scmp.ge.s32.totalorder %s35, 2
      %s37 = scalar_select %p36, 0, %s35
      %s38 = sadd.s32 1, %s22
      %s39 = scalar_select %p36, %s38, %s22
      %p40 = scmp.ge.s32.totalorder %s39, 2
      %s41 = scalar_select %p40, 0, %s39
      %s42 = ssub.s32 %s22, %s41
      %s43 = ssub.s32 %s23, %s37
      %s44 = sor.u32 %s42, %s43
      %p45 = scmp.eq.s32.totalorder %s44, 0
      %s47 = sadd.s32 %s46, 1
      %s48 = scalar_select %p45, %s46, %s47
      %p51 = pneg %p45
      %p52 = scmp.eq.s32.totalorder %s15, 7
      %p53 = por %p51, %p52
      %p54 = scmp.ne.s32.totalorder %s46, %s49
      %p55 = scmp.eq.s32.totalorder %s15, 0
      %p56 = por %p54, %p55
      %p57 = scmp.ne.s32.totalorder %s46, %s49
      %p58 = scmp.eq.s32.totalorder %s20, 7
      %p59 = por %p57, %p58
      %p60 = scmp.ne.s32.totalorder %s49, %s50
      %p61 = scmp.eq.s32.totalorder %s20, 0
      %p62 = por %p60, %p61
      %p63 = scmp.ne.s32.totalorder %s49, %s50
      %p64 = scmp.eq.s32.totalorder %s21, 7
      %p65 = por %p63, %p64
      %p67 = scmp.ne.s32.totalorder %s50, %s66
      %p68 = scmp.eq.s32.totalorder %s21, 0
      %p69 = por %p67, %p68
      %s70 = ssub.s32 %s22, %s41
      %s71 = ssub.s32 %s24, %s33
      %s72 = sor.u32 %s70, %s71
      %p73 = scmp.eq.s32.totalorder %s72, 0
      %s75 = sadd.s32 %s74, 1
      %s76 = scalar_select %p73, %s74, %s75
      %p79 = pneg %p73
      %p80 = scmp.eq.s32.totalorder %s15, 7
      %p81 = por %p79, %p80
      %p82 = scmp.ne.s32.totalorder %s74, %s77
      %p83 = scmp.eq.s32.totalorder %s15, 0
      %p84 = por %p82, %p83
      %p85 = scmp.ne.s32.totalorder %s74, %s77
      %p86 = scmp.eq.s32.totalorder %s20, 7
      %p87 = por %p85, %p86
      %p88 = scmp.ne.s32.totalorder %s77, %s78
      %p89 = scmp.eq.s32.totalorder %s20, 0
      %p90 = por %p88, %p89
      %p91 = scmp.ne.s32.totalorder %s77, %s78
      %p92 = scmp.eq.s32.totalorder %s21, 7
      %p93 = por %p91, %p92
      %p95 = scmp.ne.s32.totalorder %s78, %s94
      %p96 = scmp.eq.s32.totalorder %s21, 0
      %p97 = por %p95, %p96
      %s98 = ssub.s32 %s22, %s41
      %s99 = ssub.s32 %s24, %s33
      %s100 = sor.u32 %s98, %s99
      %p101 = scmp.eq.s32.totalorder %s100, 0
      %s103 = sadd.s32 %s102, 1
      %s104 = scalar_select %p101, %s102, %s103
      %p107 = pneg %p101
      %p108 = scmp.eq.s32.totalorder %s15, 7
      %p109 = por %p107, %p108
      %p110 = scmp.ne.s32.totalorder %s102, %s105
      %p111 = scmp.eq.s32.totalorder %s15, 0
      %p112 = por %p110, %p111
      %p113 = scmp.ne.s32.totalorder %s102, %s105
      %p114 = scmp.eq.s32.totalorder %s20, 7
      %p115 = por %p113, %p114
      %p116 = scmp.ne.s32.totalorder %s105, %s106
      %p117 = scmp.eq.s32.totalorder %s20, 0
      %p118 = por %p116, %p117
      %p119 = scmp.ne.s32.totalorder %s105, %s106
      %p120 = scmp.eq.s32.totalorder %s21, 7
      %p121 = por %p119, %p120
      %p123 = scmp.ne.s32.totalorder %s106, %s122
      %p124 = scmp.eq.s32.totalorder %s21, 0
      %p125 = por %p123, %p124
      %s126 = ssub.s32 %s22, %s41
      %s127 = ssub.s32 %s23, %s37
      %s128 = sor.u32 %s126, %s127
      %p129 = scmp.eq.s32.totalorder %s128, 0
      %s131 = sadd.s32 %s130, 1
      %s132 = scalar_select %p129, %s130, %s131
      %p135 = pneg %p129
      %p136 = scmp.eq.s32.totalorder %s15, 7
      %p137 = por %p135, %p136
      %p138 = scmp.ne.s32.totalorder %s130, %s133
      %p139 = scmp.eq.s32.totalorder %s15, 0
      %p140 = por %p138, %p139
      %p141 = scmp.ne.s32.totalorder %s130, %s133
      %p142 = scmp.eq.s32.totalorder %s20, 7
      %p143 = por %p141, %p142
      %p144 = scmp.ne.s32.totalorder %s133, %s134
      %p145 = scmp.eq.s32.totalorder %s20, 0
      %p146 = por %p144, %p145
      %p147 = scmp.ne.s32.totalorder %s133, %s134
      %p148 = scmp.eq.s32.totalorder %s21, 7
      %p149 = por %p147, %p148
      %p151 = scmp.ne.s32.totalorder %s134, %s150
      %p152 = scmp.eq.s32.totalorder %s21, 0
      %p153 = por %p151, %p152
      %p154 = scmp.le.s32.totalorder 1, %s15
      %p155 = scmp.lt.s32.totalorder %s15, 9
      %p156 = pnand %p154, %p155
      %p157 = pneg %p156
      // Predicated region
      $region9: #{tpu_custom_call.1} parent=5 // pred_check
        _
      $region10: #{tpu_custom_call.1} parent=5 // pred_check_branch
        %159 = sbr.rel (%p156) target = $region12
      $region11: #{tpu_custom_call.1} parent=5 // pred_region
        %s160 = ssub.s32 %s15, 1
      $region12: #{tpu_custom_call.1} parent=5 // pred_fallthru
        _
      %p161 = scmp.lt.s32.totalorder %s15, 8
      // Predicated region
      $region13: #{tpu_custom_call.1} parent=5 // pred_check
        %p162 = pneg %p161
      $region14: #{tpu_custom_call.1} parent=5 // pred_check_branch
        %164 = sbr.rel (%p162) target = $region16
      $region15: #{tpu_custom_call.1} parent=5 // pred_region
        // Predicated region
        $region17: #{tpu_custom_call.1} parent=15 // pred_check
          %p165 = pneg %p56
        $region18: #{tpu_custom_call.1} parent=15 // pred_check_branch
          %167 = sbr.rel (%p165) target = $region20
        $region19: #{tpu_custom_call.1} parent=15 // pred_region
          %s168 = smul.u32 64, %s23
          %p169 = scmp.lt.s32.totalorder %s22, 1
          %s170 = scalar_select %p169, %s22, 1
          %p171 = scmp.lt.s32.totalorder %s168, 127
          %s172 = scalar_select %p171, %s168, 127
          %s173 = smul.addr %s170, 128
          %s174 = sadd.s32 %s172, %s173
          %s175 = smul.addr %s174, 4
          %s176 = scalar_lea.vmem %s0, %s175
          %s177 = smul.u32 64, %s23
        $region20: #{tpu_custom_call.1} parent=15 // pred_fallthru
          _
        // Predicated region
        $region21: #{tpu_custom_call.1} parent=15 // pred_check
          %p178 = pneg %p84
        $region22: #{tpu_custom_call.1} parent=15 // pred_check_branch
          %180 = sbr.rel (%p178) target = $region24
        $region23: #{tpu_custom_call.1} parent=15 // pred_region
          %s181 = sand.u32 %s74, 1
          %s182 = scalar_lea.sflag [#allocation6], %s181
          %s183 = sand.u32 %s74, 1
          %s184 = smul.addr %s183, 256
          %s185 = scalar_lea.vmem [#allocation5], %s184
          %s186 = smul.u32 4, %s24
          %188 = vsyncadd %s182, 0
          %s189 = smul.addr %s22, 128
          %s190 = sadd.s32 %s186, %s189
          %s191 = smul.addr %s190, 4
          %s192 = scalar_lea.hbm %s1, %s191
          %s193 = sshll.u32 %s192, 4
          %s194 = int_to_ptr.hbm [resolvable:$true] %s193
          %s195 = sshll.u32 %s185, 4
          %s196 = int_to_ptr.vmem [resolvable:$true] %s195
          %201 = dma.hbm_to_vmem [thread:$0]  %s194, 4096, %s196, %s182, 512, 256, 16
        $region24: #{tpu_custom_call.1} parent=15 // pred_fallthru
          _
        // Predicated region
        $region25: #{tpu_custom_call.1} parent=15 // pred_check
          %p202 = pneg %p112
        $region26: #{tpu_custom_call.1} parent=15 // pred_check_branch
          %204 = sbr.rel (%p202) target = $region28
        $region27: #{tpu_custom_call.1} parent=15 // pred_region
          %s205 = smul.u32 64, %s24
          %p206 = scmp.lt.s32.totalorder %s22, 1
          %s207 = scalar_select %p206, %s22, 1
          %p208 = scmp.lt.s32.totalorder %s205, 127
          %s209 = scalar_select %p208, %s205, 127
          %s210 = smul.addr %s207, 128
          %s211 = sadd.s32 %s209, %s210
          %s212 = smul.addr %s211, 4
          %s213 = scalar_lea.vmem %s2, %s212
          %s214 = smul.u32 64, %s24
        $region28: #{tpu_custom_call.1} parent=15 // pred_fallthru
          _
      $region16: #{tpu_custom_call.1} parent=5 // pred_fallthru
        _
      %p215 = scmp.le.s32.totalorder 1, %s15
      %p216 = scmp.lt.s32.totalorder %s15, 9
      %p217 = pnand %p215, %p216
      %p218 = pneg %p217
      // Predicated region
      $region29: #{tpu_custom_call.1} parent=5 // pred_check
        _
      $region30: #{tpu_custom_call.1} parent=5 // pred_check_branch
        %220 = sbr.rel (%p217) target = $region32
      $region31: #{tpu_custom_call.1} parent=5 // pred_region
        %s221 = ssub.s32 %s15, 1
        %s222 = sand.u32 %s77, 1
        %s223 = scalar_lea.sflag [#allocation6], %s222
        %s224 = sand.u32 %s77, 1
        %s225 = smul.addr %s224, 256
        %s226 = scalar_lea.vmem [#allocation5], %s225
        // Predicated region
        $region33: #{tpu_custom_call.1} parent=31 // pred_check
          %p227 = pneg %p90
        $region34: #{tpu_custom_call.1} parent=31 // pred_check_branch
          %229 = sbr.rel (%p227) target = $region36
        $region35: #{tpu_custom_call.1} parent=31 // pred_region
          %231 = dma.done %s223, 4096
        $region36: #{tpu_custom_call.1} parent=31 // pred_fallthru
          _
        %s232 = smul.u32 64, %s26
        %p233 = scmp.lt.s32.totalorder %s25, 1
        %s234 = scalar_select %p233, %s25, 1
        %p235 = scmp.lt.s32.totalorder %s232, 127
        %s236 = scalar_select %p235, %s232, 127
        %s237 = smul.addr %s234, 128
        %s238 = sadd.s32 %s236, %s237
        %s239 = smul.addr %s238, 4
        %s240 = scalar_lea.vmem %s0, %s239
        %p241 = pneg %p62
        %p242 = pneg %p59
        %s243 = sand.u32 %s77, 1
        %s244 = scalar_lea.sflag [#allocation6], %s243
        %s245 = sand.u32 %s77, 1
        %s246 = smul.addr %s245, 256
        %s247 = scalar_lea.vmem [#allocation5], %s246
        %p248 = pneg %p90
        %p249 = pneg %p87
        %s250 = smul.u32 64, %s27
        %p251 = scmp.lt.s32.totalorder %s25, 1
        %s252 = scalar_select %p251, %s25, 1
        %p253 = scmp.lt.s32.totalorder %s250, 127
        %s254 = scalar_select %p253, %s250, 127
        %s255 = smul.addr %s252, 128
        %s256 = sadd.s32 %s254, %s255
        %s257 = smul.addr %s256, 4
        %s258 = scalar_lea.vmem %s2, %s257
        %p259 = pneg %p118
        %p260 = pneg %p115
        %p261 = pneg %p146
        %p262 = pneg %p143
        %s263 = sand.u32 %s133, 1
        %s264 = scalar_lea.sflag [#allocation7], %s263
        %s265 = sand.u32 %s133, 1
        %s266 = smul.addr %s265, 64
        %s267 = scalar_lea.vmem [#allocation8], %s266
        %s268 = smul.u32 64, %s26
        %p269 = scmp.lt.s32.totalorder %s25, 1
        %s270 = scalar_select %p269, %s25, 1
        %p271 = scmp.lt.s32.totalorder %s268, 127
        %s272 = scalar_select %p271, %s268, 127
        %s273 = smul.addr %s270, 128
        %s274 = sadd.s32 %s272, %s273
        %s275 = smul.addr %s274, 4
        %s276 = scalar_lea.vmem %s0, %s275
        %s277 = smul.u32 64, %s26
        %s278 = smul.u32 4, %s27
        %s279 = smul.u32 64, %s27
        %p280 = scmp.lt.s32.totalorder %s25, 1
        %s281 = scalar_select %p280, %s25, 1
        %p282 = scmp.lt.s32.totalorder %s279, 127
        %s283 = scalar_select %p282, %s279, 127
        %s284 = smul.addr %s281, 128
        %s285 = sadd.s32 %s283, %s284
        %s286 = smul.addr %s285, 4
        %s287 = scalar_lea.vmem %s2, %s286
        %s288 = smul.u32 64, %s27
        %s289 = smul.u32 4, %s26
        %p290 = scmp.eq.s32.totalorder %s27, 0
        // Predicated region
        $region37: #{tpu_custom_call.1} parent=31 // pred_check
          %p291 = pneg %p290
        $region38: #{tpu_custom_call.1} parent=31 // pred_check_branch
          %293 = sbr.rel (%p291) target = $region40
        $region39: #{tpu_custom_call.1} parent=31 // pred_region
          %vm294 = vcmask 7168
          %295 = vst.msk [vmem:[#allocation2] sm:$0xff] %vm294, -inf
          %296 = vst.msk [vmem:[#allocation2 + $0x8] sm:$0xff] %vm294, -inf
          %297 = vst.msk [vmem:[#allocation2 + $0x10] sm:$0xff] %vm294, -inf
          %298 = vst.msk [vmem:[#allocation2 + $0x18] sm:$0xff] %vm294, -inf
          %299 = vst.msk [vmem:[#allocation2 + $0x20] sm:$0xff] %vm294, -inf
          %300 = vst.msk [vmem:[#allocation2 + $0x28] sm:$0xff] %vm294, -inf
          %301 = vst.msk [vmem:[#allocation2 + $0x30] sm:$0xff] %vm294, -inf
          %302 = vst.msk [vmem:[#allocation2 + $0x38] sm:$0xff] %vm294, -inf
          %303 = vst.msk [vmem:[#allocation2 + $0x40] sm:$0xff] %vm294, -inf
          %304 = vst.msk [vmem:[#allocation2 + $0x48] sm:$0xff] %vm294, -inf
          %305 = vst.msk [vmem:[#allocation2 + $0x50] sm:$0xff] %vm294, -inf
          %306 = vst.msk [vmem:[#allocation2 + $0x58] sm:$0xff] %vm294, -inf
          %307 = vst.msk [vmem:[#allocation2 + $0x60] sm:$0xff] %vm294, -inf
          %308 = vst.msk [vmem:[#allocation2 + $0x68] sm:$0xff] %vm294, -inf
          %309 = vst.msk [vmem:[#allocation2 + $0x70] sm:$0xff] %vm294, -inf
          %310 = vst.msk [vmem:[#allocation2 + $0x78] sm:$0xff] %vm294, -inf
          %311 = vst.msk [vmem:[#allocation2 + $0x80] sm:$0xff] %vm294, -inf
          %312 = vst.msk [vmem:[#allocation2 + $0x88] sm:$0xff] %vm294, -inf
          %313 = vst.msk [vmem:[#allocation2 + $0x90] sm:$0xff] %vm294, -inf
          %314 = vst.msk [vmem:[#allocation2 + $0x98] sm:$0xff] %vm294, -inf
          %315 = vst.msk [vmem:[#allocation2 + $0xa0] sm:$0xff] %vm294, -inf
          %316 = vst.msk [vmem:[#allocation2 + $0xa8] sm:$0xff] %vm294, -inf
          %317 = vst.msk [vmem:[#allocation2 + $0xb0] sm:$0xff] %vm294, -inf
          %318 = vst.msk [vmem:[#allocation2 + $0xb8] sm:$0xff] %vm294, -inf
          %319 = vst.msk [vmem:[#allocation2 + $0xc0] sm:$0xff] %vm294, -inf
          %320 = vst.msk [vmem:[#allocation2 + $0xc8] sm:$0xff] %vm294, -inf
          %321 = vst.msk [vmem:[#allocation2 + $0xd0] sm:$0xff] %vm294, -inf
          %322 = vst.msk [vmem:[#allocation2 + $0xd8] sm:$0xff] %vm294, -inf
          %323 = vst.msk [vmem:[#allocation2 + $0xe0] sm:$0xff] %vm294, -inf
          %324 = vst.msk [vmem:[#allocation2 + $0xe8] sm:$0xff] %vm294, -inf
          %325 = vst.msk [vmem:[#allocation2 + $0xf0] sm:$0xff] %vm294, -inf
          %326 = vst.msk [vmem:[#allocation2 + $0xf8] sm:$0xff] %vm294, -inf
          %327 = vst.msk [vmem:[#allocation2 + $0x100] sm:$0xff] %vm294, -inf
          %328 = vst.msk [vmem:[#allocation2 + $0x108] sm:$0xff] %vm294, -inf
          %329 = vst.msk [vmem:[#allocation2 + $0x110] sm:$0xff] %vm294, -inf
          %330 = vst.msk [vmem:[#allocation2 + $0x118] sm:$0xff] %vm294, -inf
          %331 = vst.msk [vmem:[#allocation2 + $0x120] sm:$0xff] %vm294, -inf
          %332 = vst.msk [vmem:[#allocation2 + $0x128] sm:$0xff] %vm294, -inf
          %333 = vst.msk [vmem:[#allocation2 + $0x130] sm:$0xff] %vm294, -inf
          %334 = vst.msk [vmem:[#allocation2 + $0x138] sm:$0xff] %vm294, -inf
          %335 = vst.msk [vmem:[#allocation2 + $0x140] sm:$0xff] %vm294, -inf
          %336 = vst.msk [vmem:[#allocation2 + $0x148] sm:$0xff] %vm294, -inf
          %337 = vst.msk [vmem:[#allocation2 + $0x150] sm:$0xff] %vm294, -inf
          %338 = vst.msk [vmem:[#allocation2 + $0x158] sm:$0xff] %vm294, -inf
          %339 = vst.msk [vmem:[#allocation2 + $0x160] sm:$0xff] %vm294, -inf
          %340 = vst.msk [vmem:[#allocation2 + $0x168] sm:$0xff] %vm294, -inf
          %341 = vst.msk [vmem:[#allocation2 + $0x170] sm:$0xff] %vm294, -inf
          %342 = vst.msk [vmem:[#allocation2 + $0x178] sm:$0xff] %vm294, -inf
          %343 = vst.msk [vmem:[#allocation2 + $0x180] sm:$0xff] %vm294, -inf
          %344 = vst.msk [vmem:[#allocation2 + $0x188] sm:$0xff] %vm294, -inf
          %345 = vst.msk [vmem:[#allocation2 + $0x190] sm:$0xff] %vm294, -inf
          %346 = vst.msk [vmem:[#allocation2 + $0x198] sm:$0xff] %vm294, -inf
          %347 = vst.msk [vmem:[#allocation2 + $0x1a0] sm:$0xff] %vm294, -inf
          %348 = vst.msk [vmem:[#allocation2 + $0x1a8] sm:$0xff] %vm294, -inf
          %349 = vst.msk [vmem:[#allocation2 + $0x1b0] sm:$0xff] %vm294, -inf
          %350 = vst.msk [vmem:[#allocation2 + $0x1b8] sm:$0xff] %vm294, -inf
          %351 = vst.msk [vmem:[#allocation2 + $0x1c0] sm:$0xff] %vm294, -inf
          %352 = vst.msk [vmem:[#allocation2 + $0x1c8] sm:$0xff] %vm294, -inf
          %353 = vst.msk [vmem:[#allocation2 + $0x1d0] sm:$0xff] %vm294, -inf
          %354 = vst.msk [vmem:[#allocation2 + $0x1d8] sm:$0xff] %vm294, -inf
          %355 = vst.msk [vmem:[#allocation2 + $0x1e0] sm:$0xff] %vm294, -inf
          %356 = vst.msk [vmem:[#allocation2 + $0x1e8] sm:$0xff] %vm294, -inf
          %357 = vst.msk [vmem:[#allocation2 + $0x1f0] sm:$0xff] %vm294, -inf
          %358 = vst.msk [vmem:[#allocation2 + $0x1f8] sm:$0xff] %vm294, -inf
          %359 = vst.msk [vmem:[#allocation3] sm:$0xff] %vm294, 0.0
          %360 = vst.msk [vmem:[#allocation3 + $0x8] sm:$0xff] %vm294, 0.0
          %361 = vst.msk [vmem:[#allocation3 + $0x10] sm:$0xff] %vm294, 0.0
          %362 = vst.msk [vmem:[#allocation3 + $0x18] sm:$0xff] %vm294, 0.0
          %363 = vst.msk [vmem:[#allocation3 + $0x20] sm:$0xff] %vm294, 0.0
          %364 = vst.msk [vmem:[#allocation3 + $0x28] sm:$0xff] %vm294, 0.0
          %365 = vst.msk [vmem:[#allocation3 + $0x30] sm:$0xff] %vm294, 0.0
          %366 = vst.msk [vmem:[#allocation3 + $0x38] sm:$0xff] %vm294, 0.0
          %367 = vst.msk [vmem:[#allocation3 + $0x40] sm:$0xff] %vm294, 0.0
          %368 = vst.msk [vmem:[#allocation3 + $0x48] sm:$0xff] %vm294, 0.0
          %369 = vst.msk [vmem:[#allocation3 + $0x50] sm:$0xff] %vm294, 0.0
          %370 = vst.msk [vmem:[#allocation3 + $0x58] sm:$0xff] %vm294, 0.0
          %371 = vst.msk [vmem:[#allocation3 + $0x60] sm:$0xff] %vm294, 0.0
          %372 = vst.msk [vmem:[#allocation3 + $0x68] sm:$0xff] %vm294, 0.0
          %373 = vst.msk [vmem:[#allocation3 + $0x70] sm:$0xff] %vm294, 0.0
          %374 = vst.msk [vmem:[#allocation3 + $0x78] sm:$0xff] %vm294, 0.0
          %375 = vst.msk [vmem:[#allocation3 + $0x80] sm:$0xff] %vm294, 0.0
          %376 = vst.msk [vmem:[#allocation3 + $0x88] sm:$0xff] %vm294, 0.0
          %377 = vst.msk [vmem:[#allocation3 + $0x90] sm:$0xff] %vm294, 0.0
          %378 = vst.msk [vmem:[#allocation3 + $0x98] sm:$0xff] %vm294, 0.0
          %379 = vst.msk [vmem:[#allocation3 + $0xa0] sm:$0xff] %vm294, 0.0
          %380 = vst.msk [vmem:[#allocation3 + $0xa8] sm:$0xff] %vm294, 0.0
          %381 = vst.msk [vmem:[#allocation3 + $0xb0] sm:$0xff] %vm294, 0.0
          %382 = vst.msk [vmem:[#allocation3 + $0xb8] sm:$0xff] %vm294, 0.0
          %383 = vst.msk [vmem:[#allocation3 + $0xc0] sm:$0xff] %vm294, 0.0
          %384 = vst.msk [vmem:[#allocation3 + $0xc8] sm:$0xff] %vm294, 0.0
          %385 = vst.msk [vmem:[#allocation3 + $0xd0] sm:$0xff] %vm294, 0.0
          %386 = vst.msk [vmem:[#allocation3 + $0xd8] sm:$0xff] %vm294, 0.0
          %387 = vst.msk [vmem:[#allocation3 + $0xe0] sm:$0xff] %vm294, 0.0
          %388 = vst.msk [vmem:[#allocation3 + $0xe8] sm:$0xff] %vm294, 0.0
          %389 = vst.msk [vmem:[#allocation3 + $0xf0] sm:$0xff] %vm294, 0.0
          %390 = vst.msk [vmem:[#allocation3 + $0xf8] sm:$0xff] %vm294, 0.0
          %391 = vst.msk [vmem:[#allocation3 + $0x100] sm:$0xff] %vm294, 0.0
          %392 = vst.msk [vmem:[#allocation3 + $0x108] sm:$0xff] %vm294, 0.0
          %393 = vst.msk [vmem:[#allocation3 + $0x110] sm:$0xff] %vm294, 0.0
          %394 = vst.msk [vmem:[#allocation3 + $0x118] sm:$0xff] %vm294, 0.0
          %395 = vst.msk [vmem:[#allocation3 + $0x120] sm:$0xff] %vm294, 0.0
          %396 = vst.msk [vmem:[#allocation3 + $0x128] sm:$0xff] %vm294, 0.0
          %397 = vst.msk [vmem:[#allocation3 + $0x130] sm:$0xff] %vm294, 0.0
          %398 = vst.msk [vmem:[#allocation3 + $0x138] sm:$0xff] %vm294, 0.0
          %399 = vst.msk [vmem:[#allocation3 + $0x140] sm:$0xff] %vm294, 0.0
          %400 = vst.msk [vmem:[#allocation3 + $0x148] sm:$0xff] %vm294, 0.0
          %401 = vst.msk [vmem:[#allocation3 + $0x150] sm:$0xff] %vm294, 0.0
          %402 = vst.msk [vmem:[#allocation3 + $0x158] sm:$0xff] %vm294, 0.0
          %403 = vst.msk [vmem:[#allocation3 + $0x160] sm:$0xff] %vm294, 0.0
          %404 = vst.msk [vmem:[#allocation3 + $0x168] sm:$0xff] %vm294, 0.0
          %405 = vst.msk [vmem:[#allocation3 + $0x170] sm:$0xff] %vm294, 0.0
          %406 = vst.msk [vmem:[#allocation3 + $0x178] sm:$0xff] %vm294, 0.0
          %407 = vst.msk [vmem:[#allocation3 + $0x180] sm:$0xff] %vm294, 0.0
          %408 = vst.msk [vmem:[#allocation3 + $0x188] sm:$0xff] %vm294, 0.0
          %409 = vst.msk [vmem:[#allocation3 + $0x190] sm:$0xff] %vm294, 0.0
          %410 = vst.msk [vmem:[#allocation3 + $0x198] sm:$0xff] %vm294, 0.0
          %411 = vst.msk [vmem:[#allocation3 + $0x1a0] sm:$0xff] %vm294, 0.0
          %412 = vst.msk [vmem:[#allocation3 + $0x1a8] sm:$0xff] %vm294, 0.0
          %413 = vst.msk [vmem:[#allocation3 + $0x1b0] sm:$0xff] %vm294, 0.0
          %414 = vst.msk [vmem:[#allocation3 + $0x1b8] sm:$0xff] %vm294, 0.0
          %415 = vst.msk [vmem:[#allocation3 + $0x1c0] sm:$0xff] %vm294, 0.0
          %416 = vst.msk [vmem:[#allocation3 + $0x1c8] sm:$0xff] %vm294, 0.0
          %417 = vst.msk [vmem:[#allocation3 + $0x1d0] sm:$0xff] %vm294, 0.0
          %418 = vst.msk [vmem:[#allocation3 + $0x1d8] sm:$0xff] %vm294, 0.0
          %419 = vst.msk [vmem:[#allocation3 + $0x1e0] sm:$0xff] %vm294, 0.0
          %420 = vst.msk [vmem:[#allocation3 + $0x1e8] sm:$0xff] %vm294, 0.0
          %421 = vst.msk [vmem:[#allocation3 + $0x1f0] sm:$0xff] %vm294, 0.0
          %422 = vst.msk [vmem:[#allocation3 + $0x1f8] sm:$0xff] %vm294, 0.0
          %vm423 = vcmask 130048
          %424 = vst.msk [vmem:[#allocation4] sm:$0xff] %vm423, 0.0
          %425 = vst.msk [vmem:[#allocation4 + $0x8] sm:$0xff] %vm423, 0.0
          %426 = vst.msk [vmem:[#allocation4 + $0x10] sm:$0xff] %vm423, 0.0
          %427 = vst.msk [vmem:[#allocation4 + $0x18] sm:$0xff] %vm423, 0.0
          %428 = vst.msk [vmem:[#allocation4 + $0x20] sm:$0xff] %vm423, 0.0
          %429 = vst.msk [vmem:[#allocation4 + $0x28] sm:$0xff] %vm423, 0.0
          %430 = vst.msk [vmem:[#allocation4 + $0x30] sm:$0xff] %vm423, 0.0
          %431 = vst.msk [vmem:[#allocation4 + $0x38] sm:$0xff] %vm423, 0.0
          %432 = vst.msk [vmem:[#allocation4 + $0x40] sm:$0xff] %vm423, 0.0
          %433 = vst.msk [vmem:[#allocation4 + $0x48] sm:$0xff] %vm423, 0.0
          %434 = vst.msk [vmem:[#allocation4 + $0x50] sm:$0xff] %vm423, 0.0
          %435 = vst.msk [vmem:[#allocation4 + $0x58] sm:$0xff] %vm423, 0.0
          %436 = vst.msk [vmem:[#allocation4 + $0x60] sm:$0xff] %vm423, 0.0
          %437 = vst.msk [vmem:[#allocation4 + $0x68] sm:$0xff] %vm423, 0.0
          %438 = vst.msk [vmem:[#allocation4 + $0x70] sm:$0xff] %vm423, 0.0
          %439 = vst.msk [vmem:[#allocation4 + $0x78] sm:$0xff] %vm423, 0.0
          %440 = vst.msk [vmem:[#allocation4 + $0x80] sm:$0xff] %vm423, 0.0
          %441 = vst.msk [vmem:[#allocation4 + $0x88] sm:$0xff] %vm423, 0.0
          %442 = vst.msk [vmem:[#allocation4 + $0x90] sm:$0xff] %vm423, 0.0
          %443 = vst.msk [vmem:[#allocation4 + $0x98] sm:$0xff] %vm423, 0.0
          %444 = vst.msk [vmem:[#allocation4 + $0xa0] sm:$0xff] %vm423, 0.0
          %445 = vst.msk [vmem:[#allocation4 + $0xa8] sm:$0xff] %vm423, 0.0
          %446 = vst.msk [vmem:[#allocation4 + $0xb0] sm:$0xff] %vm423, 0.0
          %447 = vst.msk [vmem:[#allocation4 + $0xb8] sm:$0xff] %vm423, 0.0
          %448 = vst.msk [vmem:[#allocation4 + $0xc0] sm:$0xff] %vm423, 0.0
          %449 = vst.msk [vmem:[#allocation4 + $0xc8] sm:$0xff] %vm423, 0.0
          %450 = vst.msk [vmem:[#allocation4 + $0xd0] sm:$0xff] %vm423, 0.0
          %451 = vst.msk [vmem:[#allocation4 + $0xd8] sm:$0xff] %vm423, 0.0
          %452 = vst.msk [vmem:[#allocation4 + $0xe0] sm:$0xff] %vm423, 0.0
          %453 = vst.msk [vmem:[#allocation4 + $0xe8] sm:$0xff] %vm423, 0.0
          %454 = vst.msk [vmem:[#allocation4 + $0xf0] sm:$0xff] %vm423, 0.0
          %455 = vst.msk [vmem:[#allocation4 + $0xf8] sm:$0xff] %vm423, 0.0
          %456 = vst.msk [vmem:[#allocation4 + $0x100] sm:$0xff] %vm423, 0.0
          %457 = vst.msk [vmem:[#allocation4 + $0x108] sm:$0xff] %vm423, 0.0
          %458 = vst.msk [vmem:[#allocation4 + $0x110] sm:$0xff] %vm423, 0.0
          %459 = vst.msk [vmem:[#allocation4 + $0x118] sm:$0xff] %vm423, 0.0
          %460 = vst.msk [vmem:[#allocation4 + $0x120] sm:$0xff] %vm423, 0.0
          %461 = vst.msk [vmem:[#allocation4 + $0x128] sm:$0xff] %vm423, 0.0
          %462 = vst.msk [vmem:[#allocation4 + $0x130] sm:$0xff] %vm423, 0.0
          %463 = vst.msk [vmem:[#allocation4 + $0x138] sm:$0xff] %vm423, 0.0
          %464 = vst.msk [vmem:[#allocation4 + $0x140] sm:$0xff] %vm423, 0.0
          %465 = vst.msk [vmem:[#allocation4 + $0x148] sm:$0xff] %vm423, 0.0
          %466 = vst.msk [vmem:[#allocation4 + $0x150] sm:$0xff] %vm423, 0.0
          %467 = vst.msk [vmem:[#allocation4 + $0x158] sm:$0xff] %vm423, 0.0
          %468 = vst.msk [vmem:[#allocation4 + $0x160] sm:$0xff] %vm423, 0.0
          %469 = vst.msk [vmem:[#allocation4 + $0x168] sm:$0xff] %vm423, 0.0
          %470 = vst.msk [vmem:[#allocation4 + $0x170] sm:$0xff] %vm423, 0.0
          %471 = vst.msk [vmem:[#allocation4 + $0x178] sm:$0xff] %vm423, 0.0
          %472 = vst.msk [vmem:[#allocation4 + $0x180] sm:$0xff] %vm423, 0.0
          %473 = vst.msk [vmem:[#allocation4 + $0x188] sm:$0xff] %vm423, 0.0
          %474 = vst.msk [vmem:[#allocation4 + $0x190] sm:$0xff] %vm423, 0.0
          %475 = vst.msk [vmem:[#allocation4 + $0x198] sm:$0xff] %vm423, 0.0
          %476 = vst.msk [vmem:[#allocation4 + $0x1a0] sm:$0xff] %vm423, 0.0
          %477 = vst.msk [vmem:[#allocation4 + $0x1a8] sm:$0xff] %vm423, 0.0
          %478 = vst.msk [vmem:[#allocation4 + $0x1b0] sm:$0xff] %vm423, 0.0
          %479 = vst.msk [vmem:[#allocation4 + $0x1b8] sm:$0xff] %vm423, 0.0
          %480 = vst.msk [vmem:[#allocation4 + $0x1c0] sm:$0xff] %vm423, 0.0
          %481 = vst.msk [vmem:[#allocation4 + $0x1c8] sm:$0xff] %vm423, 0.0
          %482 = vst.msk [vmem:[#allocation4 + $0x1d0] sm:$0xff] %vm423, 0.0
          %483 = vst.msk [vmem:[#allocation4 + $0x1d8] sm:$0xff] %vm423, 0.0
          %484 = vst.msk [vmem:[#allocation4 + $0x1e0] sm:$0xff] %vm423, 0.0
          %485 = vst.msk [vmem:[#allocation4 + $0x1e8] sm:$0xff] %vm423, 0.0
          %486 = vst.msk [vmem:[#allocation4 + $0x1f0] sm:$0xff] %vm423, 0.0
          %487 = vst.msk [vmem:[#allocation4 + $0x1f8] sm:$0xff] %vm423, 0.0
        $region40: #{tpu_custom_call.1} parent=31 // pred_fallthru
          _
        %v488 = vld [vmem:[%s276] sm:$0xf]
        %v489 = vld [vmem:[%s276 + $0x4] sm:$0xf]
        %v490 = vld [vmem:[%s276 + $0x8] sm:$0xf]
        %v491 = vld [vmem:[%s276 + $0xc] sm:$0xf]
        %v492 = vld [vmem:[%s276 + $0x10] sm:$0xf]
        %v493 = vld [vmem:[%s276 + $0x14] sm:$0xf]
        %v494 = vld [vmem:[%s276 + $0x18] sm:$0xf]
        %v495 = vld [vmem:[%s276 + $0x1c] sm:$0xf]
        %v496 = vld [vmem:[%s276 + $0x20] sm:$0xf]
        %v497 = vld [vmem:[%s276 + $0x24] sm:$0xf]
        %v498 = vld [vmem:[%s276 + $0x28] sm:$0xf]
        %v499 = vld [vmem:[%s276 + $0x2c] sm:$0xf]
        %v500 = vld [vmem:[%s276 + $0x30] sm:$0xf]
        %v501 = vld [vmem:[%s276 + $0x34] sm:$0xf]
        %v502 = vld [vmem:[%s276 + $0x38] sm:$0xf]
        %v503 = vld [vmem:[%s276 + $0x3c] sm:$0xf]
        %v504 = vld [vmem:[%s276 + $0x40] sm:$0xf]
        %v505 = vld [vmem:[%s276 + $0x44] sm:$0xf]
        %v506 = vld [vmem:[%s276 + $0x48] sm:$0xf]
        %v507 = vld [vmem:[%s276 + $0x4c] sm:$0xf]
        %v508 = vld [vmem:[%s276 + $0x50] sm:$0xf]
        %v509 = vld [vmem:[%s276 + $0x54] sm:$0xf]
        %v510 = vld [vmem:[%s276 + $0x58] sm:$0xf]
        %v511 = vld [vmem:[%s276 + $0x5c] sm:$0xf]
        %v512 = vld [vmem:[%s276 + $0x60] sm:$0xf]
        %v513 = vld [vmem:[%s276 + $0x64] sm:$0xf]
        %v514 = vld [vmem:[%s276 + $0x68] sm:$0xf]
        %v515 = vld [vmem:[%s276 + $0x6c] sm:$0xf]
        %v516 = vld [vmem:[%s276 + $0x70] sm:$0xf]
        %v517 = vld [vmem:[%s276 + $0x74] sm:$0xf]
        %v518 = vld [vmem:[%s276 + $0x78] sm:$0xf]
        %v519 = vld [vmem:[%s276 + $0x7c] sm:$0xf]
        %v520 = vld [vmem:[%s276 + $0x80] sm:$0xf]
        %v521 = vld [vmem:[%s276 + $0x84] sm:$0xf]
        %v522 = vld [vmem:[%s276 + $0x88] sm:$0xf]
        %v523 = vld [vmem:[%s276 + $0x8c] sm:$0xf]
        %v524 = vld [vmem:[%s276 + $0x90] sm:$0xf]
        %v525 = vld [vmem:[%s276 + $0x94] sm:$0xf]
        %v526 = vld [vmem:[%s276 + $0x98] sm:$0xf]
        %v527 = vld [vmem:[%s276 + $0x9c] sm:$0xf]
        %v528 = vld [vmem:[%s276 + $0xa0] sm:$0xf]
        %v529 = vld [vmem:[%s276 + $0xa4] sm:$0xf]
        %v530 = vld [vmem:[%s276 + $0xa8] sm:$0xf]
        %v531 = vld [vmem:[%s276 + $0xac] sm:$0xf]
        %v532 = vld [vmem:[%s276 + $0xb0] sm:$0xf]
        %v533 = vld [vmem:[%s276 + $0xb4] sm:$0xf]
        %v534 = vld [vmem:[%s276 + $0xb8] sm:$0xf]
        %v535 = vld [vmem:[%s276 + $0xbc] sm:$0xf]
        %v536 = vld [vmem:[%s276 + $0xc0] sm:$0xf]
        %v537 = vld [vmem:[%s276 + $0xc4] sm:$0xf]
        %v538 = vld [vmem:[%s276 + $0xc8] sm:$0xf]
        %v539 = vld [vmem:[%s276 + $0xcc] sm:$0xf]
        %v540 = vld [vmem:[%s276 + $0xd0] sm:$0xf]
        %v541 = vld [vmem:[%s276 + $0xd4] sm:$0xf]
        %v542 = vld [vmem:[%s276 + $0xd8] sm:$0xf]
        %v543 = vld [vmem:[%s276 + $0xdc] sm:$0xf]
        %v544 = vld [vmem:[%s276 + $0xe0] sm:$0xf]
        %v545 = vld [vmem:[%s276 + $0xe4] sm:$0xf]
        %v546 = vld [vmem:[%s276 + $0xe8] sm:$0xf]
        %v547 = vld [vmem:[%s276 + $0xec] sm:$0xf]
        %v548 = vld [vmem:[%s276 + $0xf0] sm:$0xf]
        %v549 = vld [vmem:[%s276 + $0xf4] sm:$0xf]
        %v550 = vld [vmem:[%s276 + $0xf8] sm:$0xf]
        %v551 = vld [vmem:[%s276 + $0xfc] sm:$0xf]
        %v552 = vld [vmem:[%s226] sm:$0xff]
        %v553 = vld [vmem:[%s226 + $0x8] sm:$0xff]
        %v554 = vld [vmem:[%s226 + $0x10] sm:$0xff]
        %v555 = vld [vmem:[%s226 + $0x18] sm:$0xff]
        %v556 = vld [vmem:[%s226 + $0x20] sm:$0xff]
        %v557 = vld [vmem:[%s226 + $0x28] sm:$0xff]
        %v558 = vld [vmem:[%s226 + $0x30] sm:$0xff]
        %v559 = vld [vmem:[%s226 + $0x38] sm:$0xff]
        %v560 = vld [vmem:[%s226 + $0x40] sm:$0xff]
        %v561 = vld [vmem:[%s226 + $0x48] sm:$0xff]
        %v562 = vld [vmem:[%s226 + $0x50] sm:$0xff]
        %v563 = vld [vmem:[%s226 + $0x58] sm:$0xff]
        %v564 = vld [vmem:[%s226 + $0x60] sm:$0xff]
        %v565 = vld [vmem:[%s226 + $0x68] sm:$0xff]
        %v566 = vld [vmem:[%s226 + $0x70] sm:$0xff]
        %v567 = vld [vmem:[%s226 + $0x78] sm:$0xff]
        %v568 = vld [vmem:[%s226 + $0x80] sm:$0xff]
        %v569 = vld [vmem:[%s226 + $0x88] sm:$0xff]
        %v570 = vld [vmem:[%s226 + $0x90] sm:$0xff]
        %v571 = vld [vmem:[%s226 + $0x98] sm:$0xff]
        %v572 = vld [vmem:[%s226 + $0xa0] sm:$0xff]
        %v573 = vld [vmem:[%s226 + $0xa8] sm:$0xff]
        %v574 = vld [vmem:[%s226 + $0xb0] sm:$0xff]
        %v575 = vld [vmem:[%s226 + $0xb8] sm:$0xff]
        %v576 = vld [vmem:[%s226 + $0xc0] sm:$0xff]
        %v577 = vld [vmem:[%s226 + $0xc8] sm:$0xff]
        %v578 = vld [vmem:[%s226 + $0xd0] sm:$0xff]
        %v579 = vld [vmem:[%s226 + $0xd8] sm:$0xff]
        %v580 = vld [vmem:[%s226 + $0xe0] sm:$0xff]
        %v581 = vld [vmem:[%s226 + $0xe8] sm:$0xff]
        %v582 = vld [vmem:[%s226 + $0xf0] sm:$0xff]
        %v583 = vld [vmem:[%s226 + $0xf8] sm:$0xff]
        %v584 = vld [vmem:[%s287] sm:$0xf]
        %v585 = vld [vmem:[%s287 + $0x4] sm:$0xf]
        %v586 = vld [vmem:[%s287 + $0x8] sm:$0xf]
        %v587 = vld [vmem:[%s287 + $0xc] sm:$0xf]
        %v588 = vld [vmem:[%s287 + $0x10] sm:$0xf]
        %v589 = vld [vmem:[%s287 + $0x14] sm:$0xf]
        %v590 = vld [vmem:[%s287 + $0x18] sm:$0xf]
        %v591 = vld [vmem:[%s287 + $0x1c] sm:$0xf]
        %v592 = vld [vmem:[%s287 + $0x20] sm:$0xf]
        %v593 = vld [vmem:[%s287 + $0x24] sm:$0xf]
        %v594 = vld [vmem:[%s287 + $0x28] sm:$0xf]
        %v595 = vld [vmem:[%s287 + $0x2c] sm:$0xf]
        %v596 = vld [vmem:[%s287 + $0x30] sm:$0xf]
        %v597 = vld [vmem:[%s287 + $0x34] sm:$0xf]
        %v598 = vld [vmem:[%s287 + $0x38] sm:$0xf]
        %v599 = vld [vmem:[%s287 + $0x3c] sm:$0xf]
        %v600 = vld [vmem:[%s287 + $0x40] sm:$0xf]
        %v601 = vld [vmem:[%s287 + $0x44] sm:$0xf]
        %v602 = vld [vmem:[%s287 + $0x48] sm:$0xf]
        %v603 = vld [vmem:[%s287 + $0x4c] sm:$0xf]
        %v604 = vld [vmem:[%s287 + $0x50] sm:$0xf]
        %v605 = vld [vmem:[%s287 + $0x54] sm:$0xf]
        %v606 = vld [vmem:[%s287 + $0x58] sm:$0xf]
        %v607 = vld [vmem:[%s287 + $0x5c] sm:$0xf]
        %v608 = vld [vmem:[%s287 + $0x60] sm:$0xf]
        %v609 = vld [vmem:[%s287 + $0x64] sm:$0xf]
        %v610 = vld [vmem:[%s287 + $0x68] sm:$0xf]
        %v611 = vld [vmem:[%s287 + $0x6c] sm:$0xf]
        %v612 = vld [vmem:[%s287 + $0x70] sm:$0xf]
        %v613 = vld [vmem:[%s287 + $0x74] sm:$0xf]
        %v614 = vld [vmem:[%s287 + $0x78] sm:$0xf]
        %v615 = vld [vmem:[%s287 + $0x7c] sm:$0xf]
        %v616 = vld [vmem:[%s287 + $0x80] sm:$0xf]
        %v617 = vld [vmem:[%s287 + $0x84] sm:$0xf]
        %v618 = vld [vmem:[%s287 + $0x88] sm:$0xf]
        %v619 = vld [vmem:[%s287 + $0x8c] sm:$0xf]
        %v620 = vld [vmem:[%s287 + $0x90] sm:$0xf]
        %v621 = vld [vmem:[%s287 + $0x94] sm:$0xf]
        %v622 = vld [vmem:[%s287 + $0x98] sm:$0xf]
        %v623 = vld [vmem:[%s287 + $0x9c] sm:$0xf]
        %v624 = vld [vmem:[%s287 + $0xa0] sm:$0xf]
        %v625 = vld [vmem:[%s287 + $0xa4] sm:$0xf]
        %v626 = vld [vmem:[%s287 + $0xa8] sm:$0xf]
        %v627 = vld [vmem:[%s287 + $0xac] sm:$0xf]
        %v628 = vld [vmem:[%s287 + $0xb0] sm:$0xf]
        %v629 = vld [vmem:[%s287 + $0xb4] sm:$0xf]
        %v630 = vld [vmem:[%s287 + $0xb8] sm:$0xf]
        %v631 = vld [vmem:[%s287 + $0xbc] sm:$0xf]
        %v632 = vld [vmem:[%s287 + $0xc0] sm:$0xf]
        %v633 = vld [vmem:[%s287 + $0xc4] sm:$0xf]
        %v634 = vld [vmem:[%s287 + $0xc8] sm:$0xf]
        %v635 = vld [vmem:[%s287 + $0xcc] sm:$0xf]
        %v636 = vld [vmem:[%s287 + $0xd0] sm:$0xf]
        %v637 = vld [vmem:[%s287 + $0xd4] sm:$0xf]
        %v638 = vld [vmem:[%s287 + $0xd8] sm:$0xf]
        %v639 = vld [vmem:[%s287 + $0xdc] sm:$0xf]
        %v640 = vld [vmem:[%s287 + $0xe0] sm:$0xf]
        %v641 = vld [vmem:[%s287 + $0xe4] sm:$0xf]
        %v642 = vld [vmem:[%s287 + $0xe8] sm:$0xf]
        %v643 = vld [vmem:[%s287 + $0xec] sm:$0xf]
        %v644 = vld [vmem:[%s287 + $0xf0] sm:$0xf]
        %v645 = vld [vmem:[%s287 + $0xf4] sm:$0xf]
        %v646 = vld [vmem:[%s287 + $0xf8] sm:$0xf]
        %v647 = vld [vmem:[%s287 + $0xfc] sm:$0xf]
        %v712 = vunpack.c.l.b16 %v488
        %v713 = vunpack.c.l.b16 %v489
        %v714 = vunpack.c.l.b16 %v490
        %v715 = vunpack.c.l.b16 %v491
        %v716 = vunpack.c.l.b16 %v492
        %v717 = vunpack.c.l.b16 %v493
        %v718 = vunpack.c.l.b16 %v494
        %v719 = vunpack.c.l.b16 %v495
        %v720 = vunpack.c.l.b16 %v496
        %v721 = vunpack.c.l.b16 %v497
        %v722 = vunpack.c.l.b16 %v498
        %v723 = vunpack.c.l.b16 %v499
        %v724 = vunpack.c.l.b16 %v500
        %v725 = vunpack.c.l.b16 %v501
        %v726 = vunpack.c.l.b16 %v502
        %v727 = vunpack.c.l.b16 %v503
        %v728 = vunpack.c.l.b16 %v504
        %v729 = vunpack.c.l.b16 %v505
        %v730 = vunpack.c.l.b16 %v506
        %v731 = vunpack.c.l.b16 %v507
        %v732 = vunpack.c.l.b16 %v508
        %v733 = vunpack.c.l.b16 %v509
        %v734 = vunpack.c.l.b16 %v510
        %v735 = vunpack.c.l.b16 %v511
        %v736 = vunpack.c.l.b16 %v512
        %v737 = vunpack.c.l.b16 %v513
        %v738 = vunpack.c.l.b16 %v514
        %v739 = vunpack.c.l.b16 %v515
        %v740 = vunpack.c.l.b16 %v516
        %v741 = vunpack.c.l.b16 %v517
        %v742 = vunpack.c.l.b16 %v518
        %v743 = vunpack.c.l.b16 %v519
        %v744 = vunpack.c.l.b16 %v520
        %v745 = vunpack.c.l.b16 %v521
        %v746 = vunpack.c.l.b16 %v522
        %v747 = vunpack.c.l.b16 %v523
        %v748 = vunpack.c.l.b16 %v524
        %v749 = vunpack.c.l.b16 %v525
        %v750 = vunpack.c.l.b16 %v526
        %v751 = vunpack.c.l.b16 %v527
        %v752 = vunpack.c.l.b16 %v528
        %v753 = vunpack.c.l.b16 %v529
        %v754 = vunpack.c.l.b16 %v530
        %v755 = vunpack.c.l.b16 %v531
        %v756 = vunpack.c.l.b16 %v532
        %v757 = vunpack.c.l.b16 %v533
        %v758 = vunpack.c.l.b16 %v534
        %v759 = vunpack.c.l.b16 %v535
        %v760 = vunpack.c.l.b16 %v536
        %v761 = vunpack.c.l.b16 %v537
        %v762 = vunpack.c.l.b16 %v538
        %v763 = vunpack.c.l.b16 %v539
        %v764 = vunpack.c.l.b16 %v540
        %v765 = vunpack.c.l.b16 %v541
        %v766 = vunpack.c.l.b16 %v542
        %v767 = vunpack.c.l.b16 %v543
        %v768 = vunpack.c.l.b16 %v544
        %v769 = vunpack.c.l.b16 %v545
        %v770 = vunpack.c.l.b16 %v546
        %v771 = vunpack.c.l.b16 %v547
        %v772 = vunpack.c.l.b16 %v548
        %v773 = vunpack.c.l.b16 %v549
        %v774 = vunpack.c.l.b16 %v550
        %v775 = vunpack.c.l.b16 %v551
        %v776 = vpack.c.b16 %v713, %v712
        %v777 = vpack.c.b16 %v715, %v714
        %v778 = vpack.c.b16 %v717, %v716
        %v779 = vpack.c.b16 %v719, %v718
        %v780 = vpack.c.b16 %v721, %v720
        %v781 = vpack.c.b16 %v723, %v722
        %v782 = vpack.c.b16 %v725, %v724
        %v783 = vpack.c.b16 %v727, %v726
        %v784 = vpack.c.b16 %v729, %v728
        %v785 = vpack.c.b16 %v731, %v730
        %v786 = vpack.c.b16 %v733, %v732
        %v787 = vpack.c.b16 %v735, %v734
        %v788 = vpack.c.b16 %v737, %v736
        %v789 = vpack.c.b16 %v739, %v738
        %v790 = vpack.c.b16 %v741, %v740
        %v791 = vpack.c.b16 %v743, %v742
        %v792 = vpack.c.b16 %v745, %v744
        %v793 = vpack.c.b16 %v747, %v746
        %v794 = vpack.c.b16 %v749, %v748
        %v795 = vpack.c.b16 %v751, %v750
        %v796 = vpack.c.b16 %v753, %v752
        %v797 = vpack.c.b16 %v755, %v754
        %v798 = vpack.c.b16 %v757, %v756
        %v799 = vpack.c.b16 %v759, %v758
        %v800 = vpack.c.b16 %v761, %v760
        %v801 = vpack.c.b16 %v763, %v762
        %v802 = vpack.c.b16 %v765, %v764
        %v803 = vpack.c.b16 %v767, %v766
        %v804 = vpack.c.b16 %v769, %v768
        %v805 = vpack.c.b16 %v771, %v770
        %v806 = vpack.c.b16 %v773, %v772
        %v807 = vpack.c.b16 %v775, %v774
        %v872 = vunpack.c.l.b16 %v552
        %v873 = vunpack.c.h.b16 %v552
        %v874 = vunpack.c.l.b16 %v553
        %v875 = vunpack.c.h.b16 %v553
        %v876 = vunpack.c.l.b16 %v554
        %v877 = vunpack.c.h.b16 %v554
        %v878 = vunpack.c.l.b16 %v555
        %v879 = vunpack.c.h.b16 %v555
        %v880 = vunpack.c.l.b16 %v556
        %v881 = vunpack.c.h.b16 %v556
        %v882 = vunpack.c.l.b16 %v557
        %v883 = vunpack.c.h.b16 %v557
        %v884 = vunpack.c.l.b16 %v558
        %v885 = vunpack.c.h.b16 %v558
        %v886 = vunpack.c.l.b16 %v559
        %v887 = vunpack.c.h.b16 %v559
        %v888 = vunpack.c.l.b16 %v560
        %v889 = vunpack.c.h.b16 %v560
        %v890 = vunpack.c.l.b16 %v561
        %v891 = vunpack.c.h.b16 %v561
        %v892 = vunpack.c.l.b16 %v562
        %v893 = vunpack.c.h.b16 %v562
        %v894 = vunpack.c.l.b16 %v563
        %v895 = vunpack.c.h.b16 %v563
        %v896 = vunpack.c.l.b16 %v564
        %v897 = vunpack.c.h.b16 %v564
        %v898 = vunpack.c.l.b16 %v565
        %v899 = vunpack.c.h.b16 %v565
        %v900 = vunpack.c.l.b16 %v566
        %v901 = vunpack.c.h.b16 %v566
        %v902 = vunpack.c.l.b16 %v567
        %v903 = vunpack.c.h.b16 %v567
        %v904 = vunpack.c.l.b16 %v568
        %v905 = vunpack.c.h.b16 %v568
        %v906 = vunpack.c.l.b16 %v569
        %v907 = vunpack.c.h.b16 %v569
        %v908 = vunpack.c.l.b16 %v570
        %v909 = vunpack.c.h.b16 %v570
        %v910 = vunpack.c.l.b16 %v571
        %v911 = vunpack.c.h.b16 %v571
        %v912 = vunpack.c.l.b16 %v572
        %v913 = vunpack.c.h.b16 %v572
        %v914 = vunpack.c.l.b16 %v573
        %v915 = vunpack.c.h.b16 %v573
        %v916 = vunpack.c.l.b16 %v574
        %v917 = vunpack.c.h.b16 %v574
        %v918 = vunpack.c.l.b16 %v575
        %v919 = vunpack.c.h.b16 %v575
        %v920 = vunpack.c.l.b16 %v576
        %v921 = vunpack.c.h.b16 %v576
        %v922 = vunpack.c.l.b16 %v577
        %v923 = vunpack.c.h.b16 %v577
        %v924 = vunpack.c.l.b16 %v578
        %v925 = vunpack.c.h.b16 %v578
        %v926 = vunpack.c.l.b16 %v579
        %v927 = vunpack.c.h.b16 %v579
        %v928 = vunpack.c.l.b16 %v580
        %v929 = vunpack.c.h.b16 %v580
        %v930 = vunpack.c.l.b16 %v581
        %v931 = vunpack.c.h.b16 %v581
        %v932 = vunpack.c.l.b16 %v582
        %v933 = vunpack.c.h.b16 %v582
        %v934 = vunpack.c.l.b16 %v583
        %v935 = vunpack.c.h.b16 %v583
        %v936 = vpack.c.b16 %v876, %v872
        %v937 = vpack.c.b16 %v877, %v873
        %v938 = vpack.c.b16 %v878, %v874
        %v939 = vpack.c.b16 %v879, %v875
        %v940 = vpack.c.b16 %v884, %v880
        %v941 = vpack.c.b16 %v885, %v881
        %v942 = vpack.c.b16 %v886, %v882
        %v943 = vpack.c.b16 %v887, %v883
        %v944 = vpack.c.b16 %v892, %v888
        %v945 = vpack.c.b16 %v893, %v889
        %v946 = vpack.c.b16 %v894, %v890
        %v947 = vpack.c.b16 %v895, %v891
        %v948 = vpack.c.b16 %v900, %v896
        %v949 = vpack.c.b16 %v901, %v897
        %v950 = vpack.c.b16 %v902, %v898
        %v951 = vpack.c.b16 %v903, %v899
        %v952 = vpack.c.b16 %v908, %v904
        %v953 = vpack.c.b16 %v909, %v905
        %v954 = vpack.c.b16 %v910, %v906
        %v955 = vpack.c.b16 %v911, %v907
        %v956 = vpack.c.b16 %v916, %v912
        %v957 = vpack.c.b16 %v917, %v913
        %v958 = vpack.c.b16 %v918, %v914
        %v959 = vpack.c.b16 %v919, %v915
        %v960 = vpack.c.b16 %v924, %v920
        %v961 = vpack.c.b16 %v925, %v921
        %v962 = vpack.c.b16 %v926, %v922
        %v963 = vpack.c.b16 %v927, %v923
        %v964 = vpack.c.b16 %v932, %v928
        %v965 = vpack.c.b16 %v933, %v929
        %v966 = vpack.c.b16 %v934, %v930
        %v967 = vpack.c.b16 %v935, %v931
        %1000 = vmatpush.bf16.msra.mxu0 %v964
        %1001 = vmatpush.bf16.msra.mxu0 %v960
        %1002 = vmatpush.bf16.msra.mxu0 %v956
        %1003 = vmatpush.bf16.msra.mxu0 %v952
        %1004 = vmatpush.bf16.msra.mxu0 %v948
        %1005 = vmatpush.bf16.msra.mxu0 %v944
        %1006 = vmatpush.bf16.msra.mxu0 %v940
        %1007 = vmatpush.bf16.msra.mxu0 %v936
        %1008 = vmatmul.bf16.gmra.mxu0 %v776
        %v1009 = vpop.f32.mrf.mxu0
        %v1010 = vadd.f32 0.0, %v1009
        %v1011 = vpop.f32.mrf.mxu0
        %v1012 = vadd.f32 0.0, %v1011
        %1013 = vmatmul.bf16.gmra.mxu0 %v777
        %v1014 = vpop.f32.mrf.mxu0
        %v1015 = vadd.f32 0.0, %v1014
        %v1016 = vpop.f32.mrf.mxu0
        %v1017 = vadd.f32 0.0, %v1016
        %1018 = vmatmul.bf16.gmra.mxu0 %v778
        %v1019 = vpop.f32.mrf.mxu0
        %v1020 = vadd.f32 0.0, %v1019
        %v1021 = vpop.f32.mrf.mxu0
        %v1022 = vadd.f32 0.0, %v1021
        %1023 = vmatmul.bf16.gmra.mxu0 %v779
        %v1024 = vpop.f32.mrf.mxu0
        %v1025 = vadd.f32 0.0, %v1024
        %v1026 = vpop.f32.mrf.mxu0
        %v1027 = vadd.f32 0.0, %v1026
        %1028 = vmatmul.bf16.gmra.mxu0 %v780
        %v1029 = vpop.f32.mrf.mxu0
        %v1030 = vadd.f32 0.0, %v1029
        %v1031 = vpop.f32.mrf.mxu0
        %v1032 = vadd.f32 0.0, %v1031
        %1033 = vmatmul.bf16.gmra.mxu0 %v781
        %v1034 = vpop.f32.mrf.mxu0
        %v1035 = vadd.f32 0.0, %v1034
        %v1036 = vpop.f32.mrf.mxu0
        %v1037 = vadd.f32 0.0, %v1036
        %1038 = vmatmul.bf16.gmra.mxu0 %v782
        %v1039 = vpop.f32.mrf.mxu0
        %v1040 = vadd.f32 0.0, %v1039
        %v1041 = vpop.f32.mrf.mxu0
        %v1042 = vadd.f32 0.0, %v1041
        %1043 = vmatmul.bf16.gmra.mxu0 %v783
        %v1044 = vpop.f32.mrf.mxu0
        %v1045 = vadd.f32 0.0, %v1044
        %v1046 = vpop.f32.mrf.mxu0
        %v1047 = vadd.f32 0.0, %v1046
        %1048 = vmatmul.bf16.gmra.mxu0 %v784
        %v1049 = vpop.f32.mrf.mxu0
        %v1050 = vadd.f32 0.0, %v1049
        %v1051 = vpop.f32.mrf.mxu0
        %v1052 = vadd.f32 0.0, %v1051
        %1053 = vmatmul.bf16.gmra.mxu0 %v785
        %v1054 = vpop.f32.mrf.mxu0
        %v1055 = vadd.f32 0.0, %v1054
        %v1056 = vpop.f32.mrf.mxu0
        %v1057 = vadd.f32 0.0, %v1056
        %1058 = vmatmul.bf16.gmra.mxu0 %v786
        %v1059 = vpop.f32.mrf.mxu0
        %v1060 = vadd.f32 0.0, %v1059
        %v1061 = vpop.f32.mrf.mxu0
        %v1062 = vadd.f32 0.0, %v1061
        %1063 = vmatmul.bf16.gmra.mxu0 %v787
        %v1064 = vpop.f32.mrf.mxu0
        %v1065 = vadd.f32 0.0, %v1064
        %v1066 = vpop.f32.mrf.mxu0
        %v1067 = vadd.f32 0.0, %v1066
        %1068 = vmatmul.bf16.gmra.mxu0 %v788
        %v1069 = vpop.f32.mrf.mxu0
        %v1070 = vadd.f32 0.0, %v1069
        %v1071 = vpop.f32.mrf.mxu0
        %v1072 = vadd.f32 0.0, %v1071
        %1073 = vmatmul.bf16.gmra.mxu0 %v789
        %v1074 = vpop.f32.mrf.mxu0
        %v1075 = vadd.f32 0.0, %v1074
        %v1076 = vpop.f32.mrf.mxu0
        %v1077 = vadd.f32 0.0, %v1076
        %1078 = vmatmul.bf16.gmra.mxu0 %v790
        %v1079 = vpop.f32.mrf.mxu0
        %v1080 = vadd.f32 0.0, %v1079
        %v1081 = vpop.f32.mrf.mxu0
        %v1082 = vadd.f32 0.0, %v1081
        %1083 = vmatmul.bf16.gmra.mxu0 %v791
        %v1084 = vpop.f32.mrf.mxu0
        %v1085 = vadd.f32 0.0, %v1084
        %v1086 = vpop.f32.mrf.mxu0
        %v1087 = vadd.f32 0.0, %v1086
        %1088 = vmatmul.bf16.gmra.mxu0 %v792
        %v1089 = vpop.f32.mrf.mxu0
        %v1090 = vadd.f32 0.0, %v1089
        %v1091 = vpop.f32.mrf.mxu0
        %v1092 = vadd.f32 0.0, %v1091
        %1093 = vmatmul.bf16.gmra.mxu0 %v793
        %v1094 = vpop.f32.mrf.mxu0
        %v1095 = vadd.f32 0.0, %v1094
        %v1096 = vpop.f32.mrf.mxu0
        %v1097 = vadd.f32 0.0, %v1096
        %1098 = vmatmul.bf16.gmra.mxu0 %v794
        %v1099 = vpop.f32.mrf.mxu0
        %v1100 = vadd.f32 0.0, %v1099
        %v1101 = vpop.f32.mrf.mxu0
        %v1102 = vadd.f32 0.0, %v1101
        %1103 = vmatmul.bf16.gmra.mxu0 %v795
        %v1104 = vpop.f32.mrf.mxu0
        %v1105 = vadd.f32 0.0, %v1104
        %v1106 = vpop.f32.mrf.mxu0
        %v1107 = vadd.f32 0.0, %v1106
        %1108 = vmatmul.bf16.gmra.mxu0 %v796
        %v1109 = vpop.f32.mrf.mxu0
        %v1110 = vadd.f32 0.0, %v1109
        %v1111 = vpop.f32.mrf.mxu0
        %v1112 = vadd.f32 0.0, %v1111
        %1113 = vmatmul.bf16.gmra.mxu0 %v797
        %v1114 = vpop.f32.mrf.mxu0
        %v1115 = vadd.f32 0.0, %v1114
        %v1116 = vpop.f32.mrf.mxu0
        %v1117 = vadd.f32 0.0, %v1116
        %1118 = vmatmul.bf16.gmra.mxu0 %v798
        %v1119 = vpop.f32.mrf.mxu0
        %v1120 = vadd.f32 0.0, %v1119
        %v1121 = vpop.f32.mrf.mxu0
        %v1122 = vadd.f32 0.0, %v1121
        %1123 = vmatmul.bf16.gmra.mxu0 %v799
        %v1124 = vpop.f32.mrf.mxu0
        %v1125 = vadd.f32 0.0, %v1124
        %v1126 = vpop.f32.mrf.mxu0
        %v1127 = vadd.f32 0.0, %v1126
        %1128 = vmatmul.bf16.gmra.mxu0 %v800
        %v1129 = vpop.f32.mrf.mxu0
        %v1130 = vadd.f32 0.0, %v1129
        %v1131 = vpop.f32.mrf.mxu0
        %v1132 = vadd.f32 0.0, %v1131
        %1133 = vmatmul.bf16.gmra.mxu0 %v801
        %v1134 = vpop.f32.mrf.mxu0
        %v1135 = vadd.f32 0.0, %v1134
        %v1136 = vpop.f32.mrf.mxu0
        %v1137 = vadd.f32 0.0, %v1136
        %1138 = vmatmul.bf16.gmra.mxu0 %v802
        %v1139 = vpop.f32.mrf.mxu0
        %v1140 = vadd.f32 0.0, %v1139
        %v1141 = vpop.f32.mrf.mxu0
        %v1142 = vadd.f32 0.0, %v1141
        %1143 = vmatmul.bf16.gmra.mxu0 %v803
        %v1144 = vpop.f32.mrf.mxu0
        %v1145 = vadd.f32 0.0, %v1144
        %v1146 = vpop.f32.mrf.mxu0
        %v1147 = vadd.f32 0.0, %v1146
        %1148 = vmatmul.bf16.gmra.mxu0 %v804
        %v1149 = vpop.f32.mrf.mxu0
        %v1150 = vadd.f32 0.0, %v1149
        %v1151 = vpop.f32.mrf.mxu0
        %v1152 = vadd.f32 0.0, %v1151
        %1153 = vmatmul.bf16.gmra.mxu0 %v805
        %v1154 = vpop.f32.mrf.mxu0
        %v1155 = vadd.f32 0.0, %v1154
        %v1156 = vpop.f32.mrf.mxu0
        %v1157 = vadd.f32 0.0, %v1156
        %1158 = vmatmul.bf16.gmra.mxu0 %v806
        %v1159 = vpop.f32.mrf.mxu0
        %v1160 = vadd.f32 0.0, %v1159
        %v1161 = vpop.f32.mrf.mxu0
        %v1162 = vadd.f32 0.0, %v1161
        %1163 = vmatmul.bf16.gmra.mxu0 %v807
        %v1164 = vpop.f32.mrf.mxu0
        %v1165 = vadd.f32 0.0, %v1164
        %v1166 = vpop.f32.mrf.mxu0
        %v1167 = vadd.f32 0.0, %v1166
        %1168 = vdwg.mxu0
        %1169 = vmatpush.bf16.msra.mxu0 %v965
        %1170 = vmatpush.bf16.msra.mxu0 %v961
        %1171 = vmatpush.bf16.msra.mxu0 %v957
        %1172 = vmatpush.bf16.msra.mxu0 %v953
        %1173 = vmatpush.bf16.msra.mxu0 %v949
        %1174 = vmatpush.bf16.msra.mxu0 %v945
        %1175 = vmatpush.bf16.msra.mxu0 %v941
        %1176 = vmatpush.bf16.msra.mxu0 %v937
        %1177 = vmatmul.bf16.gmra.mxu0 %v776
        %v1178 = vpop.f32.mrf.mxu0
        %v1179 = vadd.f32 0.0, %v1178
        %v1180 = vpop.f32.mrf.mxu0
        %v1181 = vadd.f32 0.0, %v1180
        %1182 = vmatmul.bf16.gmra.mxu0 %v777
        %v1183 = vpop.f32.mrf.mxu0
        %v1184 = vadd.f32 0.0, %v1183
        %v1185 = vpop.f32.mrf.mxu0
        %v1186 = vadd.f32 0.0, %v1185
        %1187 = vmatmul.bf16.gmra.mxu0 %v778
        %v1188 = vpop.f32.mrf.mxu0
        %v1189 = vadd.f32 0.0, %v1188
        %v1190 = vpop.f32.mrf.mxu0
        %v1191 = vadd.f32 0.0, %v1190
        %1192 = vmatmul.bf16.gmra.mxu0 %v779
        %v1193 = vpop.f32.mrf.mxu0
        %v1194 = vadd.f32 0.0, %v1193
        %v1195 = vpop.f32.mrf.mxu0
        %v1196 = vadd.f32 0.0, %v1195
        %1197 = vmatmul.bf16.gmra.mxu0 %v780
        %v1198 = vpop.f32.mrf.mxu0
        %v1199 = vadd.f32 0.0, %v1198
        %v1200 = vpop.f32.mrf.mxu0
        %v1201 = vadd.f32 0.0, %v1200
        %1202 = vmatmul.bf16.gmra.mxu0 %v781
        %v1203 = vpop.f32.mrf.mxu0
        %v1204 = vadd.f32 0.0, %v1203
        %v1205 = vpop.f32.mrf.mxu0
        %v1206 = vadd.f32 0.0, %v1205
        %1207 = vmatmul.bf16.gmra.mxu0 %v782
        %v1208 = vpop.f32.mrf.mxu0
        %v1209 = vadd.f32 0.0, %v1208
        %v1210 = vpop.f32.mrf.mxu0
        %v1211 = vadd.f32 0.0, %v1210
        %1212 = vmatmul.bf16.gmra.mxu0 %v783
        %v1213 = vpop.f32.mrf.mxu0
        %v1214 = vadd.f32 0.0, %v1213
        %v1215 = vpop.f32.mrf.mxu0
        %v1216 = vadd.f32 0.0, %v1215
        %1217 = vmatmul.bf16.gmra.mxu0 %v784
        %v1218 = vpop.f32.mrf.mxu0
        %v1219 = vadd.f32 0.0, %v1218
        %v1220 = vpop.f32.mrf.mxu0
        %v1221 = vadd.f32 0.0, %v1220
        %1222 = vmatmul.bf16.gmra.mxu0 %v785
        %v1223 = vpop.f32.mrf.mxu0
        %v1224 = vadd.f32 0.0, %v1223
        %v1225 = vpop.f32.mrf.mxu0
        %v1226 = vadd.f32 0.0, %v1225
        %1227 = vmatmul.bf16.gmra.mxu0 %v786
        %v1228 = vpop.f32.mrf.mxu0
        %v1229 = vadd.f32 0.0, %v1228
        %v1230 = vpop.f32.mrf.mxu0
        %v1231 = vadd.f32 0.0, %v1230
        %1232 = vmatmul.bf16.gmra.mxu0 %v787
        %v1233 = vpop.f32.mrf.mxu0
        %v1234 = vadd.f32 0.0, %v1233
        %v1235 = vpop.f32.mrf.mxu0
        %v1236 = vadd.f32 0.0, %v1235
        %1237 = vmatmul.bf16.gmra.mxu0 %v788
        %v1238 = vpop.f32.mrf.mxu0
        %v1239 = vadd.f32 0.0, %v1238
        %v1240 = vpop.f32.mrf.mxu0
        %v1241 = vadd.f32 0.0, %v1240
        %1242 = vmatmul.bf16.gmra.mxu0 %v789
        %v1243 = vpop.f32.mrf.mxu0
        %v1244 = vadd.f32 0.0, %v1243
        %v1245 = vpop.f32.mrf.mxu0
        %v1246 = vadd.f32 0.0, %v1245
        %1247 = vmatmul.bf16.gmra.mxu0 %v790
        %v1248 = vpop.f32.mrf.mxu0
        %v1249 = vadd.f32 0.0, %v1248
        %v1250 = vpop.f32.mrf.mxu0
        %v1251 = vadd.f32 0.0, %v1250
        %1252 = vmatmul.bf16.gmra.mxu0 %v791
        %v1253 = vpop.f32.mrf.mxu0
        %v1254 = vadd.f32 0.0, %v1253
        %v1255 = vpop.f32.mrf.mxu0
        %v1256 = vadd.f32 0.0, %v1255
        %1257 = vmatmul.bf16.gmra.mxu0 %v792
        %v1258 = vpop.f32.mrf.mxu0
        %v1259 = vadd.f32 0.0, %v1258
        %v1260 = vpop.f32.mrf.mxu0
        %v1261 = vadd.f32 0.0, %v1260
        %1262 = vmatmul.bf16.gmra.mxu0 %v793
        %v1263 = vpop.f32.mrf.mxu0
        %v1264 = vadd.f32 0.0, %v1263
        %v1265 = vpop.f32.mrf.mxu0
        %v1266 = vadd.f32 0.0, %v1265
        %1267 = vmatmul.bf16.gmra.mxu0 %v794
        %v1268 = vpop.f32.mrf.mxu0
        %v1269 = vadd.f32 0.0, %v1268
        %v1270 = vpop.f32.mrf.mxu0
        %v1271 = vadd.f32 0.0, %v1270
        %1272 = vmatmul.bf16.gmra.mxu0 %v795
        %v1273 = vpop.f32.mrf.mxu0
        %v1274 = vadd.f32 0.0, %v1273
        %v1275 = vpop.f32.mrf.mxu0
        %v1276 = vadd.f32 0.0, %v1275
        %1277 = vmatmul.bf16.gmra.mxu0 %v796
        %v1278 = vpop.f32.mrf.mxu0
        %v1279 = vadd.f32 0.0, %v1278
        %v1280 = vpop.f32.mrf.mxu0
        %v1281 = vadd.f32 0.0, %v1280
        %1282 = vmatmul.bf16.gmra.mxu0 %v797
        %v1283 = vpop.f32.mrf.mxu0
        %v1284 = vadd.f32 0.0, %v1283
        %v1285 = vpop.f32.mrf.mxu0
        %v1286 = vadd.f32 0.0, %v1285
        %1287 = vmatmul.bf16.gmra.mxu0 %v798
        %v1288 = vpop.f32.mrf.mxu0
        %v1289 = vadd.f32 0.0, %v1288
        %v1290 = vpop.f32.mrf.mxu0
        %v1291 = vadd.f32 0.0, %v1290
        %1292 = vmatmul.bf16.gmra.mxu0 %v799
        %v1293 = vpop.f32.mrf.mxu0
        %v1294 = vadd.f32 0.0, %v1293
        %v1295 = vpop.f32.mrf.mxu0
        %v1296 = vadd.f32 0.0, %v1295
        %1297 = vmatmul.bf16.gmra.mxu0 %v800
        %v1298 = vpop.f32.mrf.mxu0
        %v1299 = vadd.f32 0.0, %v1298
        %v1300 = vpop.f32.mrf.mxu0
        %v1301 = vadd.f32 0.0, %v1300
        %1302 = vmatmul.bf16.gmra.mxu0 %v801
        %v1303 = vpop.f32.mrf.mxu0
        %v1304 = vadd.f32 0.0, %v1303
        %v1305 = vpop.f32.mrf.mxu0
        %v1306 = vadd.f32 0.0, %v1305
        %1307 = vmatmul.bf16.gmra.mxu0 %v802
        %v1308 = vpop.f32.mrf.mxu0
        %v1309 = vadd.f32 0.0, %v1308
        %v1310 = vpop.f32.mrf.mxu0
        %v1311 = vadd.f32 0.0, %v1310
        %1312 = vmatmul.bf16.gmra.mxu0 %v803
        %v1313 = vpop.f32.mrf.mxu0
        %v1314 = vadd.f32 0.0, %v1313
        %v1315 = vpop.f32.mrf.mxu0
        %v1316 = vadd.f32 0.0, %v1315
        %1317 = vmatmul.bf16.gmra.mxu0 %v804
        %v1318 = vpop.f32.mrf.mxu0
        %v1319 = vadd.f32 0.0, %v1318
        %v1320 = vpop.f32.mrf.mxu0
        %v1321 = vadd.f32 0.0, %v1320
        %1322 = vmatmul.bf16.gmra.mxu0 %v805
        %v1323 = vpop.f32.mrf.mxu0
        %v1324 = vadd.f32 0.0, %v1323
        %v1325 = vpop.f32.mrf.mxu0
        %v1326 = vadd.f32 0.0, %v1325
        %1327 = vmatmul.bf16.gmra.mxu0 %v806
        %v1328 = vpop.f32.mrf.mxu0
        %v1329 = vadd.f32 0.0, %v1328
        %v1330 = vpop.f32.mrf.mxu0
        %v1331 = vadd.f32 0.0, %v1330
        %1332 = vmatmul.bf16.gmra.mxu0 %v807
        %v1333 = vpop.f32.mrf.mxu0
        %v1334 = vadd.f32 0.0, %v1333
        %v1335 = vpop.f32.mrf.mxu0
        %v1336 = vadd.f32 0.0, %v1335
        %1337 = vdwg.mxu0
        %1338 = vmatpush.bf16.msra.mxu0 %v966
        %1339 = vmatpush.bf16.msra.mxu0 %v962
        %1340 = vmatpush.bf16.msra.mxu0 %v958
        %1341 = vmatpush.bf16.msra.mxu0 %v954
        %1342 = vmatpush.bf16.msra.mxu0 %v950
        %1343 = vmatpush.bf16.msra.mxu0 %v946
        %1344 = vmatpush.bf16.msra.mxu0 %v942
        %1345 = vmatpush.bf16.msra.mxu0 %v938
        %1346 = vmatmul.bf16.gmra.mxu0 %v776
        %v1347 = vpop.f32.mrf.mxu0
        %v1348 = vadd.f32 0.0, %v1347
        %v1349 = vpop.f32.mrf.mxu0
        %v1350 = vadd.f32 0.0, %v1349
        %1351 = vmatmul.bf16.gmra.mxu0 %v777
        %v1352 = vpop.f32.mrf.mxu0
        %v1353 = vadd.f32 0.0, %v1352
        %v1354 = vpop.f32.mrf.mxu0
        %v1355 = vadd.f32 0.0, %v1354
        %1356 = vmatmul.bf16.gmra.mxu0 %v778
        %v1357 = vpop.f32.mrf.mxu0
        %v1358 = vadd.f32 0.0, %v1357
        %v1359 = vpop.f32.mrf.mxu0
        %v1360 = vadd.f32 0.0, %v1359
        %1361 = vmatmul.bf16.gmra.mxu0 %v779
        %v1362 = vpop.f32.mrf.mxu0
        %v1363 = vadd.f32 0.0, %v1362
        %v1364 = vpop.f32.mrf.mxu0
        %v1365 = vadd.f32 0.0, %v1364
        %1366 = vmatmul.bf16.gmra.mxu0 %v780
        %v1367 = vpop.f32.mrf.mxu0
        %v1368 = vadd.f32 0.0, %v1367
        %v1369 = vpop.f32.mrf.mxu0
        %v1370 = vadd.f32 0.0, %v1369
        %1371 = vmatmul.bf16.gmra.mxu0 %v781
        %v1372 = vpop.f32.mrf.mxu0
        %v1373 = vadd.f32 0.0, %v1372
        %v1374 = vpop.f32.mrf.mxu0
        %v1375 = vadd.f32 0.0, %v1374
        %1376 = vmatmul.bf16.gmra.mxu0 %v782
        %v1377 = vpop.f32.mrf.mxu0
        %v1378 = vadd.f32 0.0, %v1377
        %v1379 = vpop.f32.mrf.mxu0
        %v1380 = vadd.f32 0.0, %v1379
        %1381 = vmatmul.bf16.gmra.mxu0 %v783
        %v1382 = vpop.f32.mrf.mxu0
        %v1383 = vadd.f32 0.0, %v1382
        %v1384 = vpop.f32.mrf.mxu0
        %v1385 = vadd.f32 0.0, %v1384
        %1386 = vmatmul.bf16.gmra.mxu0 %v784
        %v1387 = vpop.f32.mrf.mxu0
        %v1388 = vadd.f32 0.0, %v1387
        %v1389 = vpop.f32.mrf.mxu0
        %v1390 = vadd.f32 0.0, %v1389
        %1391 = vmatmul.bf16.gmra.mxu0 %v785
        %v1392 = vpop.f32.mrf.mxu0
        %v1393 = vadd.f32 0.0, %v1392
        %v1394 = vpop.f32.mrf.mxu0
        %v1395 = vadd.f32 0.0, %v1394
        %1396 = vmatmul.bf16.gmra.mxu0 %v786
        %v1397 = vpop.f32.mrf.mxu0
        %v1398 = vadd.f32 0.0, %v1397
        %v1399 = vpop.f32.mrf.mxu0
        %v1400 = vadd.f32 0.0, %v1399
        %1401 = vmatmul.bf16.gmra.mxu0 %v787
        %v1402 = vpop.f32.mrf.mxu0
        %v1403 = vadd.f32 0.0, %v1402
        %v1404 = vpop.f32.mrf.mxu0
        %v1405 = vadd.f32 0.0, %v1404
        %1406 = vmatmul.bf16.gmra.mxu0 %v788
        %v1407 = vpop.f32.mrf.mxu0
        %v1408 = vadd.f32 0.0, %v1407
        %v1409 = vpop.f32.mrf.mxu0
        %v1410 = vadd.f32 0.0, %v1409
        %1411 = vmatmul.bf16.gmra.mxu0 %v789
        %v1412 = vpop.f32.mrf.mxu0
        %v1413 = vadd.f32 0.0, %v1412
        %v1414 = vpop.f32.mrf.mxu0
        %v1415 = vadd.f32 0.0, %v1414
        %1416 = vmatmul.bf16.gmra.mxu0 %v790
        %v1417 = vpop.f32.mrf.mxu0
        %v1418 = vadd.f32 0.0, %v1417
        %v1419 = vpop.f32.mrf.mxu0
        %v1420 = vadd.f32 0.0, %v1419
        %1421 = vmatmul.bf16.gmra.mxu0 %v791
        %v1422 = vpop.f32.mrf.mxu0
        %v1423 = vadd.f32 0.0, %v1422
        %v1424 = vpop.f32.mrf.mxu0
        %v1425 = vadd.f32 0.0, %v1424
        %1426 = vmatmul.bf16.gmra.mxu0 %v792
        %v1427 = vpop.f32.mrf.mxu0
        %v1428 = vadd.f32 0.0, %v1427
        %v1429 = vpop.f32.mrf.mxu0
        %v1430 = vadd.f32 0.0, %v1429
        %1431 = vmatmul.bf16.gmra.mxu0 %v793
        %v1432 = vpop.f32.mrf.mxu0
        %v1433 = vadd.f32 0.0, %v1432
        %v1434 = vpop.f32.mrf.mxu0
        %v1435 = vadd.f32 0.0, %v1434
        %1436 = vmatmul.bf16.gmra.mxu0 %v794
        %v1437 = vpop.f32.mrf.mxu0
        %v1438 = vadd.f32 0.0, %v1437
        %v1439 = vpop.f32.mrf.mxu0
        %v1440 = vadd.f32 0.0, %v1439
        %1441 = vmatmul.bf16.gmra.mxu0 %v795
        %v1442 = vpop.f32.mrf.mxu0
        %v1443 = vadd.f32 0.0, %v1442
        %v1444 = vpop.f32.mrf.mxu0
        %v1445 = vadd.f32 0.0, %v1444
        %1446 = vmatmul.bf16.gmra.mxu0 %v796
        %v1447 = vpop.f32.mrf.mxu0
        %v1448 = vadd.f32 0.0, %v1447
        %v1449 = vpop.f32.mrf.mxu0
        %v1450 = vadd.f32 0.0, %v1449
        %1451 = vmatmul.bf16.gmra.mxu0 %v797
        %v1452 = vpop.f32.mrf.mxu0
        %v1453 = vadd.f32 0.0, %v1452
        %v1454 = vpop.f32.mrf.mxu0
        %v1455 = vadd.f32 0.0, %v1454
        %1456 = vmatmul.bf16.gmra.mxu0 %v798
        %v1457 = vpop.f32.mrf.mxu0
        %v1458 = vadd.f32 0.0, %v1457
        %v1459 = vpop.f32.mrf.mxu0
        %v1460 = vadd.f32 0.0, %v1459
        %1461 = vmatmul.bf16.gmra.mxu0 %v799
        %v1462 = vpop.f32.mrf.mxu0
        %v1463 = vadd.f32 0.0, %v1462
        %v1464 = vpop.f32.mrf.mxu0
        %v1465 = vadd.f32 0.0, %v1464
        %1466 = vmatmul.bf16.gmra.mxu0 %v800
        %v1467 = vpop.f32.mrf.mxu0
        %v1468 = vadd.f32 0.0, %v1467
        %v1469 = vpop.f32.mrf.mxu0
        %v1470 = vadd.f32 0.0, %v1469
        %1471 = vmatmul.bf16.gmra.mxu0 %v801
        %v1472 = vpop.f32.mrf.mxu0
        %v1473 = vadd.f32 0.0, %v1472
        %v1474 = vpop.f32.mrf.mxu0
        %v1475 = vadd.f32 0.0, %v1474
        %1476 = vmatmul.bf16.gmra.mxu0 %v802
        %v1477 = vpop.f32.mrf.mxu0
        %v1478 = vadd.f32 0.0, %v1477
        %v1479 = vpop.f32.mrf.mxu0
        %v1480 = vadd.f32 0.0, %v1479
        %1481 = vmatmul.bf16.gmra.mxu0 %v803
        %v1482 = vpop.f32.mrf.mxu0
        %v1483 = vadd.f32 0.0, %v1482
        %v1484 = vpop.f32.mrf.mxu0
        %v1485 = vadd.f32 0.0, %v1484
        %1486 = vmatmul.bf16.gmra.mxu0 %v804
        %v1487 = vpop.f32.mrf.mxu0
        %v1488 = vadd.f32 0.0, %v1487
        %v1489 = vpop.f32.mrf.mxu0
        %v1490 = vadd.f32 0.0, %v1489
        %1491 = vmatmul.bf16.gmra.mxu0 %v805
        %v1492 = vpop.f32.mrf.mxu0
        %v1493 = vadd.f32 0.0, %v1492
        %v1494 = vpop.f32.mrf.mxu0
        %v1495 = vadd.f32 0.0, %v1494
        %1496 = vmatmul.bf16.gmra.mxu0 %v806
        %v1497 = vpop.f32.mrf.mxu0
        %v1498 = vadd.f32 0.0, %v1497
        %v1499 = vpop.f32.mrf.mxu0
        %v1500 = vadd.f32 0.0, %v1499
        %1501 = vmatmul.bf16.gmra.mxu0 %v807
        %v1502 = vpop.f32.mrf.mxu0
        %v1503 = vadd.f32 0.0, %v1502
        %v1504 = vpop.f32.mrf.mxu0
        %v1505 = vadd.f32 0.0, %v1504
        %1506 = vdwg.mxu0
        %1507 = vmatpush.bf16.msra.mxu0 %v967
        %1508 = vmatpush.bf16.msra.mxu0 %v963
        %1509 = vmatpush.bf16.msra.mxu0 %v959
        %1510 = vmatpush.bf16.msra.mxu0 %v955
        %1511 = vmatpush.bf16.msra.mxu0 %v951
        %1512 = vmatpush.bf16.msra.mxu0 %v947
        %1513 = vmatpush.bf16.msra.mxu0 %v943
        %1514 = vmatpush.bf16.msra.mxu0 %v939
        %1515 = vmatmul.bf16.gmra.mxu0 %v776
        %v1516 = vpop.f32.mrf.mxu0
        %v1517 = vadd.f32 0.0, %v1516
        %v1518 = vpop.f32.mrf.mxu0
        %v1519 = vadd.f32 0.0, %v1518
        %1520 = vmatmul.bf16.gmra.mxu0 %v777
        %v1521 = vpop.f32.mrf.mxu0
        %v1522 = vadd.f32 0.0, %v1521
        %v1523 = vpop.f32.mrf.mxu0
        %v1524 = vadd.f32 0.0, %v1523
        %1525 = vmatmul.bf16.gmra.mxu0 %v778
        %v1526 = vpop.f32.mrf.mxu0
        %v1527 = vadd.f32 0.0, %v1526
        %v1528 = vpop.f32.mrf.mxu0
        %v1529 = vadd.f32 0.0, %v1528
        %1530 = vmatmul.bf16.gmra.mxu0 %v779
        %v1531 = vpop.f32.mrf.mxu0
        %v1532 = vadd.f32 0.0, %v1531
        %v1533 = vpop.f32.mrf.mxu0
        %v1534 = vadd.f32 0.0, %v1533
        %1535 = vmatmul.bf16.gmra.mxu0 %v780
        %v1536 = vpop.f32.mrf.mxu0
        %v1537 = vadd.f32 0.0, %v1536
        %v1538 = vpop.f32.mrf.mxu0
        %v1539 = vadd.f32 0.0, %v1538
        %1540 = vmatmul.bf16.gmra.mxu0 %v781
        %v1541 = vpop.f32.mrf.mxu0
        %v1542 = vadd.f32 0.0, %v1541
        %v1543 = vpop.f32.mrf.mxu0
        %v1544 = vadd.f32 0.0, %v1543
        %1545 = vmatmul.bf16.gmra.mxu0 %v782
        %v1546 = vpop.f32.mrf.mxu0
        %v1547 = vadd.f32 0.0, %v1546
        %v1548 = vpop.f32.mrf.mxu0
        %v1549 = vadd.f32 0.0, %v1548
        %1550 = vmatmul.bf16.gmra.mxu0 %v783
        %v1551 = vpop.f32.mrf.mxu0
        %v1552 = vadd.f32 0.0, %v1551
        %v1553 = vpop.f32.mrf.mxu0
        %v1554 = vadd.f32 0.0, %v1553
        %1555 = vmatmul.bf16.gmra.mxu0 %v784
        %v1556 = vpop.f32.mrf.mxu0
        %v1557 = vadd.f32 0.0, %v1556
        %v1558 = vpop.f32.mrf.mxu0
        %v1559 = vadd.f32 0.0, %v1558
        %1560 = vmatmul.bf16.gmra.mxu0 %v785
        %v1561 = vpop.f32.mrf.mxu0
        %v1562 = vadd.f32 0.0, %v1561
        %v1563 = vpop.f32.mrf.mxu0
        %v1564 = vadd.f32 0.0, %v1563
        %1565 = vmatmul.bf16.gmra.mxu0 %v786
        %v1566 = vpop.f32.mrf.mxu0
        %v1567 = vadd.f32 0.0, %v1566
        %v1568 = vpop.f32.mrf.mxu0
        %v1569 = vadd.f32 0.0, %v1568
        %1570 = vmatmul.bf16.gmra.mxu0 %v787
        %v1571 = vpop.f32.mrf.mxu0
        %v1572 = vadd.f32 0.0, %v1571
        %v1573 = vpop.f32.mrf.mxu0
        %v1574 = vadd.f32 0.0, %v1573
        %1575 = vmatmul.bf16.gmra.mxu0 %v788
        %v1576 = vpop.f32.mrf.mxu0
        %v1577 = vadd.f32 0.0, %v1576
        %v1578 = vpop.f32.mrf.mxu0
        %v1579 = vadd.f32 0.0, %v1578
        %1580 = vmatmul.bf16.gmra.mxu0 %v789
        %v1581 = vpop.f32.mrf.mxu0
        %v1582 = vadd.f32 0.0, %v1581
        %v1583 = vpop.f32.mrf.mxu0
        %v1584 = vadd.f32 0.0, %v1583
        %1585 = vmatmul.bf16.gmra.mxu0 %v790
        %v1586 = vpop.f32.mrf.mxu0
        %v1587 = vadd.f32 0.0, %v1586
        %v1588 = vpop.f32.mrf.mxu0
        %v1589 = vadd.f32 0.0, %v1588
        %1590 = vmatmul.bf16.gmra.mxu0 %v791
        %v1591 = vpop.f32.mrf.mxu0
        %v1592 = vadd.f32 0.0, %v1591
        %v1593 = vpop.f32.mrf.mxu0
        %v1594 = vadd.f32 0.0, %v1593
        %1595 = vmatmul.bf16.gmra.mxu0 %v792
        %v1596 = vpop.f32.mrf.mxu0
        %v1597 = vadd.f32 0.0, %v1596
        %v1598 = vpop.f32.mrf.mxu0
        %v1599 = vadd.f32 0.0, %v1598
        %1600 = vmatmul.bf16.gmra.mxu0 %v793
        %v1601 = vpop.f32.mrf.mxu0
        %v1602 = vadd.f32 0.0, %v1601
        %v1603 = vpop.f32.mrf.mxu0
        %v1604 = vadd.f32 0.0, %v1603
        %1605 = vmatmul.bf16.gmra.mxu0 %v794
        %v1606 = vpop.f32.mrf.mxu0
        %v1607 = vadd.f32 0.0, %v1606
        %v1608 = vpop.f32.mrf.mxu0
        %v1609 = vadd.f32 0.0, %v1608
        %1610 = vmatmul.bf16.gmra.mxu0 %v795
        %v1611 = vpop.f32.mrf.mxu0
        %v1612 = vadd.f32 0.0, %v1611
        %v1613 = vpop.f32.mrf.mxu0
        %v1614 = vadd.f32 0.0, %v1613
        %1615 = vmatmul.bf16.gmra.mxu0 %v796
        %v1616 = vpop.f32.mrf.mxu0
        %v1617 = vadd.f32 0.0, %v1616
        %v1618 = vpop.f32.mrf.mxu0
        %v1619 = vadd.f32 0.0, %v1618
        %1620 = vmatmul.bf16.gmra.mxu0 %v797
        %v1621 = vpop.f32.mrf.mxu0
        %v1622 = vadd.f32 0.0, %v1621
        %v1623 = vpop.f32.mrf.mxu0
        %v1624 = vadd.f32 0.0, %v1623
        %1625 = vmatmul.bf16.gmra.mxu0 %v798
        %v1626 = vpop.f32.mrf.mxu0
        %v1627 = vadd.f32 0.0, %v1626
        %v1628 = vpop.f32.mrf.mxu0
        %v1629 = vadd.f32 0.0, %v1628
        %1630 = vmatmul.bf16.gmra.mxu0 %v799
        %v1631 = vpop.f32.mrf.mxu0
        %v1632 = vadd.f32 0.0, %v1631
        %v1633 = vpop.f32.mrf.mxu0
        %v1634 = vadd.f32 0.0, %v1633
        %1635 = vmatmul.bf16.gmra.mxu0 %v800
        %v1636 = vpop.f32.mrf.mxu0
        %v1637 = vadd.f32 0.0, %v1636
        %v1638 = vpop.f32.mrf.mxu0
        %v1639 = vadd.f32 0.0, %v1638
        %1640 = vmatmul.bf16.gmra.mxu0 %v801
        %v1641 = vpop.f32.mrf.mxu0
        %v1642 = vadd.f32 0.0, %v1641
        %v1643 = vpop.f32.mrf.mxu0
        %v1644 = vadd.f32 0.0, %v1643
        %1645 = vmatmul.bf16.gmra.mxu0 %v802
        %v1646 = vpop.f32.mrf.mxu0
        %v1647 = vadd.f32 0.0, %v1646
        %v1648 = vpop.f32.mrf.mxu0
        %v1649 = vadd.f32 0.0, %v1648
        %1650 = vmatmul.bf16.gmra.mxu0 %v803
        %v1651 = vpop.f32.mrf.mxu0
        %v1652 = vadd.f32 0.0, %v1651
        %v1653 = vpop.f32.mrf.mxu0
        %v1654 = vadd.f32 0.0, %v1653
        %1655 = vmatmul.bf16.gmra.mxu0 %v804
        %v1656 = vpop.f32.mrf.mxu0
        %v1657 = vadd.f32 0.0, %v1656
        %v1658 = vpop.f32.mrf.mxu0
        %v1659 = vadd.f32 0.0, %v1658
        %1660 = vmatmul.bf16.gmra.mxu0 %v805
        %v1661 = vpop.f32.mrf.mxu0
        %v1662 = vadd.f32 0.0, %v1661
        %v1663 = vpop.f32.mrf.mxu0
        %v1664 = vadd.f32 0.0, %v1663
        %1665 = vmatmul.bf16.gmra.mxu0 %v806
        %v1666 = vpop.f32.mrf.mxu0
        %v1667 = vadd.f32 0.0, %v1666
        %v1668 = vpop.f32.mrf.mxu0
        %v1669 = vadd.f32 0.0, %v1668
        %1670 = vmatmul.bf16.gmra.mxu0 %v807
        %v1671 = vpop.f32.mrf.mxu0
        %v1672 = vadd.f32 0.0, %v1671
        %v1673 = vpop.f32.mrf.mxu0
        %v1674 = vadd.f32 0.0, %v1673
        %1675 = vdwg.mxu0
        %v1676 = vld [vmem:[#allocation2] sm:$0xff]
        %v1677 = vld [vmem:[#allocation2 + $0x8] sm:$0xff]
        %v1678 = vld [vmem:[#allocation2 + $0x10] sm:$0xff]
        %v1679 = vld [vmem:[#allocation2 + $0x18] sm:$0xff]
        %v1680 = vld [vmem:[#allocation2 + $0x20] sm:$0xff]
        %v1681 = vld [vmem:[#allocation2 + $0x28] sm:$0xff]
        %v1682 = vld [vmem:[#allocation2 + $0x30] sm:$0xff]
        %v1683 = vld [vmem:[#allocation2 + $0x38] sm:$0xff]
        %v1684 = vld [vmem:[#allocation2 + $0x40] sm:$0xff]
        %v1685 = vld [vmem:[#allocation2 + $0x48] sm:$0xff]
        %v1686 = vld [vmem:[#allocation2 + $0x50] sm:$0xff]
        %v1687 = vld [vmem:[#allocation2 + $0x58] sm:$0xff]
        %v1688 = vld [vmem:[#allocation2 + $0x60] sm:$0xff]
        %v1689 = vld [vmem:[#allocation2 + $0x68] sm:$0xff]
        %v1690 = vld [vmem:[#allocation2 + $0x70] sm:$0xff]
        %v1691 = vld [vmem:[#allocation2 + $0x78] sm:$0xff]
        %v1692 = vld [vmem:[#allocation2 + $0x80] sm:$0xff]
        %v1693 = vld [vmem:[#allocation2 + $0x88] sm:$0xff]
        %v1694 = vld [vmem:[#allocation2 + $0x90] sm:$0xff]
        %v1695 = vld [vmem:[#allocation2 + $0x98] sm:$0xff]
        %v1696 = vld [vmem:[#allocation2 + $0xa0] sm:$0xff]
        %v1697 = vld [vmem:[#allocation2 + $0xa8] sm:$0xff]
        %v1698 = vld [vmem:[#allocation2 + $0xb0] sm:$0xff]
        %v1699 = vld [vmem:[#allocation2 + $0xb8] sm:$0xff]
        %v1700 = vld [vmem:[#allocation2 + $0xc0] sm:$0xff]
        %v1701 = vld [vmem:[#allocation2 + $0xc8] sm:$0xff]
        %v1702 = vld [vmem:[#allocation2 + $0xd0] sm:$0xff]
        %v1703 = vld [vmem:[#allocation2 + $0xd8] sm:$0xff]
        %v1704 = vld [vmem:[#allocation2 + $0xe0] sm:$0xff]
        %v1705 = vld [vmem:[#allocation2 + $0xe8] sm:$0xff]
        %v1706 = vld [vmem:[#allocation2 + $0xf0] sm:$0xff]
        %v1707 = vld [vmem:[#allocation2 + $0xf8] sm:$0xff]
        %v1708 = vld [vmem:[#allocation2 + $0x100] sm:$0xff]
        %v1709 = vld [vmem:[#allocation2 + $0x108] sm:$0xff]
        %v1710 = vld [vmem:[#allocation2 + $0x110] sm:$0xff]
        %v1711 = vld [vmem:[#allocation2 + $0x118] sm:$0xff]
        %v1712 = vld [vmem:[#allocation2 + $0x120] sm:$0xff]
        %v1713 = vld [vmem:[#allocation2 + $0x128] sm:$0xff]
        %v1714 = vld [vmem:[#allocation2 + $0x130] sm:$0xff]
        %v1715 = vld [vmem:[#allocation2 + $0x138] sm:$0xff]
        %v1716 = vld [vmem:[#allocation2 + $0x140] sm:$0xff]
        %v1717 = vld [vmem:[#allocation2 + $0x148] sm:$0xff]
        %v1718 = vld [vmem:[#allocation2 + $0x150] sm:$0xff]
        %v1719 = vld [vmem:[#allocation2 + $0x158] sm:$0xff]
        %v1720 = vld [vmem:[#allocation2 + $0x160] sm:$0xff]
        %v1721 = vld [vmem:[#allocation2 + $0x168] sm:$0xff]
        %v1722 = vld [vmem:[#allocation2 + $0x170] sm:$0xff]
        %v1723 = vld [vmem:[#allocation2 + $0x178] sm:$0xff]
        %v1724 = vld [vmem:[#allocation2 + $0x180] sm:$0xff]
        %v1725 = vld [vmem:[#allocation2 + $0x188] sm:$0xff]
        %v1726 = vld [vmem:[#allocation2 + $0x190] sm:$0xff]
        %v1727 = vld [vmem:[#allocation2 + $0x198] sm:$0xff]
        %v1728 = vld [vmem:[#allocation2 + $0x1a0] sm:$0xff]
        %v1729 = vld [vmem:[#allocation2 + $0x1a8] sm:$0xff]
        %v1730 = vld [vmem:[#allocation2 + $0x1b0] sm:$0xff]
        %v1731 = vld [vmem:[#allocation2 + $0x1b8] sm:$0xff]
        %v1732 = vld [vmem:[#allocation2 + $0x1c0] sm:$0xff]
        %v1733 = vld [vmem:[#allocation2 + $0x1c8] sm:$0xff]
        %v1734 = vld [vmem:[#allocation2 + $0x1d0] sm:$0xff]
        %v1735 = vld [vmem:[#allocation2 + $0x1d8] sm:$0xff]
        %v1736 = vld [vmem:[#allocation2 + $0x1e0] sm:$0xff]
        %v1737 = vld [vmem:[#allocation2 + $0x1e8] sm:$0xff]
        %v1738 = vld [vmem:[#allocation2 + $0x1f0] sm:$0xff]
        %v1739 = vld [vmem:[#allocation2 + $0x1f8] sm:$0xff]
        %v1740 = vmax.f32 %v1010, %v1179
        %v1741 = vmax.f32 %v1740, %v1348
        %v1742 = vmax.f32 %v1741, %v1517
        %1743 = vmax.xlane.f32.xlu0 %v1742
        %v1744 = vpop.xlane.xlu0 %1743
        %v1745 = vmax.f32 %v1012, %v1181
        %v1746 = vmax.f32 %v1745, %v1350
        %v1747 = vmax.f32 %v1746, %v1519
        %1748 = vmax.xlane.f32.xlu0 %v1747
        %v1749 = vpop.xlane.xlu0 %1748
        %v1750 = vmax.f32 %v1015, %v1184
        %v1751 = vmax.f32 %v1750, %v1353
        %v1752 = vmax.f32 %v1751, %v1522
        %1753 = vmax.xlane.f32.xlu0 %v1752
        %v1754 = vpop.xlane.xlu0 %1753
        %v1755 = vmax.f32 %v1017, %v1186
        %v1756 = vmax.f32 %v1755, %v1355
        %v1757 = vmax.f32 %v1756, %v1524
        %1758 = vmax.xlane.f32.xlu0 %v1757
        %v1759 = vpop.xlane.xlu0 %1758
        %v1760 = vmax.f32 %v1020, %v1189
        %v1761 = vmax.f32 %v1760, %v1358
        %v1762 = vmax.f32 %v1761, %v1527
        %1763 = vmax.xlane.f32.xlu0 %v1762
        %v1764 = vpop.xlane.xlu0 %1763
        %v1765 = vmax.f32 %v1022, %v1191
        %v1766 = vmax.f32 %v1765, %v1360
        %v1767 = vmax.f32 %v1766, %v1529
        %1768 = vmax.xlane.f32.xlu0 %v1767
        %v1769 = vpop.xlane.xlu0 %1768
        %v1770 = vmax.f32 %v1025, %v1194
        %v1771 = vmax.f32 %v1770, %v1363
        %v1772 = vmax.f32 %v1771, %v1532
        %1773 = vmax.xlane.f32.xlu0 %v1772
        %v1774 = vpop.xlane.xlu0 %1773
        %v1775 = vmax.f32 %v1027, %v1196
        %v1776 = vmax.f32 %v1775, %v1365
        %v1777 = vmax.f32 %v1776, %v1534
        %1778 = vmax.xlane.f32.xlu0 %v1777
        %v1779 = vpop.xlane.xlu0 %1778
        %v1780 = vmax.f32 %v1030, %v1199
        %v1781 = vmax.f32 %v1780, %v1368
        %v1782 = vmax.f32 %v1781, %v1537
        %1783 = vmax.xlane.f32.xlu0 %v1782
        %v1784 = vpop.xlane.xlu0 %1783
        %v1785 = vmax.f32 %v1032, %v1201
        %v1786 = vmax.f32 %v1785, %v1370
        %v1787 = vmax.f32 %v1786, %v1539
        %1788 = vmax.xlane.f32.xlu0 %v1787
        %v1789 = vpop.xlane.xlu0 %1788
        %v1790 = vmax.f32 %v1035, %v1204
        %v1791 = vmax.f32 %v1790, %v1373
        %v1792 = vmax.f32 %v1791, %v1542
        %1793 = vmax.xlane.f32.xlu0 %v1792
        %v1794 = vpop.xlane.xlu0 %1793
        %v1795 = vmax.f32 %v1037, %v1206
        %v1796 = vmax.f32 %v1795, %v1375
        %v1797 = vmax.f32 %v1796, %v1544
        %1798 = vmax.xlane.f32.xlu0 %v1797
        %v1799 = vpop.xlane.xlu0 %1798
        %v1800 = vmax.f32 %v1040, %v1209
        %v1801 = vmax.f32 %v1800, %v1378
        %v1802 = vmax.f32 %v1801, %v1547
        %1803 = vmax.xlane.f32.xlu0 %v1802
        %v1804 = vpop.xlane.xlu0 %1803
        %v1805 = vmax.f32 %v1042, %v1211
        %v1806 = vmax.f32 %v1805, %v1380
        %v1807 = vmax.f32 %v1806, %v1549
        %1808 = vmax.xlane.f32.xlu0 %v1807
        %v1809 = vpop.xlane.xlu0 %1808
        %v1810 = vmax.f32 %v1045, %v1214
        %v1811 = vmax.f32 %v1810, %v1383
        %v1812 = vmax.f32 %v1811, %v1552
        %1813 = vmax.xlane.f32.xlu0 %v1812
        %v1814 = vpop.xlane.xlu0 %1813
        %v1815 = vmax.f32 %v1047, %v1216
        %v1816 = vmax.f32 %v1815, %v1385
        %v1817 = vmax.f32 %v1816, %v1554
        %1818 = vmax.xlane.f32.xlu0 %v1817
        %v1819 = vpop.xlane.xlu0 %1818
        %v1820 = vmax.f32 %v1050, %v1219
        %v1821 = vmax.f32 %v1820, %v1388
        %v1822 = vmax.f32 %v1821, %v1557
        %1823 = vmax.xlane.f32.xlu0 %v1822
        %v1824 = vpop.xlane.xlu0 %1823
        %v1825 = vmax.f32 %v1052, %v1221
        %v1826 = vmax.f32 %v1825, %v1390
        %v1827 = vmax.f32 %v1826, %v1559
        %1828 = vmax.xlane.f32.xlu0 %v1827
        %v1829 = vpop.xlane.xlu0 %1828
        %v1830 = vmax.f32 %v1055, %v1224
        %v1831 = vmax.f32 %v1830, %v1393
        %v1832 = vmax.f32 %v1831, %v1562
        %1833 = vmax.xlane.f32.xlu0 %v1832
        %v1834 = vpop.xlane.xlu0 %1833
        %v1835 = vmax.f32 %v1057, %v1226
        %v1836 = vmax.f32 %v1835, %v1395
        %v1837 = vmax.f32 %v1836, %v1564
        %1838 = vmax.xlane.f32.xlu0 %v1837
        %v1839 = vpop.xlane.xlu0 %1838
        %v1840 = vmax.f32 %v1060, %v1229
        %v1841 = vmax.f32 %v1840, %v1398
        %v1842 = vmax.f32 %v1841, %v1567
        %1843 = vmax.xlane.f32.xlu0 %v1842
        %v1844 = vpop.xlane.xlu0 %1843
        %v1845 = vmax.f32 %v1062, %v1231
        %v1846 = vmax.f32 %v1845, %v1400
        %v1847 = vmax.f32 %v1846, %v1569
        %1848 = vmax.xlane.f32.xlu0 %v1847
        %v1849 = vpop.xlane.xlu0 %1848
        %v1850 = vmax.f32 %v1065, %v1234
        %v1851 = vmax.f32 %v1850, %v1403
        %v1852 = vmax.f32 %v1851, %v1572
        %1853 = vmax.xlane.f32.xlu0 %v1852
        %v1854 = vpop.xlane.xlu0 %1853
        %v1855 = vmax.f32 %v1067, %v1236
        %v1856 = vmax.f32 %v1855, %v1405
        %v1857 = vmax.f32 %v1856, %v1574
        %1858 = vmax.xlane.f32.xlu0 %v1857
        %v1859 = vpop.xlane.xlu0 %1858
        %v1860 = vmax.f32 %v1070, %v1239
        %v1861 = vmax.f32 %v1860, %v1408
        %v1862 = vmax.f32 %v1861, %v1577
        %1863 = vmax.xlane.f32.xlu0 %v1862
        %v1864 = vpop.xlane.xlu0 %1863
        %v1865 = vmax.f32 %v1072, %v1241
        %v1866 = vmax.f32 %v1865, %v1410
        %v1867 = vmax.f32 %v1866, %v1579
        %1868 = vmax.xlane.f32.xlu0 %v1867
        %v1869 = vpop.xlane.xlu0 %1868
        %v1870 = vmax.f32 %v1075, %v1244
        %v1871 = vmax.f32 %v1870, %v1413
        %v1872 = vmax.f32 %v1871, %v1582
        %1873 = vmax.xlane.f32.xlu0 %v1872
        %v1874 = vpop.xlane.xlu0 %1873
        %v1875 = vmax.f32 %v1077, %v1246
        %v1876 = vmax.f32 %v1875, %v1415
        %v1877 = vmax.f32 %v1876, %v1584
        %1878 = vmax.xlane.f32.xlu0 %v1877
        %v1879 = vpop.xlane.xlu0 %1878
        %v1880 = vmax.f32 %v1080, %v1249
        %v1881 = vmax.f32 %v1880, %v1418
        %v1882 = vmax.f32 %v1881, %v1587
        %1883 = vmax.xlane.f32.xlu0 %v1882
        %v1884 = vpop.xlane.xlu0 %1883
        %v1885 = vmax.f32 %v1082, %v1251
        %v1886 = vmax.f32 %v1885, %v1420
        %v1887 = vmax.f32 %v1886, %v1589
        %1888 = vmax.xlane.f32.xlu0 %v1887
        %v1889 = vpop.xlane.xlu0 %1888
        %v1890 = vmax.f32 %v1085, %v1254
        %v1891 = vmax.f32 %v1890, %v1423
        %v1892 = vmax.f32 %v1891, %v1592
        %1893 = vmax.xlane.f32.xlu0 %v1892
        %v1894 = vpop.xlane.xlu0 %1893
        %v1895 = vmax.f32 %v1087, %v1256
        %v1896 = vmax.f32 %v1895, %v1425
        %v1897 = vmax.f32 %v1896, %v1594
        %1898 = vmax.xlane.f32.xlu0 %v1897
        %v1899 = vpop.xlane.xlu0 %1898
        %v1900 = vmax.f32 %v1090, %v1259
        %v1901 = vmax.f32 %v1900, %v1428
        %v1902 = vmax.f32 %v1901, %v1597
        %1903 = vmax.xlane.f32.xlu0 %v1902
        %v1904 = vpop.xlane.xlu0 %1903
        %v1905 = vmax.f32 %v1092, %v1261
        %v1906 = vmax.f32 %v1905, %v1430
        %v1907 = vmax.f32 %v1906, %v1599
        %1908 = vmax.xlane.f32.xlu0 %v1907
        %v1909 = vpop.xlane.xlu0 %1908
        %v1910 = vmax.f32 %v1095, %v1264
        %v1911 = vmax.f32 %v1910, %v1433
        %v1912 = vmax.f32 %v1911, %v1602
        %1913 = vmax.xlane.f32.xlu0 %v1912
        %v1914 = vpop.xlane.xlu0 %1913
        %v1915 = vmax.f32 %v1097, %v1266
        %v1916 = vmax.f32 %v1915, %v1435
        %v1917 = vmax.f32 %v1916, %v1604
        %1918 = vmax.xlane.f32.xlu0 %v1917
        %v1919 = vpop.xlane.xlu0 %1918
        %v1920 = vmax.f32 %v1100, %v1269
        %v1921 = vmax.f32 %v1920, %v1438
        %v1922 = vmax.f32 %v1921, %v1607
        %1923 = vmax.xlane.f32.xlu0 %v1922
        %v1924 = vpop.xlane.xlu0 %1923
        %v1925 = vmax.f32 %v1102, %v1271
        %v1926 = vmax.f32 %v1925, %v1440
        %v1927 = vmax.f32 %v1926, %v1609
        %1928 = vmax.xlane.f32.xlu0 %v1927
        %v1929 = vpop.xlane.xlu0 %1928
        %v1930 = vmax.f32 %v1105, %v1274
        %v1931 = vmax.f32 %v1930, %v1443
        %v1932 = vmax.f32 %v1931, %v1612
        %1933 = vmax.xlane.f32.xlu0 %v1932
        %v1934 = vpop.xlane.xlu0 %1933
        %v1935 = vmax.f32 %v1107, %v1276
        %v1936 = vmax.f32 %v1935, %v1445
        %v1937 = vmax.f32 %v1936, %v1614
        %1938 = vmax.xlane.f32.xlu0 %v1937
        %v1939 = vpop.xlane.xlu0 %1938
        %v1940 = vmax.f32 %v1110, %v1279
        %v1941 = vmax.f32 %v1940, %v1448
        %v1942 = vmax.f32 %v1941, %v1617
        %1943 = vmax.xlane.f32.xlu0 %v1942
        %v1944 = vpop.xlane.xlu0 %1943
        %v1945 = vmax.f32 %v1112, %v1281
        %v1946 = vmax.f32 %v1945, %v1450
        %v1947 = vmax.f32 %v1946, %v1619
        %1948 = vmax.xlane.f32.xlu0 %v1947
        %v1949 = vpop.xlane.xlu0 %1948
        %v1950 = vmax.f32 %v1115, %v1284
        %v1951 = vmax.f32 %v1950, %v1453
        %v1952 = vmax.f32 %v1951, %v1622
        %1953 = vmax.xlane.f32.xlu0 %v1952
        %v1954 = vpop.xlane.xlu0 %1953
        %v1955 = vmax.f32 %v1117, %v1286
        %v1956 = vmax.f32 %v1955, %v1455
        %v1957 = vmax.f32 %v1956, %v1624
        %1958 = vmax.xlane.f32.xlu0 %v1957
        %v1959 = vpop.xlane.xlu0 %1958
        %v1960 = vmax.f32 %v1120, %v1289
        %v1961 = vmax.f32 %v1960, %v1458
        %v1962 = vmax.f32 %v1961, %v1627
        %1963 = vmax.xlane.f32.xlu0 %v1962
        %v1964 = vpop.xlane.xlu0 %1963
        %v1965 = vmax.f32 %v1122, %v1291
        %v1966 = vmax.f32 %v1965, %v1460
        %v1967 = vmax.f32 %v1966, %v1629
        %1968 = vmax.xlane.f32.xlu0 %v1967
        %v1969 = vpop.xlane.xlu0 %1968
        %v1970 = vmax.f32 %v1125, %v1294
        %v1971 = vmax.f32 %v1970, %v1463
        %v1972 = vmax.f32 %v1971, %v1632
        %1973 = vmax.xlane.f32.xlu0 %v1972
        %v1974 = vpop.xlane.xlu0 %1973
        %v1975 = vmax.f32 %v1127, %v1296
        %v1976 = vmax.f32 %v1975, %v1465
        %v1977 = vmax.f32 %v1976, %v1634
        %1978 = vmax.xlane.f32.xlu0 %v1977
        %v1979 = vpop.xlane.xlu0 %1978
        %v1980 = vmax.f32 %v1130, %v1299
        %v1981 = vmax.f32 %v1980, %v1468
        %v1982 = vmax.f32 %v1981, %v1637
        %1983 = vmax.xlane.f32.xlu0 %v1982
        %v1984 = vpop.xlane.xlu0 %1983
        %v1985 = vmax.f32 %v1132, %v1301
        %v1986 = vmax.f32 %v1985, %v1470
        %v1987 = vmax.f32 %v1986, %v1639
        %1988 = vmax.xlane.f32.xlu0 %v1987
        %v1989 = vpop.xlane.xlu0 %1988
        %v1990 = vmax.f32 %v1135, %v1304
        %v1991 = vmax.f32 %v1990, %v1473
        %v1992 = vmax.f32 %v1991, %v1642
        %1993 = vmax.xlane.f32.xlu0 %v1992
        %v1994 = vpop.xlane.xlu0 %1993
        %v1995 = vmax.f32 %v1137, %v1306
        %v1996 = vmax.f32 %v1995, %v1475
        %v1997 = vmax.f32 %v1996, %v1644
        %1998 = vmax.xlane.f32.xlu0 %v1997
        %v1999 = vpop.xlane.xlu0 %1998
        %v2000 = vmax.f32 %v1140, %v1309
        %v2001 = vmax.f32 %v2000, %v1478
        %v2002 = vmax.f32 %v2001, %v1647
        %2003 = vmax.xlane.f32.xlu0 %v2002
        %v2004 = vpop.xlane.xlu0 %2003
        %v2005 = vmax.f32 %v1142, %v1311
        %v2006 = vmax.f32 %v2005, %v1480
        %v2007 = vmax.f32 %v2006, %v1649
        %2008 = vmax.xlane.f32.xlu0 %v2007
        %v2009 = vpop.xlane.xlu0 %2008
        %v2010 = vmax.f32 %v1145, %v1314
        %v2011 = vmax.f32 %v2010, %v1483
        %v2012 = vmax.f32 %v2011, %v1652
        %2013 = vmax.xlane.f32.xlu0 %v2012
        %v2014 = vpop.xlane.xlu0 %2013
        %v2015 = vmax.f32 %v1147, %v1316
        %v2016 = vmax.f32 %v2015, %v1485
        %v2017 = vmax.f32 %v2016, %v1654
        %2018 = vmax.xlane.f32.xlu0 %v2017
        %v2019 = vpop.xlane.xlu0 %2018
        %v2020 = vmax.f32 %v1150, %v1319
        %v2021 = vmax.f32 %v2020, %v1488
        %v2022 = vmax.f32 %v2021, %v1657
        %2023 = vmax.xlane.f32.xlu0 %v2022
        %v2024 = vpop.xlane.xlu0 %2023
        %v2025 = vmax.f32 %v1152, %v1321
        %v2026 = vmax.f32 %v2025, %v1490
        %v2027 = vmax.f32 %v2026, %v1659
        %2028 = vmax.xlane.f32.xlu0 %v2027
        %v2029 = vpop.xlane.xlu0 %2028
        %v2030 = vmax.f32 %v1155, %v1324
        %v2031 = vmax.f32 %v2030, %v1493
        %v2032 = vmax.f32 %v2031, %v1662
        %2033 = vmax.xlane.f32.xlu0 %v2032
        %v2034 = vpop.xlane.xlu0 %2033
        %v2035 = vmax.f32 %v1157, %v1326
        %v2036 = vmax.f32 %v2035, %v1495
        %v2037 = vmax.f32 %v2036, %v1664
        %2038 = vmax.xlane.f32.xlu0 %v2037
        %v2039 = vpop.xlane.xlu0 %2038
        %v2040 = vmax.f32 %v1160, %v1329
        %v2041 = vmax.f32 %v2040, %v1498
        %v2042 = vmax.f32 %v2041, %v1667
        %2043 = vmax.xlane.f32.xlu0 %v2042
        %v2044 = vpop.xlane.xlu0 %2043
        %v2045 = vmax.f32 %v1162, %v1331
        %v2046 = vmax.f32 %v2045, %v1500
        %v2047 = vmax.f32 %v2046, %v1669
        %2048 = vmax.xlane.f32.xlu0 %v2047
        %v2049 = vpop.xlane.xlu0 %2048
        %v2050 = vmax.f32 %v1165, %v1334
        %v2051 = vmax.f32 %v2050, %v1503
        %v2052 = vmax.f32 %v2051, %v1672
        %2053 = vmax.xlane.f32.xlu0 %v2052
        %v2054 = vpop.xlane.xlu0 %2053
        %v2055 = vmax.f32 %v1167, %v1336
        %v2056 = vmax.f32 %v2055, %v1505
        %v2057 = vmax.f32 %v2056, %v1674
        %2058 = vmax.xlane.f32.xlu0 %v2057
        %v2059 = vpop.xlane.xlu0 %2058
        %v2060 = vmax.f32 %v1676, %v1744
        %v2061 = vmax.f32 %v1677, %v1749
        %v2062 = vmax.f32 %v1678, %v1754
        %v2063 = vmax.f32 %v1679, %v1759
        %v2064 = vmax.f32 %v1680, %v1764
        %v2065 = vmax.f32 %v1681, %v1769
        %v2066 = vmax.f32 %v1682, %v1774
        %v2067 = vmax.f32 %v1683, %v1779
        %v2068 = vmax.f32 %v1684, %v1784
        %v2069 = vmax.f32 %v1685, %v1789
        %v2070 = vmax.f32 %v1686, %v1794
        %v2071 = vmax.f32 %v1687, %v1799
        %v2072 = vmax.f32 %v1688, %v1804
        %v2073 = vmax.f32 %v1689, %v1809
        %v2074 = vmax.f32 %v1690, %v1814
        %v2075 = vmax.f32 %v1691, %v1819
        %v2076 = vmax.f32 %v1692, %v1824
        %v2077 = vmax.f32 %v1693, %v1829
        %v2078 = vmax.f32 %v1694, %v1834
        %v2079 = vmax.f32 %v1695, %v1839
        %v2080 = vmax.f32 %v1696, %v1844
        %v2081 = vmax.f32 %v1697, %v1849
        %v2082 = vmax.f32 %v1698, %v1854
        %v2083 = vmax.f32 %v1699, %v1859
        %v2084 = vmax.f32 %v1700, %v1864
        %v2085 = vmax.f32 %v1701, %v1869
        %v2086 = vmax.f32 %v1702, %v1874
        %v2087 = vmax.f32 %v1703, %v1879
        %v2088 = vmax.f32 %v1704, %v1884
        %v2089 = vmax.f32 %v1705, %v1889
        %v2090 = vmax.f32 %v1706, %v1894
        %v2091 = vmax.f32 %v1707, %v1899
        %v2092 = vmax.f32 %v1708, %v1904
        %v2093 = vmax.f32 %v1709, %v1909
        %v2094 = vmax.f32 %v1710, %v1914
        %v2095 = vmax.f32 %v1711, %v1919
        %v2096 = vmax.f32 %v1712, %v1924
        %v2097 = vmax.f32 %v1713, %v1929
        %v2098 = vmax.f32 %v1714, %v1934
        %v2099 = vmax.f32 %v1715, %v1939
        %v2100 = vmax.f32 %v1716, %v1944
        %v2101 = vmax.f32 %v1717, %v1949
        %v2102 = vmax.f32 %v1718, %v1954
        %v2103 = vmax.f32 %v1719, %v1959
        %v2104 = vmax.f32 %v1720, %v1964
        %v2105 = vmax.f32 %v1721, %v1969
        %v2106 = vmax.f32 %v1722, %v1974
        %v2107 = vmax.f32 %v1723, %v1979
        %v2108 = vmax.f32 %v1724, %v1984
        %v2109 = vmax.f32 %v1725, %v1989
        %v2110 = vmax.f32 %v1726, %v1994
        %v2111 = vmax.f32 %v1727, %v1999
        %v2112 = vmax.f32 %v1728, %v2004
        %v2113 = vmax.f32 %v1729, %v2009
        %v2114 = vmax.f32 %v1730, %v2014
        %v2115 = vmax.f32 %v1731, %v2019
        %v2116 = vmax.f32 %v1732, %v2024
        %v2117 = vmax.f32 %v1733, %v2029
        %v2118 = vmax.f32 %v1734, %v2034
        %v2119 = vmax.f32 %v1735, %v2039
        %v2120 = vmax.f32 %v1736, %v2044
        %v2121 = vmax.f32 %v1737, %v2049
        %v2122 = vmax.f32 %v1738, %v2054
        %v2123 = vmax.f32 %v1739, %v2059
        %v2124 = vsub.f32 %v1676, %v2060
        %v2125 = vsub.f32 %v1677, %v2061
        %v2126 = vsub.f32 %v1678, %v2062
        %v2127 = vsub.f32 %v1679, %v2063
        %v2128 = vsub.f32 %v1680, %v2064
        %v2129 = vsub.f32 %v1681, %v2065
        %v2130 = vsub.f32 %v1682, %v2066
        %v2131 = vsub.f32 %v1683, %v2067
        %v2132 = vsub.f32 %v1684, %v2068
        %v2133 = vsub.f32 %v1685, %v2069
        %v2134 = vsub.f32 %v1686, %v2070
        %v2135 = vsub.f32 %v1687, %v2071
        %v2136 = vsub.f32 %v1688, %v2072
        %v2137 = vsub.f32 %v1689, %v2073
        %v2138 = vsub.f32 %v1690, %v2074
        %v2139 = vsub.f32 %v1691, %v2075
        %v2140 = vsub.f32 %v1692, %v2076
        %v2141 = vsub.f32 %v1693, %v2077
        %v2142 = vsub.f32 %v1694, %v2078
        %v2143 = vsub.f32 %v1695, %v2079
        %v2144 = vsub.f32 %v1696, %v2080
        %v2145 = vsub.f32 %v1697, %v2081
        %v2146 = vsub.f32 %v1698, %v2082
        %v2147 = vsub.f32 %v1699, %v2083
        %v2148 = vsub.f32 %v1700, %v2084
        %v2149 = vsub.f32 %v1701, %v2085
        %v2150 = vsub.f32 %v1702, %v2086
        %v2151 = vsub.f32 %v1703, %v2087
        %v2152 = vsub.f32 %v1704, %v2088
        %v2153 = vsub.f32 %v1705, %v2089
        %v2154 = vsub.f32 %v1706, %v2090
        %v2155 = vsub.f32 %v1707, %v2091
        %v2156 = vsub.f32 %v1708, %v2092
        %v2157 = vsub.f32 %v1709, %v2093
        %v2158 = vsub.f32 %v1710, %v2094
        %v2159 = vsub.f32 %v1711, %v2095
        %v2160 = vsub.f32 %v1712, %v2096
        %v2161 = vsub.f32 %v1713, %v2097
        %v2162 = vsub.f32 %v1714, %v2098
        %v2163 = vsub.f32 %v1715, %v2099
        %v2164 = vsub.f32 %v1716, %v2100
        %v2165 = vsub.f32 %v1717, %v2101
        %v2166 = vsub.f32 %v1718, %v2102
        %v2167 = vsub.f32 %v1719, %v2103
        %v2168 = vsub.f32 %v1720, %v2104
        %v2169 = vsub.f32 %v1721, %v2105
        %v2170 = vsub.f32 %v1722, %v2106
        %v2171 = vsub.f32 %v1723, %v2107
        %v2172 = vsub.f32 %v1724, %v2108
        %v2173 = vsub.f32 %v1725, %v2109
        %v2174 = vsub.f32 %v1726, %v2110
        %v2175 = vsub.f32 %v1727, %v2111
        %v2176 = vsub.f32 %v1728, %v2112
        %v2177 = vsub.f32 %v1729, %v2113
        %v2178 = vsub.f32 %v1730, %v2114
        %v2179 = vsub.f32 %v1731, %v2115
        %v2180 = vsub.f32 %v1732, %v2116
        %v2181 = vsub.f32 %v1733, %v2117
        %v2182 = vsub.f32 %v1734, %v2118
        %v2183 = vsub.f32 %v1735, %v2119
        %v2184 = vsub.f32 %v1736, %v2120
        %v2185 = vsub.f32 %v1737, %v2121
        %v2186 = vsub.f32 %v1738, %v2122
        %v2187 = vsub.f32 %v1739, %v2123
        %v2188 = vmul.f32 %v2124, 1.442695
        %v2189 = vpow.pop %v2188
        %v2190 = vmul.f32 %v2125, 1.442695
        %v2191 = vpow.pop %v2190
        %v2192 = vmul.f32 %v2126, 1.442695
        %v2193 = vpow.pop %v2192
        %v2194 = vmul.f32 %v2127, 1.442695
        %v2195 = vpow.pop %v2194
        %v2196 = vmul.f32 %v2128, 1.442695
        %v2197 = vpow.pop %v2196
        %v2198 = vmul.f32 %v2129, 1.442695
        %v2199 = vpow.pop %v2198
        %v2200 = vmul.f32 %v2130, 1.442695
        %v2201 = vpow.pop %v2200
        %v2202 = vmul.f32 %v2131, 1.442695
        %v2203 = vpow.pop %v2202
        %v2204 = vmul.f32 %v2132, 1.442695
        %v2205 = vpow.pop %v2204
        %v2206 = vmul.f32 %v2133, 1.442695
        %v2207 = vpow.pop %v2206
        %v2208 = vmul.f32 %v2134, 1.442695
        %v2209 = vpow.pop %v2208
        %v2210 = vmul.f32 %v2135, 1.442695
        %v2211 = vpow.pop %v2210
        %v2212 = vmul.f32 %v2136, 1.442695
        %v2213 = vpow.pop %v2212
        %v2214 = vmul.f32 %v2137, 1.442695
        %v2215 = vpow.pop %v2214
        %v2216 = vmul.f32 %v2138, 1.442695
        %v2217 = vpow.pop %v2216
        %v2218 = vmul.f32 %v2139, 1.442695
        %v2219 = vpow.pop %v2218
        %v2220 = vmul.f32 %v2140, 1.442695
        %v2221 = vpow.pop %v2220
        %v2222 = vmul.f32 %v2141, 1.442695
        %v2223 = vpow.pop %v2222
        %v2224 = vmul.f32 %v2142, 1.442695
        %v2225 = vpow.pop %v2224
        %v2226 = vmul.f32 %v2143, 1.442695
        %v2227 = vpow.pop %v2226
        %v2228 = vmul.f32 %v2144, 1.442695
        %v2229 = vpow.pop %v2228
        %v2230 = vmul.f32 %v2145, 1.442695
        %v2231 = vpow.pop %v2230
        %v2232 = vmul.f32 %v2146, 1.442695
        %v2233 = vpow.pop %v2232
        %v2234 = vmul.f32 %v2147, 1.442695
        %v2235 = vpow.pop %v2234
        %v2236 = vmul.f32 %v2148, 1.442695
        %v2237 = vpow.pop %v2236
        %v2238 = vmul.f32 %v2149, 1.442695
        %v2239 = vpow.pop %v2238
        %v2240 = vmul.f32 %v2150, 1.442695
        %v2241 = vpow.pop %v2240
        %v2242 = vmul.f32 %v2151, 1.442695
        %v2243 = vpow.pop %v2242
        %v2244 = vmul.f32 %v2152, 1.442695
        %v2245 = vpow.pop %v2244
        %v2246 = vmul.f32 %v2153, 1.442695
        %v2247 = vpow.pop %v2246
        %v2248 = vmul.f32 %v2154, 1.442695
        %v2249 = vpow.pop %v2248
        %v2250 = vmul.f32 %v2155, 1.442695
        %v2251 = vpow.pop %v2250
        %v2252 = vmul.f32 %v2156, 1.442695
        %v2253 = vpow.pop %v2252
        %v2254 = vmul.f32 %v2157, 1.442695
        %v2255 = vpow.pop %v2254
        %v2256 = vmul.f32 %v2158, 1.442695
        %v2257 = vpow.pop %v2256
        %v2258 = vmul.f32 %v2159, 1.442695
        %v2259 = vpow.pop %v2258
        %v2260 = vmul.f32 %v2160, 1.442695
        %v2261 = vpow.pop %v2260
        %v2262 = vmul.f32 %v2161, 1.442695
        %v2263 = vpow.pop %v2262
        %v2264 = vmul.f32 %v2162, 1.442695
        %v2265 = vpow.pop %v2264
        %v2266 = vmul.f32 %v2163, 1.442695
        %v2267 = vpow.pop %v2266
        %v2268 = vmul.f32 %v2164, 1.442695
        %v2269 = vpow.pop %v2268
        %v2270 = vmul.f32 %v2165, 1.442695
        %v2271 = vpow.pop %v2270
        %v2272 = vmul.f32 %v2166, 1.442695
        %v2273 = vpow.pop %v2272
        %v2274 = vmul.f32 %v2167, 1.442695
        %v2275 = vpow.pop %v2274
        %v2276 = vmul.f32 %v2168, 1.442695
        %v2277 = vpow.pop %v2276
        %v2278 = vmul.f32 %v2169, 1.442695
        %v2279 = vpow.pop %v2278
        %v2280 = vmul.f32 %v2170, 1.442695
        %v2281 = vpow.pop %v2280
        %v2282 = vmul.f32 %v2171, 1.442695
        %v2283 = vpow.pop %v2282
        %v2284 = vmul.f32 %v2172, 1.442695
        %v2285 = vpow.pop %v2284
        %v2286 = vmul.f32 %v2173, 1.442695
        %v2287 = vpow.pop %v2286
        %v2288 = vmul.f32 %v2174, 1.442695
        %v2289 = vpow.pop %v2288
        %v2290 = vmul.f32 %v2175, 1.442695
        %v2291 = vpow.pop %v2290
        %v2292 = vmul.f32 %v2176, 1.442695
        %v2293 = vpow.pop %v2292
        %v2294 = vmul.f32 %v2177, 1.442695
        %v2295 = vpow.pop %v2294
        %v2296 = vmul.f32 %v2178, 1.442695
        %v2297 = vpow.pop %v2296
        %v2298 = vmul.f32 %v2179, 1.442695
        %v2299 = vpow.pop %v2298
        %v2300 = vmul.f32 %v2180, 1.442695
        %v2301 = vpow.pop %v2300
        %v2302 = vmul.f32 %v2181, 1.442695
        %v2303 = vpow.pop %v2302
        %v2304 = vmul.f32 %v2182, 1.442695
        %v2305 = vpow.pop %v2304
        %v2306 = vmul.f32 %v2183, 1.442695
        %v2307 = vpow.pop %v2306
        %v2308 = vmul.f32 %v2184, 1.442695
        %v2309 = vpow.pop %v2308
        %v2310 = vmul.f32 %v2185, 1.442695
        %v2311 = vpow.pop %v2310
        %v2312 = vmul.f32 %v2186, 1.442695
        %v2313 = vpow.pop %v2312
        %v2314 = vmul.f32 %v2187, 1.442695
        %v2315 = vpow.pop %v2314
        %2317 = vset.pattern.permute.xlu0 0
        %2318 = vperm.xlu0 %2317, %v2060
        %v2319 = vpop.permute.xlu0 %2318
        %2322 = vset.pattern.permute.xlu0 0
        %2323 = vperm.xlu0 %2322, %v2061
        %v2324 = vpop.permute.xlu0 %2323
        %2327 = vset.pattern.permute.xlu0 0
        %2328 = vperm.xlu0 %2327, %v2062
        %v2329 = vpop.permute.xlu0 %2328
        %2332 = vset.pattern.permute.xlu0 0
        %2333 = vperm.xlu0 %2332, %v2063
        %v2334 = vpop.permute.xlu0 %2333
        %2337 = vset.pattern.permute.xlu0 0
        %2338 = vperm.xlu0 %2337, %v2064
        %v2339 = vpop.permute.xlu0 %2338
        %2342 = vset.pattern.permute.xlu0 0
        %2343 = vperm.xlu0 %2342, %v2065
        %v2344 = vpop.permute.xlu0 %2343
        %2347 = vset.pattern.permute.xlu0 0
        %2348 = vperm.xlu0 %2347, %v2066
        %v2349 = vpop.permute.xlu0 %2348
        %2352 = vset.pattern.permute.xlu0 0
        %2353 = vperm.xlu0 %2352, %v2067
        %v2354 = vpop.permute.xlu0 %2353
        %2357 = vset.pattern.permute.xlu0 0
        %2358 = vperm.xlu0 %2357, %v2068
        %v2359 = vpop.permute.xlu0 %2358
        %2362 = vset.pattern.permute.xlu0 0
        %2363 = vperm.xlu0 %2362, %v2069
        %v2364 = vpop.permute.xlu0 %2363
        %2367 = vset.pattern.permute.xlu0 0
        %2368 = vperm.xlu0 %2367, %v2070
        %v2369 = vpop.permute.xlu0 %2368
        %2372 = vset.pattern.permute.xlu0 0
        %2373 = vperm.xlu0 %2372, %v2071
        %v2374 = vpop.permute.xlu0 %2373
        %2377 = vset.pattern.permute.xlu0 0
        %2378 = vperm.xlu0 %2377, %v2072
        %v2379 = vpop.permute.xlu0 %2378
        %2382 = vset.pattern.permute.xlu0 0
        %2383 = vperm.xlu0 %2382, %v2073
        %v2384 = vpop.permute.xlu0 %2383
        %2387 = vset.pattern.permute.xlu0 0
        %2388 = vperm.xlu0 %2387, %v2074
        %v2389 = vpop.permute.xlu0 %2388
        %2392 = vset.pattern.permute.xlu0 0
        %2393 = vperm.xlu0 %2392, %v2075
        %v2394 = vpop.permute.xlu0 %2393
        %2397 = vset.pattern.permute.xlu0 0
        %2398 = vperm.xlu0 %2397, %v2076
        %v2399 = vpop.permute.xlu0 %2398
        %2402 = vset.pattern.permute.xlu0 0
        %2403 = vperm.xlu0 %2402, %v2077
        %v2404 = vpop.permute.xlu0 %2403
        %2407 = vset.pattern.permute.xlu0 0
        %2408 = vperm.xlu0 %2407, %v2078
        %v2409 = vpop.permute.xlu0 %2408
        %2412 = vset.pattern.permute.xlu0 0
        %2413 = vperm.xlu0 %2412, %v2079
        %v2414 = vpop.permute.xlu0 %2413
        %2417 = vset.pattern.permute.xlu0 0
        %2418 = vperm.xlu0 %2417, %v2080
        %v2419 = vpop.permute.xlu0 %2418
        %2422 = vset.pattern.permute.xlu0 0
        %2423 = vperm.xlu0 %2422, %v2081
        %v2424 = vpop.permute.xlu0 %2423
        %2427 = vset.pattern.permute.xlu0 0
        %2428 = vperm.xlu0 %2427, %v2082
        %v2429 = vpop.permute.xlu0 %2428
        %2432 = vset.pattern.permute.xlu0 0
        %2433 = vperm.xlu0 %2432, %v2083
        %v2434 = vpop.permute.xlu0 %2433
        %2437 = vset.pattern.permute.xlu0 0
        %2438 = vperm.xlu0 %2437, %v2084
        %v2439 = vpop.permute.xlu0 %2438
        %2442 = vset.pattern.permute.xlu0 0
        %2443 = vperm.xlu0 %2442, %v2085
        %v2444 = vpop.permute.xlu0 %2443
        %2447 = vset.pattern.permute.xlu0 0
        %2448 = vperm.xlu0 %2447, %v2086
        %v2449 = vpop.permute.xlu0 %2448
        %2452 = vset.pattern.permute.xlu0 0
        %2453 = vperm.xlu0 %2452, %v2087
        %v2454 = vpop.permute.xlu0 %2453
        %2457 = vset.pattern.permute.xlu0 0
        %2458 = vperm.xlu0 %2457, %v2088
        %v2459 = vpop.permute.xlu0 %2458
        %2462 = vset.pattern.permute.xlu0 0
        %2463 = vperm.xlu0 %2462, %v2089
        %v2464 = vpop.permute.xlu0 %2463
        %2467 = vset.pattern.permute.xlu0 0
        %2468 = vperm.xlu0 %2467, %v2090
        %v2469 = vpop.permute.xlu0 %2468
        %2472 = vset.pattern.permute.xlu0 0
        %2473 = vperm.xlu0 %2472, %v2091
        %v2474 = vpop.permute.xlu0 %2473
        %2477 = vset.pattern.permute.xlu0 0
        %2478 = vperm.xlu0 %2477, %v2092
        %v2479 = vpop.permute.xlu0 %2478
        %2482 = vset.pattern.permute.xlu0 0
        %2483 = vperm.xlu0 %2482, %v2093
        %v2484 = vpop.permute.xlu0 %2483
        %2487 = vset.pattern.permute.xlu0 0
        %2488 = vperm.xlu0 %2487, %v2094
        %v2489 = vpop.permute.xlu0 %2488
        %2492 = vset.pattern.permute.xlu0 0
        %2493 = vperm.xlu0 %2492, %v2095
        %v2494 = vpop.permute.xlu0 %2493
        %2497 = vset.pattern.permute.xlu0 0
        %2498 = vperm.xlu0 %2497, %v2096
        %v2499 = vpop.permute.xlu0 %2498
        %2502 = vset.pattern.permute.xlu0 0
        %2503 = vperm.xlu0 %2502, %v2097
        %v2504 = vpop.permute.xlu0 %2503
        %2507 = vset.pattern.permute.xlu0 0
        %2508 = vperm.xlu0 %2507, %v2098
        %v2509 = vpop.permute.xlu0 %2508
        %2512 = vset.pattern.permute.xlu0 0
        %2513 = vperm.xlu0 %2512, %v2099
        %v2514 = vpop.permute.xlu0 %2513
        %2517 = vset.pattern.permute.xlu0 0
        %2518 = vperm.xlu0 %2517, %v2100
        %v2519 = vpop.permute.xlu0 %2518
        %2522 = vset.pattern.permute.xlu0 0
        %2523 = vperm.xlu0 %2522, %v2101
        %v2524 = vpop.permute.xlu0 %2523
        %2527 = vset.pattern.permute.xlu0 0
        %2528 = vperm.xlu0 %2527, %v2102
        %v2529 = vpop.permute.xlu0 %2528
        %2532 = vset.pattern.permute.xlu0 0
        %2533 = vperm.xlu0 %2532, %v2103
        %v2534 = vpop.permute.xlu0 %2533
        %2537 = vset.pattern.permute.xlu0 0
        %2538 = vperm.xlu0 %2537, %v2104
        %v2539 = vpop.permute.xlu0 %2538
        %2542 = vset.pattern.permute.xlu0 0
        %2543 = vperm.xlu0 %2542, %v2105
        %v2544 = vpop.permute.xlu0 %2543
        %2547 = vset.pattern.permute.xlu0 0
        %2548 = vperm.xlu0 %2547, %v2106
        %v2549 = vpop.permute.xlu0 %2548
        %2552 = vset.pattern.permute.xlu0 0
        %2553 = vperm.xlu0 %2552, %v2107
        %v2554 = vpop.permute.xlu0 %2553
        %2557 = vset.pattern.permute.xlu0 0
        %2558 = vperm.xlu0 %2557, %v2108
        %v2559 = vpop.permute.xlu0 %2558
        %2562 = vset.pattern.permute.xlu0 0
        %2563 = vperm.xlu0 %2562, %v2109
        %v2564 = vpop.permute.xlu0 %2563
        %2567 = vset.pattern.permute.xlu0 0
        %2568 = vperm.xlu0 %2567, %v2110
        %v2569 = vpop.permute.xlu0 %2568
        %2572 = vset.pattern.permute.xlu0 0
        %2573 = vperm.xlu0 %2572, %v2111
        %v2574 = vpop.permute.xlu0 %2573
        %2577 = vset.pattern.permute.xlu0 0
        %2578 = vperm.xlu0 %2577, %v2112
        %v2579 = vpop.permute.xlu0 %2578
        %2582 = vset.pattern.permute.xlu0 0
        %2583 = vperm.xlu0 %2582, %v2113
        %v2584 = vpop.permute.xlu0 %2583
        %2587 = vset.pattern.permute.xlu0 0
        %2588 = vperm.xlu0 %2587, %v2114
        %v2589 = vpop.permute.xlu0 %2588
        %2592 = vset.pattern.permute.xlu0 0
        %2593 = vperm.xlu0 %2592, %v2115
        %v2594 = vpop.permute.xlu0 %2593
        %2597 = vset.pattern.permute.xlu0 0
        %2598 = vperm.xlu0 %2597, %v2116
        %v2599 = vpop.permute.xlu0 %2598
        %2602 = vset.pattern.permute.xlu0 0
        %2603 = vperm.xlu0 %2602, %v2117
        %v2604 = vpop.permute.xlu0 %2603
        %2607 = vset.pattern.permute.xlu0 0
        %2608 = vperm.xlu0 %2607, %v2118
        %v2609 = vpop.permute.xlu0 %2608
        %2612 = vset.pattern.permute.xlu0 0
        %2613 = vperm.xlu0 %2612, %v2119
        %v2614 = vpop.permute.xlu0 %2613
        %2617 = vset.pattern.permute.xlu0 0
        %2618 = vperm.xlu0 %2617, %v2120
        %v2619 = vpop.permute.xlu0 %2618
        %2622 = vset.pattern.permute.xlu0 0
        %2623 = vperm.xlu0 %2622, %v2121
        %v2624 = vpop.permute.xlu0 %2623
        %2627 = vset.pattern.permute.xlu0 0
        %2628 = vperm.xlu0 %2627, %v2122
        %v2629 = vpop.permute.xlu0 %2628
        %2632 = vset.pattern.permute.xlu0 0
        %2633 = vperm.xlu0 %2632, %v2123
        %v2634 = vpop.permute.xlu0 %2633
        %v2636 = vsub.f32 %v1010, %v2319
        %v2637 = vsub.f32 %v1179, %v2319
        %v2638 = vsub.f32 %v1348, %v2319
        %v2639 = vsub.f32 %v1517, %v2319
        %v2640 = vsub.f32 %v1012, %v2324
        %v2641 = vsub.f32 %v1181, %v2324
        %v2642 = vsub.f32 %v1350, %v2324
        %v2643 = vsub.f32 %v1519, %v2324
        %v2644 = vsub.f32 %v1015, %v2329
        %v2645 = vsub.f32 %v1184, %v2329
        %v2646 = vsub.f32 %v1353, %v2329
        %v2647 = vsub.f32 %v1522, %v2329
        %v2648 = vsub.f32 %v1017, %v2334
        %v2649 = vsub.f32 %v1186, %v2334
        %v2650 = vsub.f32 %v1355, %v2334
        %v2651 = vsub.f32 %v1524, %v2334
        %v2652 = vsub.f32 %v1020, %v2339
        %v2653 = vsub.f32 %v1189, %v2339
        %v2654 = vsub.f32 %v1358, %v2339
        %v2655 = vsub.f32 %v1527, %v2339
        %v2656 = vsub.f32 %v1022, %v2344
        %v2657 = vsub.f32 %v1191, %v2344
        %v2658 = vsub.f32 %v1360, %v2344
        %v2659 = vsub.f32 %v1529, %v2344
        %v2660 = vsub.f32 %v1025, %v2349
        %v2661 = vsub.f32 %v1194, %v2349
        %v2662 = vsub.f32 %v1363, %v2349
        %v2663 = vsub.f32 %v1532, %v2349
        %v2664 = vsub.f32 %v1027, %v2354
        %v2665 = vsub.f32 %v1196, %v2354
        %v2666 = vsub.f32 %v1365, %v2354
        %v2667 = vsub.f32 %v1534, %v2354
        %v2668 = vsub.f32 %v1030, %v2359
        %v2669 = vsub.f32 %v1199, %v2359
        %v2670 = vsub.f32 %v1368, %v2359
        %v2671 = vsub.f32 %v1537, %v2359
        %v2672 = vsub.f32 %v1032, %v2364
        %v2673 = vsub.f32 %v1201, %v2364
        %v2674 = vsub.f32 %v1370, %v2364
        %v2675 = vsub.f32 %v1539, %v2364
        %v2676 = vsub.f32 %v1035, %v2369
        %v2677 = vsub.f32 %v1204, %v2369
        %v2678 = vsub.f32 %v1373, %v2369
        %v2679 = vsub.f32 %v1542, %v2369
        %v2680 = vsub.f32 %v1037, %v2374
        %v2681 = vsub.f32 %v1206, %v2374
        %v2682 = vsub.f32 %v1375, %v2374
        %v2683 = vsub.f32 %v1544, %v2374
        %v2684 = vsub.f32 %v1040, %v2379
        %v2685 = vsub.f32 %v1209, %v2379
        %v2686 = vsub.f32 %v1378, %v2379
        %v2687 = vsub.f32 %v1547, %v2379
        %v2688 = vsub.f32 %v1042, %v2384
        %v2689 = vsub.f32 %v1211, %v2384
        %v2690 = vsub.f32 %v1380, %v2384
        %v2691 = vsub.f32 %v1549, %v2384
        %v2692 = vsub.f32 %v1045, %v2389
        %v2693 = vsub.f32 %v1214, %v2389
        %v2694 = vsub.f32 %v1383, %v2389
        %v2695 = vsub.f32 %v1552, %v2389
        %v2696 = vsub.f32 %v1047, %v2394
        %v2697 = vsub.f32 %v1216, %v2394
        %v2698 = vsub.f32 %v1385, %v2394
        %v2699 = vsub.f32 %v1554, %v2394
        %v2700 = vsub.f32 %v1050, %v2399
        %v2701 = vsub.f32 %v1219, %v2399
        %v2702 = vsub.f32 %v1388, %v2399
        %v2703 = vsub.f32 %v1557, %v2399
        %v2704 = vsub.f32 %v1052, %v2404
        %v2705 = vsub.f32 %v1221, %v2404
        %v2706 = vsub.f32 %v1390, %v2404
        %v2707 = vsub.f32 %v1559, %v2404
        %v2708 = vsub.f32 %v1055, %v2409
        %v2709 = vsub.f32 %v1224, %v2409
        %v2710 = vsub.f32 %v1393, %v2409
        %v2711 = vsub.f32 %v1562, %v2409
        %v2712 = vsub.f32 %v1057, %v2414
        %v2713 = vsub.f32 %v1226, %v2414
        %v2714 = vsub.f32 %v1395, %v2414
        %v2715 = vsub.f32 %v1564, %v2414
        %v2716 = vsub.f32 %v1060, %v2419
        %v2717 = vsub.f32 %v1229, %v2419
        %v2718 = vsub.f32 %v1398, %v2419
        %v2719 = vsub.f32 %v1567, %v2419
        %v2720 = vsub.f32 %v1062, %v2424
        %v2721 = vsub.f32 %v1231, %v2424
        %v2722 = vsub.f32 %v1400, %v2424
        %v2723 = vsub.f32 %v1569, %v2424
        %v2724 = vsub.f32 %v1065, %v2429
        %v2725 = vsub.f32 %v1234, %v2429
        %v2726 = vsub.f32 %v1403, %v2429
        %v2727 = vsub.f32 %v1572, %v2429
        %v2728 = vsub.f32 %v1067, %v2434
        %v2729 = vsub.f32 %v1236, %v2434
        %v2730 = vsub.f32 %v1405, %v2434
        %v2731 = vsub.f32 %v1574, %v2434
        %v2732 = vsub.f32 %v1070, %v2439
        %v2733 = vsub.f32 %v1239, %v2439
        %v2734 = vsub.f32 %v1408, %v2439
        %v2735 = vsub.f32 %v1577, %v2439
        %v2736 = vsub.f32 %v1072, %v2444
        %v2737 = vsub.f32 %v1241, %v2444
        %v2738 = vsub.f32 %v1410, %v2444
        %v2739 = vsub.f32 %v1579, %v2444
        %v2740 = vsub.f32 %v1075, %v2449
        %v2741 = vsub.f32 %v1244, %v2449
        %v2742 = vsub.f32 %v1413, %v2449
        %v2743 = vsub.f32 %v1582, %v2449
        %v2744 = vsub.f32 %v1077, %v2454
        %v2745 = vsub.f32 %v1246, %v2454
        %v2746 = vsub.f32 %v1415, %v2454
        %v2747 = vsub.f32 %v1584, %v2454
        %v2748 = vsub.f32 %v1080, %v2459
        %v2749 = vsub.f32 %v1249, %v2459
        %v2750 = vsub.f32 %v1418, %v2459
        %v2751 = vsub.f32 %v1587, %v2459
        %v2752 = vsub.f32 %v1082, %v2464
        %v2753 = vsub.f32 %v1251, %v2464
        %v2754 = vsub.f32 %v1420, %v2464
        %v2755 = vsub.f32 %v1589, %v2464
        %v2756 = vsub.f32 %v1085, %v2469
        %v2757 = vsub.f32 %v1254, %v2469
        %v2758 = vsub.f32 %v1423, %v2469
        %v2759 = vsub.f32 %v1592, %v2469
        %v2760 = vsub.f32 %v1087, %v2474
        %v2761 = vsub.f32 %v1256, %v2474
        %v2762 = vsub.f32 %v1425, %v2474
        %v2763 = vsub.f32 %v1594, %v2474
        %v2764 = vsub.f32 %v1090, %v2479
        %v2765 = vsub.f32 %v1259, %v2479
        %v2766 = vsub.f32 %v1428, %v2479
        %v2767 = vsub.f32 %v1597, %v2479
        %v2768 = vsub.f32 %v1092, %v2484
        %v2769 = vsub.f32 %v1261, %v2484
        %v2770 = vsub.f32 %v1430, %v2484
        %v2771 = vsub.f32 %v1599, %v2484
        %v2772 = vsub.f32 %v1095, %v2489
        %v2773 = vsub.f32 %v1264, %v2489
        %v2774 = vsub.f32 %v1433, %v2489
        %v2775 = vsub.f32 %v1602, %v2489
        %v2776 = vsub.f32 %v1097, %v2494
        %v2777 = vsub.f32 %v1266, %v2494
        %v2778 = vsub.f32 %v1435, %v2494
        %v2779 = vsub.f32 %v1604, %v2494
        %v2780 = vsub.f32 %v1100, %v2499
        %v2781 = vsub.f32 %v1269, %v2499
        %v2782 = vsub.f32 %v1438, %v2499
        %v2783 = vsub.f32 %v1607, %v2499
        %v2784 = vsub.f32 %v1102, %v2504
        %v2785 = vsub.f32 %v1271, %v2504
        %v2786 = vsub.f32 %v1440, %v2504
        %v2787 = vsub.f32 %v1609, %v2504
        %v2788 = vsub.f32 %v1105, %v2509
        %v2789 = vsub.f32 %v1274, %v2509
        %v2790 = vsub.f32 %v1443, %v2509
        %v2791 = vsub.f32 %v1612, %v2509
        %v2792 = vsub.f32 %v1107, %v2514
        %v2793 = vsub.f32 %v1276, %v2514
        %v2794 = vsub.f32 %v1445, %v2514
        %v2795 = vsub.f32 %v1614, %v2514
        %v2796 = vsub.f32 %v1110, %v2519
        %v2797 = vsub.f32 %v1279, %v2519
        %v2798 = vsub.f32 %v1448, %v2519
        %v2799 = vsub.f32 %v1617, %v2519
        %v2800 = vsub.f32 %v1112, %v2524
        %v2801 = vsub.f32 %v1281, %v2524
        %v2802 = vsub.f32 %v1450, %v2524
        %v2803 = vsub.f32 %v1619, %v2524
        %v2804 = vsub.f32 %v1115, %v2529
        %v2805 = vsub.f32 %v1284, %v2529
        %v2806 = vsub.f32 %v1453, %v2529
        %v2807 = vsub.f32 %v1622, %v2529
        %v2808 = vsub.f32 %v1117, %v2534
        %v2809 = vsub.f32 %v1286, %v2534
        %v2810 = vsub.f32 %v1455, %v2534
        %v2811 = vsub.f32 %v1624, %v2534
        %v2812 = vsub.f32 %v1120, %v2539
        %v2813 = vsub.f32 %v1289, %v2539
        %v2814 = vsub.f32 %v1458, %v2539
        %v2815 = vsub.f32 %v1627, %v2539
        %v2816 = vsub.f32 %v1122, %v2544
        %v2817 = vsub.f32 %v1291, %v2544
        %v2818 = vsub.f32 %v1460, %v2544
        %v2819 = vsub.f32 %v1629, %v2544
        %v2820 = vsub.f32 %v1125, %v2549
        %v2821 = vsub.f32 %v1294, %v2549
        %v2822 = vsub.f32 %v1463, %v2549
        %v2823 = vsub.f32 %v1632, %v2549
        %v2824 = vsub.f32 %v1127, %v2554
        %v2825 = vsub.f32 %v1296, %v2554
        %v2826 = vsub.f32 %v1465, %v2554
        %v2827 = vsub.f32 %v1634, %v2554
        %v2828 = vsub.f32 %v1130, %v2559
        %v2829 = vsub.f32 %v1299, %v2559
        %v2830 = vsub.f32 %v1468, %v2559
        %v2831 = vsub.f32 %v1637, %v2559
        %v2832 = vsub.f32 %v1132, %v2564
        %v2833 = vsub.f32 %v1301, %v2564
        %v2834 = vsub.f32 %v1470, %v2564
        %v2835 = vsub.f32 %v1639, %v2564
        %v2836 = vsub.f32 %v1135, %v2569
        %v2837 = vsub.f32 %v1304, %v2569
        %v2838 = vsub.f32 %v1473, %v2569
        %v2839 = vsub.f32 %v1642, %v2569
        %v2840 = vsub.f32 %v1137, %v2574
        %v2841 = vsub.f32 %v1306, %v2574
        %v2842 = vsub.f32 %v1475, %v2574
        %v2843 = vsub.f32 %v1644, %v2574
        %v2844 = vsub.f32 %v1140, %v2579
        %v2845 = vsub.f32 %v1309, %v2579
        %v2846 = vsub.f32 %v1478, %v2579
        %v2847 = vsub.f32 %v1647, %v2579
        %v2848 = vsub.f32 %v1142, %v2584
        %v2849 = vsub.f32 %v1311, %v2584
        %v2850 = vsub.f32 %v1480, %v2584
        %v2851 = vsub.f32 %v1649, %v2584
        %v2852 = vsub.f32 %v1145, %v2589
        %v2853 = vsub.f32 %v1314, %v2589
        %v2854 = vsub.f32 %v1483, %v2589
        %v2855 = vsub.f32 %v1652, %v2589
        %v2856 = vsub.f32 %v1147, %v2594
        %v2857 = vsub.f32 %v1316, %v2594
        %v2858 = vsub.f32 %v1485, %v2594
        %v2859 = vsub.f32 %v1654, %v2594
        %v2860 = vsub.f32 %v1150, %v2599
        %v2861 = vsub.f32 %v1319, %v2599
        %v2862 = vsub.f32 %v1488, %v2599
        %v2863 = vsub.f32 %v1657, %v2599
        %v2864 = vsub.f32 %v1152, %v2604
        %v2865 = vsub.f32 %v1321, %v2604
        %v2866 = vsub.f32 %v1490, %v2604
        %v2867 = vsub.f32 %v1659, %v2604
        %v2868 = vsub.f32 %v1155, %v2609
        %v2869 = vsub.f32 %v1324, %v2609
        %v2870 = vsub.f32 %v1493, %v2609
        %v2871 = vsub.f32 %v1662, %v2609
        %v2872 = vsub.f32 %v1157, %v2614
        %v2873 = vsub.f32 %v1326, %v2614
        %v2874 = vsub.f32 %v1495, %v2614
        %v2875 = vsub.f32 %v1664, %v2614
        %v2876 = vsub.f32 %v1160, %v2619
        %v2877 = vsub.f32 %v1329, %v2619
        %v2878 = vsub.f32 %v1498, %v2619
        %v2879 = vsub.f32 %v1667, %v2619
        %v2880 = vsub.f32 %v1162, %v2624
        %v2881 = vsub.f32 %v1331, %v2624
        %v2882 = vsub.f32 %v1500, %v2624
        %v2883 = vsub.f32 %v1669, %v2624
        %v2884 = vsub.f32 %v1165, %v2629
        %v2885 = vsub.f32 %v1334, %v2629
        %v2886 = vsub.f32 %v1503, %v2629
        %v2887 = vsub.f32 %v1672, %v2629
        %v2888 = vsub.f32 %v1167, %v2634
        %v2889 = vsub.f32 %v1336, %v2634
        %v2890 = vsub.f32 %v1505, %v2634
        %v2891 = vsub.f32 %v1674, %v2634
        %v2892 = vmul.f32 %v2636, 1.442695
        %v2893 = vpow.pop %v2892
        %v2894 = vmul.f32 %v2637, 1.442695
        %v2895 = vpow.pop %v2894
        %v2896 = vmul.f32 %v2638, 1.442695
        %v2897 = vpow.pop %v2896
        %v2898 = vmul.f32 %v2639, 1.442695
        %v2899 = vpow.pop %v2898
        %v2900 = vmul.f32 %v2640, 1.442695
        %v2901 = vpow.pop %v2900
        %v2902 = vmul.f32 %v2641, 1.442695
        %v2903 = vpow.pop %v2902
        %v2904 = vmul.f32 %v2642, 1.442695
        %v2905 = vpow.pop %v2904
        %v2906 = vmul.f32 %v2643, 1.442695
        %v2907 = vpow.pop %v2906
        %v2908 = vmul.f32 %v2644, 1.442695
        %v2909 = vpow.pop %v2908
        %v2910 = vmul.f32 %v2645, 1.442695
        %v2911 = vpow.pop %v2910
        %v2912 = vmul.f32 %v2646, 1.442695
        %v2913 = vpow.pop %v2912
        %v2914 = vmul.f32 %v2647, 1.442695
        %v2915 = vpow.pop %v2914
        %v2916 = vmul.f32 %v2648, 1.442695
        %v2917 = vpow.pop %v2916
        %v2918 = vmul.f32 %v2649, 1.442695
        %v2919 = vpow.pop %v2918
        %v2920 = vmul.f32 %v2650, 1.442695
        %v2921 = vpow.pop %v2920
        %v2922 = vmul.f32 %v2651, 1.442695
        %v2923 = vpow.pop %v2922
        %v2924 = vmul.f32 %v2652, 1.442695
        %v2925 = vpow.pop %v2924
        %v2926 = vmul.f32 %v2653, 1.442695
        %v2927 = vpow.pop %v2926
        %v2928 = vmul.f32 %v2654, 1.442695
        %v2929 = vpow.pop %v2928
        %v2930 = vmul.f32 %v2655, 1.442695
        %v2931 = vpow.pop %v2930
        %v2932 = vmul.f32 %v2656, 1.442695
        %v2933 = vpow.pop %v2932
        %v2934 = vmul.f32 %v2657, 1.442695
        %v2935 = vpow.pop %v2934
        %v2936 = vmul.f32 %v2658, 1.442695
        %v2937 = vpow.pop %v2936
        %v2938 = vmul.f32 %v2659, 1.442695
        %v2939 = vpow.pop %v2938
        %v2940 = vmul.f32 %v2660, 1.442695
        %v2941 = vpow.pop %v2940
        %v2942 = vmul.f32 %v2661, 1.442695
        %v2943 = vpow.pop %v2942
        %v2944 = vmul.f32 %v2662, 1.442695
        %v2945 = vpow.pop %v2944
        %v2946 = vmul.f32 %v2663, 1.442695
        %v2947 = vpow.pop %v2946
        %v2948 = vmul.f32 %v2664, 1.442695
        %v2949 = vpow.pop %v2948
        %v2950 = vmul.f32 %v2665, 1.442695
        %v2951 = vpow.pop %v2950
        %v2952 = vmul.f32 %v2666, 1.442695
        %v2953 = vpow.pop %v2952
        %v2954 = vmul.f32 %v2667, 1.442695
        %v2955 = vpow.pop %v2954
        %v2956 = vmul.f32 %v2668, 1.442695
        %v2957 = vpow.pop %v2956
        %v2958 = vmul.f32 %v2669, 1.442695
        %v2959 = vpow.pop %v2958
        %v2960 = vmul.f32 %v2670, 1.442695
        %v2961 = vpow.pop %v2960
        %v2962 = vmul.f32 %v2671, 1.442695
        %v2963 = vpow.pop %v2962
        %v2964 = vmul.f32 %v2672, 1.442695
        %v2965 = vpow.pop %v2964
        %v2966 = vmul.f32 %v2673, 1.442695
        %v2967 = vpow.pop %v2966
        %v2968 = vmul.f32 %v2674, 1.442695
        %v2969 = vpow.pop %v2968
        %v2970 = vmul.f32 %v2675, 1.442695
        %v2971 = vpow.pop %v2970
        %v2972 = vmul.f32 %v2676, 1.442695
        %v2973 = vpow.pop %v2972
        %v2974 = vmul.f32 %v2677, 1.442695
        %v2975 = vpow.pop %v2974
        %v2976 = vmul.f32 %v2678, 1.442695
        %v2977 = vpow.pop %v2976
        %v2978 = vmul.f32 %v2679, 1.442695
        %v2979 = vpow.pop %v2978
        %v2980 = vmul.f32 %v2680, 1.442695
        %v2981 = vpow.pop %v2980
        %v2982 = vmul.f32 %v2681, 1.442695
        %v2983 = vpow.pop %v2982
        %v2984 = vmul.f32 %v2682, 1.442695
        %v2985 = vpow.pop %v2984
        %v2986 = vmul.f32 %v2683, 1.442695
        %v2987 = vpow.pop %v2986
        %v2988 = vmul.f32 %v2684, 1.442695
        %v2989 = vpow.pop %v2988
        %v2990 = vmul.f32 %v2685, 1.442695
        %v2991 = vpow.pop %v2990
        %v2992 = vmul.f32 %v2686, 1.442695
        %v2993 = vpow.pop %v2992
        %v2994 = vmul.f32 %v2687, 1.442695
        %v2995 = vpow.pop %v2994
        %v2996 = vmul.f32 %v2688, 1.442695
        %v2997 = vpow.pop %v2996
        %v2998 = vmul.f32 %v2689, 1.442695
        %v2999 = vpow.pop %v2998
        %v3000 = vmul.f32 %v2690, 1.442695
        %v3001 = vpow.pop %v3000
        %v3002 = vmul.f32 %v2691, 1.442695
        %v3003 = vpow.pop %v3002
        %v3004 = vmul.f32 %v2692, 1.442695
        %v3005 = vpow.pop %v3004
        %v3006 = vmul.f32 %v2693, 1.442695
        %v3007 = vpow.pop %v3006
        %v3008 = vmul.f32 %v2694, 1.442695
        %v3009 = vpow.pop %v3008
        %v3010 = vmul.f32 %v2695, 1.442695
        %v3011 = vpow.pop %v3010
        %v3012 = vmul.f32 %v2696, 1.442695
        %v3013 = vpow.pop %v3012
        %v3014 = vmul.f32 %v2697, 1.442695
        %v3015 = vpow.pop %v3014
        %v3016 = vmul.f32 %v2698, 1.442695
        %v3017 = vpow.pop %v3016
        %v3018 = vmul.f32 %v2699, 1.442695
        %v3019 = vpow.pop %v3018
        %v3020 = vmul.f32 %v2700, 1.442695
        %v3021 = vpow.pop %v3020
        %v3022 = vmul.f32 %v2701, 1.442695
        %v3023 = vpow.pop %v3022
        %v3024 = vmul.f32 %v2702, 1.442695
        %v3025 = vpow.pop %v3024
        %v3026 = vmul.f32 %v2703, 1.442695
        %v3027 = vpow.pop %v3026
        %v3028 = vmul.f32 %v2704, 1.442695
        %v3029 = vpow.pop %v3028
        %v3030 = vmul.f32 %v2705, 1.442695
        %v3031 = vpow.pop %v3030
        %v3032 = vmul.f32 %v2706, 1.442695
        %v3033 = vpow.pop %v3032
        %v3034 = vmul.f32 %v2707, 1.442695
        %v3035 = vpow.pop %v3034
        %v3036 = vmul.f32 %v2708, 1.442695
        %v3037 = vpow.pop %v3036
        %v3038 = vmul.f32 %v2709, 1.442695
        %v3039 = vpow.pop %v3038
        %v3040 = vmul.f32 %v2710, 1.442695
        %v3041 = vpow.pop %v3040
        %v3042 = vmul.f32 %v2711, 1.442695
        %v3043 = vpow.pop %v3042
        %v3044 = vmul.f32 %v2712, 1.442695
        %v3045 = vpow.pop %v3044
        %v3046 = vmul.f32 %v2713, 1.442695
        %v3047 = vpow.pop %v3046
        %v3048 = vmul.f32 %v2714, 1.442695
        %v3049 = vpow.pop %v3048
        %v3050 = vmul.f32 %v2715, 1.442695
        %v3051 = vpow.pop %v3050
        %v3052 = vmul.f32 %v2716, 1.442695
        %v3053 = vpow.pop %v3052
        %v3054 = vmul.f32 %v2717, 1.442695
        %v3055 = vpow.pop %v3054
        %v3056 = vmul.f32 %v2718, 1.442695
        %v3057 = vpow.pop %v3056
        %v3058 = vmul.f32 %v2719, 1.442695
        %v3059 = vpow.pop %v3058
        %v3060 = vmul.f32 %v2720, 1.442695
        %v3061 = vpow.pop %v3060
        %v3062 = vmul.f32 %v2721, 1.442695
        %v3063 = vpow.pop %v3062
        %v3064 = vmul.f32 %v2722, 1.442695
        %v3065 = vpow.pop %v3064
        %v3066 = vmul.f32 %v2723, 1.442695
        %v3067 = vpow.pop %v3066
        %v3068 = vmul.f32 %v2724, 1.442695
        %v3069 = vpow.pop %v3068
        %v3070 = vmul.f32 %v2725, 1.442695
        %v3071 = vpow.pop %v3070
        %v3072 = vmul.f32 %v2726, 1.442695
        %v3073 = vpow.pop %v3072
        %v3074 = vmul.f32 %v2727, 1.442695
        %v3075 = vpow.pop %v3074
        %v3076 = vmul.f32 %v2728, 1.442695
        %v3077 = vpow.pop %v3076
        %v3078 = vmul.f32 %v2729, 1.442695
        %v3079 = vpow.pop %v3078
        %v3080 = vmul.f32 %v2730, 1.442695
        %v3081 = vpow.pop %v3080
        %v3082 = vmul.f32 %v2731, 1.442695
        %v3083 = vpow.pop %v3082
        %v3084 = vmul.f32 %v2732, 1.442695
        %v3085 = vpow.pop %v3084
        %v3086 = vmul.f32 %v2733, 1.442695
        %v3087 = vpow.pop %v3086
        %v3088 = vmul.f32 %v2734, 1.442695
        %v3089 = vpow.pop %v3088
        %v3090 = vmul.f32 %v2735, 1.442695
        %v3091 = vpow.pop %v3090
        %v3092 = vmul.f32 %v2736, 1.442695
        %v3093 = vpow.pop %v3092
        %v3094 = vmul.f32 %v2737, 1.442695
        %v3095 = vpow.pop %v3094
        %v3096 = vmul.f32 %v2738, 1.442695
        %v3097 = vpow.pop %v3096
        %v3098 = vmul.f32 %v2739, 1.442695
        %v3099 = vpow.pop %v3098
        %v3100 = vmul.f32 %v2740, 1.442695
        %v3101 = vpow.pop %v3100
        %v3102 = vmul.f32 %v2741, 1.442695
        %v3103 = vpow.pop %v3102
        %v3104 = vmul.f32 %v2742, 1.442695
        %v3105 = vpow.pop %v3104
        %v3106 = vmul.f32 %v2743, 1.442695
        %v3107 = vpow.pop %v3106
        %v3108 = vmul.f32 %v2744, 1.442695
        %v3109 = vpow.pop %v3108
        %v3110 = vmul.f32 %v2745, 1.442695
        %v3111 = vpow.pop %v3110
        %v3112 = vmul.f32 %v2746, 1.442695
        %v3113 = vpow.pop %v3112
        %v3114 = vmul.f32 %v2747, 1.442695
        %v3115 = vpow.pop %v3114
        %v3116 = vmul.f32 %v2748, 1.442695
        %v3117 = vpow.pop %v3116
        %v3118 = vmul.f32 %v2749, 1.442695
        %v3119 = vpow.pop %v3118
        %v3120 = vmul.f32 %v2750, 1.442695
        %v3121 = vpow.pop %v3120
        %v3122 = vmul.f32 %v2751, 1.442695
        %v3123 = vpow.pop %v3122
        %v3124 = vmul.f32 %v2752, 1.442695
        %v3125 = vpow.pop %v3124
        %v3126 = vmul.f32 %v2753, 1.442695
        %v3127 = vpow.pop %v3126
        %v3128 = vmul.f32 %v2754, 1.442695
        %v3129 = vpow.pop %v3128
        %v3130 = vmul.f32 %v2755, 1.442695
        %v3131 = vpow.pop %v3130
        %v3132 = vmul.f32 %v2756, 1.442695
        %v3133 = vpow.pop %v3132
        %v3134 = vmul.f32 %v2757, 1.442695
        %v3135 = vpow.pop %v3134
        %v3136 = vmul.f32 %v2758, 1.442695
        %v3137 = vpow.pop %v3136
        %v3138 = vmul.f32 %v2759, 1.442695
        %v3139 = vpow.pop %v3138
        %v3140 = vmul.f32 %v2760, 1.442695
        %v3141 = vpow.pop %v3140
        %v3142 = vmul.f32 %v2761, 1.442695
        %v3143 = vpow.pop %v3142
        %v3144 = vmul.f32 %v2762, 1.442695
        %v3145 = vpow.pop %v3144
        %v3146 = vmul.f32 %v2763, 1.442695
        %v3147 = vpow.pop %v3146
        %v3148 = vmul.f32 %v2764, 1.442695
        %v3149 = vpow.pop %v3148
        %v3150 = vmul.f32 %v2765, 1.442695
        %v3151 = vpow.pop %v3150
        %v3152 = vmul.f32 %v2766, 1.442695
        %v3153 = vpow.pop %v3152
        %v3154 = vmul.f32 %v2767, 1.442695
        %v3155 = vpow.pop %v3154
        %v3156 = vmul.f32 %v2768, 1.442695
        %v3157 = vpow.pop %v3156
        %v3158 = vmul.f32 %v2769, 1.442695
        %v3159 = vpow.pop %v3158
        %v3160 = vmul.f32 %v2770, 1.442695
        %v3161 = vpow.pop %v3160
        %v3162 = vmul.f32 %v2771, 1.442695
        %v3163 = vpow.pop %v3162
        %v3164 = vmul.f32 %v2772, 1.442695
        %v3165 = vpow.pop %v3164
        %v3166 = vmul.f32 %v2773, 1.442695
        %v3167 = vpow.pop %v3166
        %v3168 = vmul.f32 %v2774, 1.442695
        %v3169 = vpow.pop %v3168
        %v3170 = vmul.f32 %v2775, 1.442695
        %v3171 = vpow.pop %v3170
        %v3172 = vmul.f32 %v2776, 1.442695
        %v3173 = vpow.pop %v3172
        %v3174 = vmul.f32 %v2777, 1.442695
        %v3175 = vpow.pop %v3174
        %v3176 = vmul.f32 %v2778, 1.442695
        %v3177 = vpow.pop %v3176
        %v3178 = vmul.f32 %v2779, 1.442695
        %v3179 = vpow.pop %v3178
        %v3180 = vmul.f32 %v2780, 1.442695
        %v3181 = vpow.pop %v3180
        %v3182 = vmul.f32 %v2781, 1.442695
        %v3183 = vpow.pop %v3182
        %v3184 = vmul.f32 %v2782, 1.442695
        %v3185 = vpow.pop %v3184
        %v3186 = vmul.f32 %v2783, 1.442695
        %v3187 = vpow.pop %v3186
        %v3188 = vmul.f32 %v2784, 1.442695
        %v3189 = vpow.pop %v3188
        %v3190 = vmul.f32 %v2785, 1.442695
        %v3191 = vpow.pop %v3190
        %v3192 = vmul.f32 %v2786, 1.442695
        %v3193 = vpow.pop %v3192
        %v3194 = vmul.f32 %v2787, 1.442695
        %v3195 = vpow.pop %v3194
        %v3196 = vmul.f32 %v2788, 1.442695
        %v3197 = vpow.pop %v3196
        %v3198 = vmul.f32 %v2789, 1.442695
        %v3199 = vpow.pop %v3198
        %v3200 = vmul.f32 %v2790, 1.442695
        %v3201 = vpow.pop %v3200
        %v3202 = vmul.f32 %v2791, 1.442695
        %v3203 = vpow.pop %v3202
        %v3204 = vmul.f32 %v2792, 1.442695
        %v3205 = vpow.pop %v3204
        %v3206 = vmul.f32 %v2793, 1.442695
        %v3207 = vpow.pop %v3206
        %v3208 = vmul.f32 %v2794, 1.442695
        %v3209 = vpow.pop %v3208
        %v3210 = vmul.f32 %v2795, 1.442695
        %v3211 = vpow.pop %v3210
        %v3212 = vmul.f32 %v2796, 1.442695
        %v3213 = vpow.pop %v3212
        %v3214 = vmul.f32 %v2797, 1.442695
        %v3215 = vpow.pop %v3214
        %v3216 = vmul.f32 %v2798, 1.442695
        %v3217 = vpow.pop %v3216
        %v3218 = vmul.f32 %v2799, 1.442695
        %v3219 = vpow.pop %v3218
        %v3220 = vmul.f32 %v2800, 1.442695
        %v3221 = vpow.pop %v3220
        %v3222 = vmul.f32 %v2801, 1.442695
        %v3223 = vpow.pop %v3222
        %v3224 = vmul.f32 %v2802, 1.442695
        %v3225 = vpow.pop %v3224
        %v3226 = vmul.f32 %v2803, 1.442695
        %v3227 = vpow.pop %v3226
        %v3228 = vmul.f32 %v2804, 1.442695
        %v3229 = vpow.pop %v3228
        %v3230 = vmul.f32 %v2805, 1.442695
        %v3231 = vpow.pop %v3230
        %v3232 = vmul.f32 %v2806, 1.442695
        %v3233 = vpow.pop %v3232
        %v3234 = vmul.f32 %v2807, 1.442695
        %v3235 = vpow.pop %v3234
        %v3236 = vmul.f32 %v2808, 1.442695
        %v3237 = vpow.pop %v3236
        %v3238 = vmul.f32 %v2809, 1.442695
        %v3239 = vpow.pop %v3238
        %v3240 = vmul.f32 %v2810, 1.442695
        %v3241 = vpow.pop %v3240
        %v3242 = vmul.f32 %v2811, 1.442695
        %v3243 = vpow.pop %v3242
        %v3244 = vmul.f32 %v2812, 1.442695
        %v3245 = vpow.pop %v3244
        %v3246 = vmul.f32 %v2813, 1.442695
        %v3247 = vpow.pop %v3246
        %v3248 = vmul.f32 %v2814, 1.442695
        %v3249 = vpow.pop %v3248
        %v3250 = vmul.f32 %v2815, 1.442695
        %v3251 = vpow.pop %v3250
        %v3252 = vmul.f32 %v2816, 1.442695
        %v3253 = vpow.pop %v3252
        %v3254 = vmul.f32 %v2817, 1.442695
        %v3255 = vpow.pop %v3254
        %v3256 = vmul.f32 %v2818, 1.442695
        %v3257 = vpow.pop %v3256
        %v3258 = vmul.f32 %v2819, 1.442695
        %v3259 = vpow.pop %v3258
        %v3260 = vmul.f32 %v2820, 1.442695
        %v3261 = vpow.pop %v3260
        %v3262 = vmul.f32 %v2821, 1.442695
        %v3263 = vpow.pop %v3262
        %v3264 = vmul.f32 %v2822, 1.442695
        %v3265 = vpow.pop %v3264
        %v3266 = vmul.f32 %v2823, 1.442695
        %v3267 = vpow.pop %v3266
        %v3268 = vmul.f32 %v2824, 1.442695
        %v3269 = vpow.pop %v3268
        %v3270 = vmul.f32 %v2825, 1.442695
        %v3271 = vpow.pop %v3270
        %v3272 = vmul.f32 %v2826, 1.442695
        %v3273 = vpow.pop %v3272
        %v3274 = vmul.f32 %v2827, 1.442695
        %v3275 = vpow.pop %v3274
        %v3276 = vmul.f32 %v2828, 1.442695
        %v3277 = vpow.pop %v3276
        %v3278 = vmul.f32 %v2829, 1.442695
        %v3279 = vpow.pop %v3278
        %v3280 = vmul.f32 %v2830, 1.442695
        %v3281 = vpow.pop %v3280
        %v3282 = vmul.f32 %v2831, 1.442695
        %v3283 = vpow.pop %v3282
        %v3284 = vmul.f32 %v2832, 1.442695
        %v3285 = vpow.pop %v3284
        %v3286 = vmul.f32 %v2833, 1.442695
        %v3287 = vpow.pop %v3286
        %v3288 = vmul.f32 %v2834, 1.442695
        %v3289 = vpow.pop %v3288
        %v3290 = vmul.f32 %v2835, 1.442695
        %v3291 = vpow.pop %v3290
        %v3292 = vmul.f32 %v2836, 1.442695
        %v3293 = vpow.pop %v3292
        %v3294 = vmul.f32 %v2837, 1.442695
        %v3295 = vpow.pop %v3294
        %v3296 = vmul.f32 %v2838, 1.442695
        %v3297 = vpow.pop %v3296
        %v3298 = vmul.f32 %v2839, 1.442695
        %v3299 = vpow.pop %v3298
        %v3300 = vmul.f32 %v2840, 1.442695
        %v3301 = vpow.pop %v3300
        %v3302 = vmul.f32 %v2841, 1.442695
        %v3303 = vpow.pop %v3302
        %v3304 = vmul.f32 %v2842, 1.442695
        %v3305 = vpow.pop %v3304
        %v3306 = vmul.f32 %v2843, 1.442695
        %v3307 = vpow.pop %v3306
        %v3308 = vmul.f32 %v2844, 1.442695
        %v3309 = vpow.pop %v3308
        %v3310 = vmul.f32 %v2845, 1.442695
        %v3311 = vpow.pop %v3310
        %v3312 = vmul.f32 %v2846, 1.442695
        %v3313 = vpow.pop %v3312
        %v3314 = vmul.f32 %v2847, 1.442695
        %v3315 = vpow.pop %v3314
        %v3316 = vmul.f32 %v2848, 1.442695
        %v3317 = vpow.pop %v3316
        %v3318 = vmul.f32 %v2849, 1.442695
        %v3319 = vpow.pop %v3318
        %v3320 = vmul.f32 %v2850, 1.442695
        %v3321 = vpow.pop %v3320
        %v3322 = vmul.f32 %v2851, 1.442695
        %v3323 = vpow.pop %v3322
        %v3324 = vmul.f32 %v2852, 1.442695
        %v3325 = vpow.pop %v3324
        %v3326 = vmul.f32 %v2853, 1.442695
        %v3327 = vpow.pop %v3326
        %v3328 = vmul.f32 %v2854, 1.442695
        %v3329 = vpow.pop %v3328
        %v3330 = vmul.f32 %v2855, 1.442695
        %v3331 = vpow.pop %v3330
        %v3332 = vmul.f32 %v2856, 1.442695
        %v3333 = vpow.pop %v3332
        %v3334 = vmul.f32 %v2857, 1.442695
        %v3335 = vpow.pop %v3334
        %v3336 = vmul.f32 %v2858, 1.442695
        %v3337 = vpow.pop %v3336
        %v3338 = vmul.f32 %v2859, 1.442695
        %v3339 = vpow.pop %v3338
        %v3340 = vmul.f32 %v2860, 1.442695
        %v3341 = vpow.pop %v3340
        %v3342 = vmul.f32 %v2861, 1.442695
        %v3343 = vpow.pop %v3342
        %v3344 = vmul.f32 %v2862, 1.442695
        %v3345 = vpow.pop %v3344
        %v3346 = vmul.f32 %v2863, 1.442695
        %v3347 = vpow.pop %v3346
        %v3348 = vmul.f32 %v2864, 1.442695
        %v3349 = vpow.pop %v3348
        %v3350 = vmul.f32 %v2865, 1.442695
        %v3351 = vpow.pop %v3350
        %v3352 = vmul.f32 %v2866, 1.442695
        %v3353 = vpow.pop %v3352
        %v3354 = vmul.f32 %v2867, 1.442695
        %v3355 = vpow.pop %v3354
        %v3356 = vmul.f32 %v2868, 1.442695
        %v3357 = vpow.pop %v3356
        %v3358 = vmul.f32 %v2869, 1.442695
        %v3359 = vpow.pop %v3358
        %v3360 = vmul.f32 %v2870, 1.442695
        %v3361 = vpow.pop %v3360
        %v3362 = vmul.f32 %v2871, 1.442695
        %v3363 = vpow.pop %v3362
        %v3364 = vmul.f32 %v2872, 1.442695
        %v3365 = vpow.pop %v3364
        %v3366 = vmul.f32 %v2873, 1.442695
        %v3367 = vpow.pop %v3366
        %v3368 = vmul.f32 %v2874, 1.442695
        %v3369 = vpow.pop %v3368
        %v3370 = vmul.f32 %v2875, 1.442695
        %v3371 = vpow.pop %v3370
        %v3372 = vmul.f32 %v2876, 1.442695
        %v3373 = vpow.pop %v3372
        %v3374 = vmul.f32 %v2877, 1.442695
        %v3375 = vpow.pop %v3374
        %v3376 = vmul.f32 %v2878, 1.442695
        %v3377 = vpow.pop %v3376
        %v3378 = vmul.f32 %v2879, 1.442695
        %v3379 = vpow.pop %v3378
        %v3380 = vmul.f32 %v2880, 1.442695
        %v3381 = vpow.pop %v3380
        %v3382 = vmul.f32 %v2881, 1.442695
        %v3383 = vpow.pop %v3382
        %v3384 = vmul.f32 %v2882, 1.442695
        %v3385 = vpow.pop %v3384
        %v3386 = vmul.f32 %v2883, 1.442695
        %v3387 = vpow.pop %v3386
        %v3388 = vmul.f32 %v2884, 1.442695
        %v3389 = vpow.pop %v3388
        %v3390 = vmul.f32 %v2885, 1.442695
        %v3391 = vpow.pop %v3390
        %v3392 = vmul.f32 %v2886, 1.442695
        %v3393 = vpow.pop %v3392
        %v3394 = vmul.f32 %v2887, 1.442695
        %v3395 = vpow.pop %v3394
        %v3396 = vmul.f32 %v2888, 1.442695
        %v3397 = vpow.pop %v3396
        %v3398 = vmul.f32 %v2889, 1.442695
        %v3399 = vpow.pop %v3398
        %v3400 = vmul.f32 %v2890, 1.442695
        %v3401 = vpow.pop %v3400
        %v3402 = vmul.f32 %v2891, 1.442695
        %v3403 = vpow.pop %v3402
        %v3404 = vld [vmem:[#allocation3] sm:$0xff]
        %v3405 = vld [vmem:[#allocation3 + $0x8] sm:$0xff]
        %v3406 = vld [vmem:[#allocation3 + $0x10] sm:$0xff]
        %v3407 = vld [vmem:[#allocation3 + $0x18] sm:$0xff]
        %v3408 = vld [vmem:[#allocation3 + $0x20] sm:$0xff]
        %v3409 = vld [vmem:[#allocation3 + $0x28] sm:$0xff]
        %v3410 = vld [vmem:[#allocation3 + $0x30] sm:$0xff]
        %v3411 = vld [vmem:[#allocation3 + $0x38] sm:$0xff]
        %v3412 = vld [vmem:[#allocation3 + $0x40] sm:$0xff]
        %v3413 = vld [vmem:[#allocation3 + $0x48] sm:$0xff]
        %v3414 = vld [vmem:[#allocation3 + $0x50] sm:$0xff]
        %v3415 = vld [vmem:[#allocation3 + $0x58] sm:$0xff]
        %v3416 = vld [vmem:[#allocation3 + $0x60] sm:$0xff]
        %v3417 = vld [vmem:[#allocation3 + $0x68] sm:$0xff]
        %v3418 = vld [vmem:[#allocation3 + $0x70] sm:$0xff]
        %v3419 = vld [vmem:[#allocation3 + $0x78] sm:$0xff]
        %v3420 = vld [vmem:[#allocation3 + $0x80] sm:$0xff]
        %v3421 = vld [vmem:[#allocation3 + $0x88] sm:$0xff]
        %v3422 = vld [vmem:[#allocation3 + $0x90] sm:$0xff]
        %v3423 = vld [vmem:[#allocation3 + $0x98] sm:$0xff]
        %v3424 = vld [vmem:[#allocation3 + $0xa0] sm:$0xff]
        %v3425 = vld [vmem:[#allocation3 + $0xa8] sm:$0xff]
        %v3426 = vld [vmem:[#allocation3 + $0xb0] sm:$0xff]
        %v3427 = vld [vmem:[#allocation3 + $0xb8] sm:$0xff]
        %v3428 = vld [vmem:[#allocation3 + $0xc0] sm:$0xff]
        %v3429 = vld [vmem:[#allocation3 + $0xc8] sm:$0xff]
        %v3430 = vld [vmem:[#allocation3 + $0xd0] sm:$0xff]
        %v3431 = vld [vmem:[#allocation3 + $0xd8] sm:$0xff]
        %v3432 = vld [vmem:[#allocation3 + $0xe0] sm:$0xff]
        %v3433 = vld [vmem:[#allocation3 + $0xe8] sm:$0xff]
        %v3434 = vld [vmem:[#allocation3 + $0xf0] sm:$0xff]
        %v3435 = vld [vmem:[#allocation3 + $0xf8] sm:$0xff]
        %v3436 = vld [vmem:[#allocation3 + $0x100] sm:$0xff]
        %v3437 = vld [vmem:[#allocation3 + $0x108] sm:$0xff]
        %v3438 = vld [vmem:[#allocation3 + $0x110] sm:$0xff]
        %v3439 = vld [vmem:[#allocation3 + $0x118] sm:$0xff]
        %v3440 = vld [vmem:[#allocation3 + $0x120] sm:$0xff]
        %v3441 = vld [vmem:[#allocation3 + $0x128] sm:$0xff]
        %v3442 = vld [vmem:[#allocation3 + $0x130] sm:$0xff]
        %v3443 = vld [vmem:[#allocation3 + $0x138] sm:$0xff]
        %v3444 = vld [vmem:[#allocation3 + $0x140] sm:$0xff]
        %v3445 = vld [vmem:[#allocation3 + $0x148] sm:$0xff]
        %v3446 = vld [vmem:[#allocation3 + $0x150] sm:$0xff]
        %v3447 = vld [vmem:[#allocation3 + $0x158] sm:$0xff]
        %v3448 = vld [vmem:[#allocation3 + $0x160] sm:$0xff]
        %v3449 = vld [vmem:[#allocation3 + $0x168] sm:$0xff]
        %v3450 = vld [vmem:[#allocation3 + $0x170] sm:$0xff]
        %v3451 = vld [vmem:[#allocation3 + $0x178] sm:$0xff]
        %v3452 = vld [vmem:[#allocation3 + $0x180] sm:$0xff]
        %v3453 = vld [vmem:[#allocation3 + $0x188] sm:$0xff]
        %v3454 = vld [vmem:[#allocation3 + $0x190] sm:$0xff]
        %v3455 = vld [vmem:[#allocation3 + $0x198] sm:$0xff]
        %v3456 = vld [vmem:[#allocation3 + $0x1a0] sm:$0xff]
        %v3457 = vld [vmem:[#allocation3 + $0x1a8] sm:$0xff]
        %v3458 = vld [vmem:[#allocation3 + $0x1b0] sm:$0xff]
        %v3459 = vld [vmem:[#allocation3 + $0x1b8] sm:$0xff]
        %v3460 = vld [vmem:[#allocation3 + $0x1c0] sm:$0xff]
        %v3461 = vld [vmem:[#allocation3 + $0x1c8] sm:$0xff]
        %v3462 = vld [vmem:[#allocation3 + $0x1d0] sm:$0xff]
        %v3463 = vld [vmem:[#allocation3 + $0x1d8] sm:$0xff]
        %v3464 = vld [vmem:[#allocation3 + $0x1e0] sm:$0xff]
        %v3465 = vld [vmem:[#allocation3 + $0x1e8] sm:$0xff]
        %v3466 = vld [vmem:[#allocation3 + $0x1f0] sm:$0xff]
        %v3467 = vld [vmem:[#allocation3 + $0x1f8] sm:$0xff]
        %v3468 = vmul.f32 %v2189, %v3404
        %v3469 = vmul.f32 %v2191, %v3405
        %v3470 = vmul.f32 %v2193, %v3406
        %v3471 = vmul.f32 %v2195, %v3407
        %v3472 = vmul.f32 %v2197, %v3408
        %v3473 = vmul.f32 %v2199, %v3409
        %v3474 = vmul.f32 %v2201, %v3410
        %v3475 = vmul.f32 %v2203, %v3411
        %v3476 = vmul.f32 %v2205, %v3412
        %v3477 = vmul.f32 %v2207, %v3413
        %v3478 = vmul.f32 %v2209, %v3414
        %v3479 = vmul.f32 %v2211, %v3415
        %v3480 = vmul.f32 %v2213, %v3416
        %v3481 = vmul.f32 %v2215, %v3417
        %v3482 = vmul.f32 %v2217, %v3418
        %v3483 = vmul.f32 %v2219, %v3419
        %v3484 = vmul.f32 %v2221, %v3420
        %v3485 = vmul.f32 %v2223, %v3421
        %v3486 = vmul.f32 %v2225, %v3422
        %v3487 = vmul.f32 %v2227, %v3423
        %v3488 = vmul.f32 %v2229, %v3424
        %v3489 = vmul.f32 %v2231, %v3425
        %v3490 = vmul.f32 %v2233, %v3426
        %v3491 = vmul.f32 %v2235, %v3427
        %v3492 = vmul.f32 %v2237, %v3428
        %v3493 = vmul.f32 %v2239, %v3429
        %v3494 = vmul.f32 %v2241, %v3430
        %v3495 = vmul.f32 %v2243, %v3431
        %v3496 = vmul.f32 %v2245, %v3432
        %v3497 = vmul.f32 %v2247, %v3433
        %v3498 = vmul.f32 %v2249, %v3434
        %v3499 = vmul.f32 %v2251, %v3435
        %v3500 = vmul.f32 %v2253, %v3436
        %v3501 = vmul.f32 %v2255, %v3437
        %v3502 = vmul.f32 %v2257, %v3438
        %v3503 = vmul.f32 %v2259, %v3439
        %v3504 = vmul.f32 %v2261, %v3440
        %v3505 = vmul.f32 %v2263, %v3441
        %v3506 = vmul.f32 %v2265, %v3442
        %v3507 = vmul.f32 %v2267, %v3443
        %v3508 = vmul.f32 %v2269, %v3444
        %v3509 = vmul.f32 %v2271, %v3445
        %v3510 = vmul.f32 %v2273, %v3446
        %v3511 = vmul.f32 %v2275, %v3447
        %v3512 = vmul.f32 %v2277, %v3448
        %v3513 = vmul.f32 %v2279, %v3449
        %v3514 = vmul.f32 %v2281, %v3450
        %v3515 = vmul.f32 %v2283, %v3451
        %v3516 = vmul.f32 %v2285, %v3452
        %v3517 = vmul.f32 %v2287, %v3453
        %v3518 = vmul.f32 %v2289, %v3454
        %v3519 = vmul.f32 %v2291, %v3455
        %v3520 = vmul.f32 %v2293, %v3456
        %v3521 = vmul.f32 %v2295, %v3457
        %v3522 = vmul.f32 %v2297, %v3458
        %v3523 = vmul.f32 %v2299, %v3459
        %v3524 = vmul.f32 %v2301, %v3460
        %v3525 = vmul.f32 %v2303, %v3461
        %v3526 = vmul.f32 %v2305, %v3462
        %v3527 = vmul.f32 %v2307, %v3463
        %v3528 = vmul.f32 %v2309, %v3464
        %v3529 = vmul.f32 %v2311, %v3465
        %v3530 = vmul.f32 %v2313, %v3466
        %v3531 = vmul.f32 %v2315, %v3467
        %v3532 = vadd.f32 %v2893, %v2895
        %v3533 = vadd.f32 %v3532, %v2897
        %v3534 = vadd.f32 %v3533, %v2899
        %3535 = vadd.xlane.f32.xlu0 %v3534
        %v3536 = vpop.xlane.xlu0 %3535
        %v3537 = vadd.f32 %v2901, %v2903
        %v3538 = vadd.f32 %v3537, %v2905
        %v3539 = vadd.f32 %v3538, %v2907
        %3540 = vadd.xlane.f32.xlu0 %v3539
        %v3541 = vpop.xlane.xlu0 %3540
        %v3542 = vadd.f32 %v2909, %v2911
        %v3543 = vadd.f32 %v3542, %v2913
        %v3544 = vadd.f32 %v3543, %v2915
        %3545 = vadd.xlane.f32.xlu0 %v3544
        %v3546 = vpop.xlane.xlu0 %3545
        %v3547 = vadd.f32 %v2917, %v2919
        %v3548 = vadd.f32 %v3547, %v2921
        %v3549 = vadd.f32 %v3548, %v2923
        %3550 = vadd.xlane.f32.xlu0 %v3549
        %v3551 = vpop.xlane.xlu0 %3550
        %v3552 = vadd.f32 %v2925, %v2927
        %v3553 = vadd.f32 %v3552, %v2929
        %v3554 = vadd.f32 %v3553, %v2931
        %3555 = vadd.xlane.f32.xlu0 %v3554
        %v3556 = vpop.xlane.xlu0 %3555
        %v3557 = vadd.f32 %v2933, %v2935
        %v3558 = vadd.f32 %v3557, %v2937
        %v3559 = vadd.f32 %v3558, %v2939
        %3560 = vadd.xlane.f32.xlu0 %v3559
        %v3561 = vpop.xlane.xlu0 %3560
        %v3562 = vadd.f32 %v2941, %v2943
        %v3563 = vadd.f32 %v3562, %v2945
        %v3564 = vadd.f32 %v3563, %v2947
        %3565 = vadd.xlane.f32.xlu0 %v3564
        %v3566 = vpop.xlane.xlu0 %3565
        %v3567 = vadd.f32 %v2949, %v2951
        %v3568 = vadd.f32 %v3567, %v2953
        %v3569 = vadd.f32 %v3568, %v2955
        %3570 = vadd.xlane.f32.xlu0 %v3569
        %v3571 = vpop.xlane.xlu0 %3570
        %v3572 = vadd.f32 %v2957, %v2959
        %v3573 = vadd.f32 %v3572, %v2961
        %v3574 = vadd.f32 %v3573, %v2963
        %3575 = vadd.xlane.f32.xlu0 %v3574
        %v3576 = vpop.xlane.xlu0 %3575
        %v3577 = vadd.f32 %v2965, %v2967
        %v3578 = vadd.f32 %v3577, %v2969
        %v3579 = vadd.f32 %v3578, %v2971
        %3580 = vadd.xlane.f32.xlu0 %v3579
        %v3581 = vpop.xlane.xlu0 %3580
        %v3582 = vadd.f32 %v2973, %v2975
        %v3583 = vadd.f32 %v3582, %v2977
        %v3584 = vadd.f32 %v3583, %v2979
        %3585 = vadd.xlane.f32.xlu0 %v3584
        %v3586 = vpop.xlane.xlu0 %3585
        %v3587 = vadd.f32 %v2981, %v2983
        %v3588 = vadd.f32 %v3587, %v2985
        %v3589 = vadd.f32 %v3588, %v2987
        %3590 = vadd.xlane.f32.xlu0 %v3589
        %v3591 = vpop.xlane.xlu0 %3590
        %v3592 = vadd.f32 %v2989, %v2991
        %v3593 = vadd.f32 %v3592, %v2993
        %v3594 = vadd.f32 %v3593, %v2995
        %3595 = vadd.xlane.f32.xlu0 %v3594
        %v3596 = vpop.xlane.xlu0 %3595
        %v3597 = vadd.f32 %v2997, %v2999
        %v3598 = vadd.f32 %v3597, %v3001
        %v3599 = vadd.f32 %v3598, %v3003
        %3600 = vadd.xlane.f32.xlu0 %v3599
        %v3601 = vpop.xlane.xlu0 %3600
        %v3602 = vadd.f32 %v3005, %v3007
        %v3603 = vadd.f32 %v3602, %v3009
        %v3604 = vadd.f32 %v3603, %v3011
        %3605 = vadd.xlane.f32.xlu0 %v3604
        %v3606 = vpop.xlane.xlu0 %3605
        %v3607 = vadd.f32 %v3013, %v3015
        %v3608 = vadd.f32 %v3607, %v3017
        %v3609 = vadd.f32 %v3608, %v3019
        %3610 = vadd.xlane.f32.xlu0 %v3609
        %v3611 = vpop.xlane.xlu0 %3610
        %v3612 = vadd.f32 %v3021, %v3023
        %v3613 = vadd.f32 %v3612, %v3025
        %v3614 = vadd.f32 %v3613, %v3027
        %3615 = vadd.xlane.f32.xlu0 %v3614
        %v3616 = vpop.xlane.xlu0 %3615
        %v3617 = vadd.f32 %v3029, %v3031
        %v3618 = vadd.f32 %v3617, %v3033
        %v3619 = vadd.f32 %v3618, %v3035
        %3620 = vadd.xlane.f32.xlu0 %v3619
        %v3621 = vpop.xlane.xlu0 %3620
        %v3622 = vadd.f32 %v3037, %v3039
        %v3623 = vadd.f32 %v3622, %v3041
        %v3624 = vadd.f32 %v3623, %v3043
        %3625 = vadd.xlane.f32.xlu0 %v3624
        %v3626 = vpop.xlane.xlu0 %3625
        %v3627 = vadd.f32 %v3045, %v3047
        %v3628 = vadd.f32 %v3627, %v3049
        %v3629 = vadd.f32 %v3628, %v3051
        %3630 = vadd.xlane.f32.xlu0 %v3629
        %v3631 = vpop.xlane.xlu0 %3630
        %v3632 = vadd.f32 %v3053, %v3055
        %v3633 = vadd.f32 %v3632, %v3057
        %v3634 = vadd.f32 %v3633, %v3059
        %3635 = vadd.xlane.f32.xlu0 %v3634
        %v3636 = vpop.xlane.xlu0 %3635
        %v3637 = vadd.f32 %v3061, %v3063
        %v3638 = vadd.f32 %v3637, %v3065
        %v3639 = vadd.f32 %v3638, %v3067
        %3640 = vadd.xlane.f32.xlu0 %v3639
        %v3641 = vpop.xlane.xlu0 %3640
        %v3642 = vadd.f32 %v3069, %v3071
        %v3643 = vadd.f32 %v3642, %v3073
        %v3644 = vadd.f32 %v3643, %v3075
        %3645 = vadd.xlane.f32.xlu0 %v3644
        %v3646 = vpop.xlane.xlu0 %3645
        %v3647 = vadd.f32 %v3077, %v3079
        %v3648 = vadd.f32 %v3647, %v3081
        %v3649 = vadd.f32 %v3648, %v3083
        %3650 = vadd.xlane.f32.xlu0 %v3649
        %v3651 = vpop.xlane.xlu0 %3650
        %v3652 = vadd.f32 %v3085, %v3087
        %v3653 = vadd.f32 %v3652, %v3089
        %v3654 = vadd.f32 %v3653, %v3091
        %3655 = vadd.xlane.f32.xlu0 %v3654
        %v3656 = vpop.xlane.xlu0 %3655
        %v3657 = vadd.f32 %v3093, %v3095
        %v3658 = vadd.f32 %v3657, %v3097
        %v3659 = vadd.f32 %v3658, %v3099
        %3660 = vadd.xlane.f32.xlu0 %v3659
        %v3661 = vpop.xlane.xlu0 %3660
        %v3662 = vadd.f32 %v3101, %v3103
        %v3663 = vadd.f32 %v3662, %v3105
        %v3664 = vadd.f32 %v3663, %v3107
        %3665 = vadd.xlane.f32.xlu0 %v3664
        %v3666 = vpop.xlane.xlu0 %3665
        %v3667 = vadd.f32 %v3109, %v3111
        %v3668 = vadd.f32 %v3667, %v3113
        %v3669 = vadd.f32 %v3668, %v3115
        %3670 = vadd.xlane.f32.xlu0 %v3669
        %v3671 = vpop.xlane.xlu0 %3670
        %v3672 = vadd.f32 %v3117, %v3119
        %v3673 = vadd.f32 %v3672, %v3121
        %v3674 = vadd.f32 %v3673, %v3123
        %3675 = vadd.xlane.f32.xlu0 %v3674
        %v3676 = vpop.xlane.xlu0 %3675
        %v3677 = vadd.f32 %v3125, %v3127
        %v3678 = vadd.f32 %v3677, %v3129
        %v3679 = vadd.f32 %v3678, %v3131
        %3680 = vadd.xlane.f32.xlu0 %v3679
        %v3681 = vpop.xlane.xlu0 %3680
        %v3682 = vadd.f32 %v3133, %v3135
        %v3683 = vadd.f32 %v3682, %v3137
        %v3684 = vadd.f32 %v3683, %v3139
        %3685 = vadd.xlane.f32.xlu0 %v3684
        %v3686 = vpop.xlane.xlu0 %3685
        %v3687 = vadd.f32 %v3141, %v3143
        %v3688 = vadd.f32 %v3687, %v3145
        %v3689 = vadd.f32 %v3688, %v3147
        %3690 = vadd.xlane.f32.xlu0 %v3689
        %v3691 = vpop.xlane.xlu0 %3690
        %v3692 = vadd.f32 %v3149, %v3151
        %v3693 = vadd.f32 %v3692, %v3153
        %v3694 = vadd.f32 %v3693, %v3155
        %3695 = vadd.xlane.f32.xlu0 %v3694
        %v3696 = vpop.xlane.xlu0 %3695
        %v3697 = vadd.f32 %v3157, %v3159
        %v3698 = vadd.f32 %v3697, %v3161
        %v3699 = vadd.f32 %v3698, %v3163
        %3700 = vadd.xlane.f32.xlu0 %v3699
        %v3701 = vpop.xlane.xlu0 %3700
        %v3702 = vadd.f32 %v3165, %v3167
        %v3703 = vadd.f32 %v3702, %v3169
        %v3704 = vadd.f32 %v3703, %v3171
        %3705 = vadd.xlane.f32.xlu0 %v3704
        %v3706 = vpop.xlane.xlu0 %3705
        %v3707 = vadd.f32 %v3173, %v3175
        %v3708 = vadd.f32 %v3707, %v3177
        %v3709 = vadd.f32 %v3708, %v3179
        %3710 = vadd.xlane.f32.xlu0 %v3709
        %v3711 = vpop.xlane.xlu0 %3710
        %v3712 = vadd.f32 %v3181, %v3183
        %v3713 = vadd.f32 %v3712, %v3185
        %v3714 = vadd.f32 %v3713, %v3187
        %3715 = vadd.xlane.f32.xlu0 %v3714
        %v3716 = vpop.xlane.xlu0 %3715
        %v3717 = vadd.f32 %v3189, %v3191
        %v3718 = vadd.f32 %v3717, %v3193
        %v3719 = vadd.f32 %v3718, %v3195
        %3720 = vadd.xlane.f32.xlu0 %v3719
        %v3721 = vpop.xlane.xlu0 %3720
        %v3722 = vadd.f32 %v3197, %v3199
        %v3723 = vadd.f32 %v3722, %v3201
        %v3724 = vadd.f32 %v3723, %v3203
        %3725 = vadd.xlane.f32.xlu0 %v3724
        %v3726 = vpop.xlane.xlu0 %3725
        %v3727 = vadd.f32 %v3205, %v3207
        %v3728 = vadd.f32 %v3727, %v3209
        %v3729 = vadd.f32 %v3728, %v3211
        %3730 = vadd.xlane.f32.xlu0 %v3729
        %v3731 = vpop.xlane.xlu0 %3730
        %v3732 = vadd.f32 %v3213, %v3215
        %v3733 = vadd.f32 %v3732, %v3217
        %v3734 = vadd.f32 %v3733, %v3219
        %3735 = vadd.xlane.f32.xlu0 %v3734
        %v3736 = vpop.xlane.xlu0 %3735
        %v3737 = vadd.f32 %v3221, %v3223
        %v3738 = vadd.f32 %v3737, %v3225
        %v3739 = vadd.f32 %v3738, %v3227
        %3740 = vadd.xlane.f32.xlu0 %v3739
        %v3741 = vpop.xlane.xlu0 %3740
        %v3742 = vadd.f32 %v3229, %v3231
        %v3743 = vadd.f32 %v3742, %v3233
        %v3744 = vadd.f32 %v3743, %v3235
        %3745 = vadd.xlane.f32.xlu0 %v3744
        %v3746 = vpop.xlane.xlu0 %3745
        %v3747 = vadd.f32 %v3237, %v3239
        %v3748 = vadd.f32 %v3747, %v3241
        %v3749 = vadd.f32 %v3748, %v3243
        %3750 = vadd.xlane.f32.xlu0 %v3749
        %v3751 = vpop.xlane.xlu0 %3750
        %v3752 = vadd.f32 %v3245, %v3247
        %v3753 = vadd.f32 %v3752, %v3249
        %v3754 = vadd.f32 %v3753, %v3251
        %3755 = vadd.xlane.f32.xlu0 %v3754
        %v3756 = vpop.xlane.xlu0 %3755
        %v3757 = vadd.f32 %v3253, %v3255
        %v3758 = vadd.f32 %v3757, %v3257
        %v3759 = vadd.f32 %v3758, %v3259
        %3760 = vadd.xlane.f32.xlu0 %v3759
        %v3761 = vpop.xlane.xlu0 %3760
        %v3762 = vadd.f32 %v3261, %v3263
        %v3763 = vadd.f32 %v3762, %v3265
        %v3764 = vadd.f32 %v3763, %v3267
        %3765 = vadd.xlane.f32.xlu0 %v3764
        %v3766 = vpop.xlane.xlu0 %3765
        %v3767 = vadd.f32 %v3269, %v3271
        %v3768 = vadd.f32 %v3767, %v3273
        %v3769 = vadd.f32 %v3768, %v3275
        %3770 = vadd.xlane.f32.xlu0 %v3769
        %v3771 = vpop.xlane.xlu0 %3770
        %v3772 = vadd.f32 %v3277, %v3279
        %v3773 = vadd.f32 %v3772, %v3281
        %v3774 = vadd.f32 %v3773, %v3283
        %3775 = vadd.xlane.f32.xlu0 %v3774
        %v3776 = vpop.xlane.xlu0 %3775
        %v3777 = vadd.f32 %v3285, %v3287
        %v3778 = vadd.f32 %v3777, %v3289
        %v3779 = vadd.f32 %v3778, %v3291
        %3780 = vadd.xlane.f32.xlu0 %v3779
        %v3781 = vpop.xlane.xlu0 %3780
        %v3782 = vadd.f32 %v3293, %v3295
        %v3783 = vadd.f32 %v3782, %v3297
        %v3784 = vadd.f32 %v3783, %v3299
        %3785 = vadd.xlane.f32.xlu0 %v3784
        %v3786 = vpop.xlane.xlu0 %3785
        %v3787 = vadd.f32 %v3301, %v3303
        %v3788 = vadd.f32 %v3787, %v3305
        %v3789 = vadd.f32 %v3788, %v3307
        %3790 = vadd.xlane.f32.xlu0 %v3789
        %v3791 = vpop.xlane.xlu0 %3790
        %v3792 = vadd.f32 %v3309, %v3311
        %v3793 = vadd.f32 %v3792, %v3313
        %v3794 = vadd.f32 %v3793, %v3315
        %3795 = vadd.xlane.f32.xlu0 %v3794
        %v3796 = vpop.xlane.xlu0 %3795
        %v3797 = vadd.f32 %v3317, %v3319
        %v3798 = vadd.f32 %v3797, %v3321
        %v3799 = vadd.f32 %v3798, %v3323
        %3800 = vadd.xlane.f32.xlu0 %v3799
        %v3801 = vpop.xlane.xlu0 %3800
        %v3802 = vadd.f32 %v3325, %v3327
        %v3803 = vadd.f32 %v3802, %v3329
        %v3804 = vadd.f32 %v3803, %v3331
        %3805 = vadd.xlane.f32.xlu0 %v3804
        %v3806 = vpop.xlane.xlu0 %3805
        %v3807 = vadd.f32 %v3333, %v3335
        %v3808 = vadd.f32 %v3807, %v3337
        %v3809 = vadd.f32 %v3808, %v3339
        %3810 = vadd.xlane.f32.xlu0 %v3809
        %v3811 = vpop.xlane.xlu0 %3810
        %v3812 = vadd.f32 %v3341, %v3343
        %v3813 = vadd.f32 %v3812, %v3345
        %v3814 = vadd.f32 %v3813, %v3347
        %3815 = vadd.xlane.f32.xlu0 %v3814
        %v3816 = vpop.xlane.xlu0 %3815
        %v3817 = vadd.f32 %v3349, %v3351
        %v3818 = vadd.f32 %v3817, %v3353
        %v3819 = vadd.f32 %v3818, %v3355
        %3820 = vadd.xlane.f32.xlu0 %v3819
        %v3821 = vpop.xlane.xlu0 %3820
        %v3822 = vadd.f32 %v3357, %v3359
        %v3823 = vadd.f32 %v3822, %v3361
        %v3824 = vadd.f32 %v3823, %v3363
        %3825 = vadd.xlane.f32.xlu0 %v3824
        %v3826 = vpop.xlane.xlu0 %3825
        %v3827 = vadd.f32 %v3365, %v3367
        %v3828 = vadd.f32 %v3827, %v3369
        %v3829 = vadd.f32 %v3828, %v3371
        %3830 = vadd.xlane.f32.xlu0 %v3829
        %v3831 = vpop.xlane.xlu0 %3830
        %v3832 = vadd.f32 %v3373, %v3375
        %v3833 = vadd.f32 %v3832, %v3377
        %v3834 = vadd.f32 %v3833, %v3379
        %3835 = vadd.xlane.f32.xlu0 %v3834
        %v3836 = vpop.xlane.xlu0 %3835
        %v3837 = vadd.f32 %v3381, %v3383
        %v3838 = vadd.f32 %v3837, %v3385
        %v3839 = vadd.f32 %v3838, %v3387
        %3840 = vadd.xlane.f32.xlu0 %v3839
        %v3841 = vpop.xlane.xlu0 %3840
        %v3842 = vadd.f32 %v3389, %v3391
        %v3843 = vadd.f32 %v3842, %v3393
        %v3844 = vadd.f32 %v3843, %v3395
        %3845 = vadd.xlane.f32.xlu0 %v3844
        %v3846 = vpop.xlane.xlu0 %3845
        %v3847 = vadd.f32 %v3397, %v3399
        %v3848 = vadd.f32 %v3847, %v3401
        %v3849 = vadd.f32 %v3848, %v3403
        %3850 = vadd.xlane.f32.xlu0 %v3849
        %v3851 = vpop.xlane.xlu0 %3850
        %v3852 = vadd.f32 %v3468, %v3536
        %v3853 = vadd.f32 %v3469, %v3541
        %v3854 = vadd.f32 %v3470, %v3546
        %v3855 = vadd.f32 %v3471, %v3551
        %v3856 = vadd.f32 %v3472, %v3556
        %v3857 = vadd.f32 %v3473, %v3561
        %v3858 = vadd.f32 %v3474, %v3566
        %v3859 = vadd.f32 %v3475, %v3571
        %v3860 = vadd.f32 %v3476, %v3576
        %v3861 = vadd.f32 %v3477, %v3581
        %v3862 = vadd.f32 %v3478, %v3586
        %v3863 = vadd.f32 %v3479, %v3591
        %v3864 = vadd.f32 %v3480, %v3596
        %v3865 = vadd.f32 %v3481, %v3601
        %v3866 = vadd.f32 %v3482, %v3606
        %v3867 = vadd.f32 %v3483, %v3611
        %v3868 = vadd.f32 %v3484, %v3616
        %v3869 = vadd.f32 %v3485, %v3621
        %v3870 = vadd.f32 %v3486, %v3626
        %v3871 = vadd.f32 %v3487, %v3631
        %v3872 = vadd.f32 %v3488, %v3636
        %v3873 = vadd.f32 %v3489, %v3641
        %v3874 = vadd.f32 %v3490, %v3646
        %v3875 = vadd.f32 %v3491, %v3651
        %v3876 = vadd.f32 %v3492, %v3656
        %v3877 = vadd.f32 %v3493, %v3661
        %v3878 = vadd.f32 %v3494, %v3666
        %v3879 = vadd.f32 %v3495, %v3671
        %v3880 = vadd.f32 %v3496, %v3676
        %v3881 = vadd.f32 %v3497, %v3681
        %v3882 = vadd.f32 %v3498, %v3686
        %v3883 = vadd.f32 %v3499, %v3691
        %v3884 = vadd.f32 %v3500, %v3696
        %v3885 = vadd.f32 %v3501, %v3701
        %v3886 = vadd.f32 %v3502, %v3706
        %v3887 = vadd.f32 %v3503, %v3711
        %v3888 = vadd.f32 %v3504, %v3716
        %v3889 = vadd.f32 %v3505, %v3721
        %v3890 = vadd.f32 %v3506, %v3726
        %v3891 = vadd.f32 %v3507, %v3731
        %v3892 = vadd.f32 %v3508, %v3736
        %v3893 = vadd.f32 %v3509, %v3741
        %v3894 = vadd.f32 %v3510, %v3746
        %v3895 = vadd.f32 %v3511, %v3751
        %v3896 = vadd.f32 %v3512, %v3756
        %v3897 = vadd.f32 %v3513, %v3761
        %v3898 = vadd.f32 %v3514, %v3766
        %v3899 = vadd.f32 %v3515, %v3771
        %v3900 = vadd.f32 %v3516, %v3776
        %v3901 = vadd.f32 %v3517, %v3781
        %v3902 = vadd.f32 %v3518, %v3786
        %v3903 = vadd.f32 %v3519, %v3791
        %v3904 = vadd.f32 %v3520, %v3796
        %v3905 = vadd.f32 %v3521, %v3801
        %v3906 = vadd.f32 %v3522, %v3806
        %v3907 = vadd.f32 %v3523, %v3811
        %v3908 = vadd.f32 %v3524, %v3816
        %v3909 = vadd.f32 %v3525, %v3821
        %v3910 = vadd.f32 %v3526, %v3826
        %v3911 = vadd.f32 %v3527, %v3831
        %v3912 = vadd.f32 %v3528, %v3836
        %v3913 = vadd.f32 %v3529, %v3841
        %v3914 = vadd.f32 %v3530, %v3846
        %v3915 = vadd.f32 %v3531, %v3851
        %vm3916 = vcmask 7168
        %3917 = vst.msk [vmem:[#allocation3] sm:$0xff] %vm3916, %v3852
        %3918 = vst.msk [vmem:[#allocation3 + $0x8] sm:$0xff] %vm3916, %v3853
        %3919 = vst.msk [vmem:[#allocation3 + $0x10] sm:$0xff] %vm3916, %v3854
        %3920 = vst.msk [vmem:[#allocation3 + $0x18] sm:$0xff] %vm3916, %v3855
        %3921 = vst.msk [vmem:[#allocation3 + $0x20] sm:$0xff] %vm3916, %v3856
        %3922 = vst.msk [vmem:[#allocation3 + $0x28] sm:$0xff] %vm3916, %v3857
        %3923 = vst.msk [vmem:[#allocation3 + $0x30] sm:$0xff] %vm3916, %v3858
        %3924 = vst.msk [vmem:[#allocation3 + $0x38] sm:$0xff] %vm3916, %v3859
        %3925 = vst.msk [vmem:[#allocation3 + $0x40] sm:$0xff] %vm3916, %v3860
        %3926 = vst.msk [vmem:[#allocation3 + $0x48] sm:$0xff] %vm3916, %v3861
        %3927 = vst.msk [vmem:[#allocation3 + $0x50] sm:$0xff] %vm3916, %v3862
        %3928 = vst.msk [vmem:[#allocation3 + $0x58] sm:$0xff] %vm3916, %v3863
        %3929 = vst.msk [vmem:[#allocation3 + $0x60] sm:$0xff] %vm3916, %v3864
        %3930 = vst.msk [vmem:[#allocation3 + $0x68] sm:$0xff] %vm3916, %v3865
        %3931 = vst.msk [vmem:[#allocation3 + $0x70] sm:$0xff] %vm3916, %v3866
        %3932 = vst.msk [vmem:[#allocation3 + $0x78] sm:$0xff] %vm3916, %v3867
        %3933 = vst.msk [vmem:[#allocation3 + $0x80] sm:$0xff] %vm3916, %v3868
        %3934 = vst.msk [vmem:[#allocation3 + $0x88] sm:$0xff] %vm3916, %v3869
        %3935 = vst.msk [vmem:[#allocation3 + $0x90] sm:$0xff] %vm3916, %v3870
        %3936 = vst.msk [vmem:[#allocation3 + $0x98] sm:$0xff] %vm3916, %v3871
        %3937 = vst.msk [vmem:[#allocation3 + $0xa0] sm:$0xff] %vm3916, %v3872
        %3938 = vst.msk [vmem:[#allocation3 + $0xa8] sm:$0xff] %vm3916, %v3873
        %3939 = vst.msk [vmem:[#allocation3 + $0xb0] sm:$0xff] %vm3916, %v3874
        %3940 = vst.msk [vmem:[#allocation3 + $0xb8] sm:$0xff] %vm3916, %v3875
        %3941 = vst.msk [vmem:[#allocation3 + $0xc0] sm:$0xff] %vm3916, %v3876
        %3942 = vst.msk [vmem:[#allocation3 + $0xc8] sm:$0xff] %vm3916, %v3877
        %3943 = vst.msk [vmem:[#allocation3 + $0xd0] sm:$0xff] %vm3916, %v3878
        %3944 = vst.msk [vmem:[#allocation3 + $0xd8] sm:$0xff] %vm3916, %v3879
        %3945 = vst.msk [vmem:[#allocation3 + $0xe0] sm:$0xff] %vm3916, %v3880
        %3946 = vst.msk [vmem:[#allocation3 + $0xe8] sm:$0xff] %vm3916, %v3881
        %3947 = vst.msk [vmem:[#allocation3 + $0xf0] sm:$0xff] %vm3916, %v3882
        %3948 = vst.msk [vmem:[#allocation3 + $0xf8] sm:$0xff] %vm3916, %v3883
        %3949 = vst.msk [vmem:[#allocation3 + $0x100] sm:$0xff] %vm3916, %v3884
        %3950 = vst.msk [vmem:[#allocation3 + $0x108] sm:$0xff] %vm3916, %v3885
        %3951 = vst.msk [vmem:[#allocation3 + $0x110] sm:$0xff] %vm3916, %v3886
        %3952 = vst.msk [vmem:[#allocation3 + $0x118] sm:$0xff] %vm3916, %v3887
        %3953 = vst.msk [vmem:[#allocation3 + $0x120] sm:$0xff] %vm3916, %v3888
        %3954 = vst.msk [vmem:[#allocation3 + $0x128] sm:$0xff] %vm3916, %v3889
        %3955 = vst.msk [vmem:[#allocation3 + $0x130] sm:$0xff] %vm3916, %v3890
        %3956 = vst.msk [vmem:[#allocation3 + $0x138] sm:$0xff] %vm3916, %v3891
        %3957 = vst.msk [vmem:[#allocation3 + $0x140] sm:$0xff] %vm3916, %v3892
        %3958 = vst.msk [vmem:[#allocation3 + $0x148] sm:$0xff] %vm3916, %v3893
        %3959 = vst.msk [vmem:[#allocation3 + $0x150] sm:$0xff] %vm3916, %v3894
        %3960 = vst.msk [vmem:[#allocation3 + $0x158] sm:$0xff] %vm3916, %v3895
        %3961 = vst.msk [vmem:[#allocation3 + $0x160] sm:$0xff] %vm3916, %v3896
        %3962 = vst.msk [vmem:[#allocation3 + $0x168] sm:$0xff] %vm3916, %v3897
        %3963 = vst.msk [vmem:[#allocation3 + $0x170] sm:$0xff] %vm3916, %v3898
        %3964 = vst.msk [vmem:[#allocation3 + $0x178] sm:$0xff] %vm3916, %v3899
        %3965 = vst.msk [vmem:[#allocation3 + $0x180] sm:$0xff] %vm3916, %v3900
        %3966 = vst.msk [vmem:[#allocation3 + $0x188] sm:$0xff] %vm3916, %v3901
        %3967 = vst.msk [vmem:[#allocation3 + $0x190] sm:$0xff] %vm3916, %v3902
        %3968 = vst.msk [vmem:[#allocation3 + $0x198] sm:$0xff] %vm3916, %v3903
        %3969 = vst.msk [vmem:[#allocation3 + $0x1a0] sm:$0xff] %vm3916, %v3904
        %3970 = vst.msk [vmem:[#allocation3 + $0x1a8] sm:$0xff] %vm3916, %v3905
        %3971 = vst.msk [vmem:[#allocation3 + $0x1b0] sm:$0xff] %vm3916, %v3906
        %3972 = vst.msk [vmem:[#allocation3 + $0x1b8] sm:$0xff] %vm3916, %v3907
        %3973 = vst.msk [vmem:[#allocation3 + $0x1c0] sm:$0xff] %vm3916, %v3908
        %3974 = vst.msk [vmem:[#allocation3 + $0x1c8] sm:$0xff] %vm3916, %v3909
        %3975 = vst.msk [vmem:[#allocation3 + $0x1d0] sm:$0xff] %vm3916, %v3910
        %3976 = vst.msk [vmem:[#allocation3 + $0x1d8] sm:$0xff] %vm3916, %v3911
        %3977 = vst.msk [vmem:[#allocation3 + $0x1e0] sm:$0xff] %vm3916, %v3912
        %3978 = vst.msk [vmem:[#allocation3 + $0x1e8] sm:$0xff] %vm3916, %v3913
        %3979 = vst.msk [vmem:[#allocation3 + $0x1f0] sm:$0xff] %vm3916, %v3914
        %3980 = vst.msk [vmem:[#allocation3 + $0x1f8] sm:$0xff] %vm3916, %v3915
        %v3981 = vld [vmem:[#allocation4] sm:$0xff]
        %v3982 = vld [vmem:[#allocation4 + $0x8] sm:$0xff]
        %v3983 = vld [vmem:[#allocation4 + $0x10] sm:$0xff]
        %v3984 = vld [vmem:[#allocation4 + $0x18] sm:$0xff]
        %v3985 = vld [vmem:[#allocation4 + $0x20] sm:$0xff]
        %v3986 = vld [vmem:[#allocation4 + $0x28] sm:$0xff]
        %v3987 = vld [vmem:[#allocation4 + $0x30] sm:$0xff]
        %v3988 = vld [vmem:[#allocation4 + $0x38] sm:$0xff]
        %v3989 = vld [vmem:[#allocation4 + $0x40] sm:$0xff]
        %v3990 = vld [vmem:[#allocation4 + $0x48] sm:$0xff]
        %v3991 = vld [vmem:[#allocation4 + $0x50] sm:$0xff]
        %v3992 = vld [vmem:[#allocation4 + $0x58] sm:$0xff]
        %v3993 = vld [vmem:[#allocation4 + $0x60] sm:$0xff]
        %v3994 = vld [vmem:[#allocation4 + $0x68] sm:$0xff]
        %v3995 = vld [vmem:[#allocation4 + $0x70] sm:$0xff]
        %v3996 = vld [vmem:[#allocation4 + $0x78] sm:$0xff]
        %v3997 = vld [vmem:[#allocation4 + $0x80] sm:$0xff]
        %v3998 = vld [vmem:[#allocation4 + $0x88] sm:$0xff]
        %v3999 = vld [vmem:[#allocation4 + $0x90] sm:$0xff]
        %v4000 = vld [vmem:[#allocation4 + $0x98] sm:$0xff]
        %v4001 = vld [vmem:[#allocation4 + $0xa0] sm:$0xff]
        %v4002 = vld [vmem:[#allocation4 + $0xa8] sm:$0xff]
        %v4003 = vld [vmem:[#allocation4 + $0xb0] sm:$0xff]
        %v4004 = vld [vmem:[#allocation4 + $0xb8] sm:$0xff]
        %v4005 = vld [vmem:[#allocation4 + $0xc0] sm:$0xff]
        %v4006 = vld [vmem:[#allocation4 + $0xc8] sm:$0xff]
        %v4007 = vld [vmem:[#allocation4 + $0xd0] sm:$0xff]
        %v4008 = vld [vmem:[#allocation4 + $0xd8] sm:$0xff]
        %v4009 = vld [vmem:[#allocation4 + $0xe0] sm:$0xff]
        %v4010 = vld [vmem:[#allocation4 + $0xe8] sm:$0xff]
        %v4011 = vld [vmem:[#allocation4 + $0xf0] sm:$0xff]
        %v4012 = vld [vmem:[#allocation4 + $0xf8] sm:$0xff]
        %v4013 = vld [vmem:[#allocation4 + $0x100] sm:$0xff]
        %v4014 = vld [vmem:[#allocation4 + $0x108] sm:$0xff]
        %v4015 = vld [vmem:[#allocation4 + $0x110] sm:$0xff]
        %v4016 = vld [vmem:[#allocation4 + $0x118] sm:$0xff]
        %v4017 = vld [vmem:[#allocation4 + $0x120] sm:$0xff]
        %v4018 = vld [vmem:[#allocation4 + $0x128] sm:$0xff]
        %v4019 = vld [vmem:[#allocation4 + $0x130] sm:$0xff]
        %v4020 = vld [vmem:[#allocation4 + $0x138] sm:$0xff]
        %v4021 = vld [vmem:[#allocation4 + $0x140] sm:$0xff]
        %v4022 = vld [vmem:[#allocation4 + $0x148] sm:$0xff]
        %v4023 = vld [vmem:[#allocation4 + $0x150] sm:$0xff]
        %v4024 = vld [vmem:[#allocation4 + $0x158] sm:$0xff]
        %v4025 = vld [vmem:[#allocation4 + $0x160] sm:$0xff]
        %v4026 = vld [vmem:[#allocation4 + $0x168] sm:$0xff]
        %v4027 = vld [vmem:[#allocation4 + $0x170] sm:$0xff]
        %v4028 = vld [vmem:[#allocation4 + $0x178] sm:$0xff]
        %v4029 = vld [vmem:[#allocation4 + $0x180] sm:$0xff]
        %v4030 = vld [vmem:[#allocation4 + $0x188] sm:$0xff]
        %v4031 = vld [vmem:[#allocation4 + $0x190] sm:$0xff]
        %v4032 = vld [vmem:[#allocation4 + $0x198] sm:$0xff]
        %v4033 = vld [vmem:[#allocation4 + $0x1a0] sm:$0xff]
        %v4034 = vld [vmem:[#allocation4 + $0x1a8] sm:$0xff]
        %v4035 = vld [vmem:[#allocation4 + $0x1b0] sm:$0xff]
        %v4036 = vld [vmem:[#allocation4 + $0x1b8] sm:$0xff]
        %v4037 = vld [vmem:[#allocation4 + $0x1c0] sm:$0xff]
        %v4038 = vld [vmem:[#allocation4 + $0x1c8] sm:$0xff]
        %v4039 = vld [vmem:[#allocation4 + $0x1d0] sm:$0xff]
        %v4040 = vld [vmem:[#allocation4 + $0x1d8] sm:$0xff]
        %v4041 = vld [vmem:[#allocation4 + $0x1e0] sm:$0xff]
        %v4042 = vld [vmem:[#allocation4 + $0x1e8] sm:$0xff]
        %v4043 = vld [vmem:[#allocation4 + $0x1f0] sm:$0xff]
        %v4044 = vld [vmem:[#allocation4 + $0x1f8] sm:$0xff]
        %4046 = vset.pattern.permute.xlu0 0
        %4047 = vperm.xlu0 %4046, %v2189
        %v4048 = vpop.permute.xlu0 %4047
        %4051 = vset.pattern.permute.xlu0 0
        %4052 = vperm.xlu0 %4051, %v2191
        %v4053 = vpop.permute.xlu0 %4052
        %4056 = vset.pattern.permute.xlu0 0
        %4057 = vperm.xlu0 %4056, %v2193
        %v4058 = vpop.permute.xlu0 %4057
        %4061 = vset.pattern.permute.xlu0 0
        %4062 = vperm.xlu0 %4061, %v2195
        %v4063 = vpop.permute.xlu0 %4062
        %4066 = vset.pattern.permute.xlu0 0
        %4067 = vperm.xlu0 %4066, %v2197
        %v4068 = vpop.permute.xlu0 %4067
        %4071 = vset.pattern.permute.xlu0 0
        %4072 = vperm.xlu0 %4071, %v2199
        %v4073 = vpop.permute.xlu0 %4072
        %4076 = vset.pattern.permute.xlu0 0
        %4077 = vperm.xlu0 %4076, %v2201
        %v4078 = vpop.permute.xlu0 %4077
        %4081 = vset.pattern.permute.xlu0 0
        %4082 = vperm.xlu0 %4081, %v2203
        %v4083 = vpop.permute.xlu0 %4082
        %4086 = vset.pattern.permute.xlu0 0
        %4087 = vperm.xlu0 %4086, %v2205
        %v4088 = vpop.permute.xlu0 %4087
        %4091 = vset.pattern.permute.xlu0 0
        %4092 = vperm.xlu0 %4091, %v2207
        %v4093 = vpop.permute.xlu0 %4092
        %4096 = vset.pattern.permute.xlu0 0
        %4097 = vperm.xlu0 %4096, %v2209
        %v4098 = vpop.permute.xlu0 %4097
        %4101 = vset.pattern.permute.xlu0 0
        %4102 = vperm.xlu0 %4101, %v2211
        %v4103 = vpop.permute.xlu0 %4102
        %4106 = vset.pattern.permute.xlu0 0
        %4107 = vperm.xlu0 %4106, %v2213
        %v4108 = vpop.permute.xlu0 %4107
        %4111 = vset.pattern.permute.xlu0 0
        %4112 = vperm.xlu0 %4111, %v2215
        %v4113 = vpop.permute.xlu0 %4112
        %4116 = vset.pattern.permute.xlu0 0
        %4117 = vperm.xlu0 %4116, %v2217
        %v4118 = vpop.permute.xlu0 %4117
        %4121 = vset.pattern.permute.xlu0 0
        %4122 = vperm.xlu0 %4121, %v2219
        %v4123 = vpop.permute.xlu0 %4122
        %4126 = vset.pattern.permute.xlu0 0
        %4127 = vperm.xlu0 %4126, %v2221
        %v4128 = vpop.permute.xlu0 %4127
        %4131 = vset.pattern.permute.xlu0 0
        %4132 = vperm.xlu0 %4131, %v2223
        %v4133 = vpop.permute.xlu0 %4132
        %4136 = vset.pattern.permute.xlu0 0
        %4137 = vperm.xlu0 %4136, %v2225
        %v4138 = vpop.permute.xlu0 %4137
        %4141 = vset.pattern.permute.xlu0 0
        %4142 = vperm.xlu0 %4141, %v2227
        %v4143 = vpop.permute.xlu0 %4142
        %4146 = vset.pattern.permute.xlu0 0
        %4147 = vperm.xlu0 %4146, %v2229
        %v4148 = vpop.permute.xlu0 %4147
        %4151 = vset.pattern.permute.xlu0 0
        %4152 = vperm.xlu0 %4151, %v2231
        %v4153 = vpop.permute.xlu0 %4152
        %4156 = vset.pattern.permute.xlu0 0
        %4157 = vperm.xlu0 %4156, %v2233
        %v4158 = vpop.permute.xlu0 %4157
        %4161 = vset.pattern.permute.xlu0 0
        %4162 = vperm.xlu0 %4161, %v2235
        %v4163 = vpop.permute.xlu0 %4162
        %4166 = vset.pattern.permute.xlu0 0
        %4167 = vperm.xlu0 %4166, %v2237
        %v4168 = vpop.permute.xlu0 %4167
        %4171 = vset.pattern.permute.xlu0 0
        %4172 = vperm.xlu0 %4171, %v2239
        %v4173 = vpop.permute.xlu0 %4172
        %4176 = vset.pattern.permute.xlu0 0
        %4177 = vperm.xlu0 %4176, %v2241
        %v4178 = vpop.permute.xlu0 %4177
        %4181 = vset.pattern.permute.xlu0 0
        %4182 = vperm.xlu0 %4181, %v2243
        %v4183 = vpop.permute.xlu0 %4182
        %4186 = vset.pattern.permute.xlu0 0
        %4187 = vperm.xlu0 %4186, %v2245
        %v4188 = vpop.permute.xlu0 %4187
        %4191 = vset.pattern.permute.xlu0 0
        %4192 = vperm.xlu0 %4191, %v2247
        %v4193 = vpop.permute.xlu0 %4192
        %4196 = vset.pattern.permute.xlu0 0
        %4197 = vperm.xlu0 %4196, %v2249
        %v4198 = vpop.permute.xlu0 %4197
        %4201 = vset.pattern.permute.xlu0 0
        %4202 = vperm.xlu0 %4201, %v2251
        %v4203 = vpop.permute.xlu0 %4202
        %4206 = vset.pattern.permute.xlu0 0
        %4207 = vperm.xlu0 %4206, %v2253
        %v4208 = vpop.permute.xlu0 %4207
        %4211 = vset.pattern.permute.xlu0 0
        %4212 = vperm.xlu0 %4211, %v2255
        %v4213 = vpop.permute.xlu0 %4212
        %4216 = vset.pattern.permute.xlu0 0
        %4217 = vperm.xlu0 %4216, %v2257
        %v4218 = vpop.permute.xlu0 %4217
        %4221 = vset.pattern.permute.xlu0 0
        %4222 = vperm.xlu0 %4221, %v2259
        %v4223 = vpop.permute.xlu0 %4222
        %4226 = vset.pattern.permute.xlu0 0
        %4227 = vperm.xlu0 %4226, %v2261
        %v4228 = vpop.permute.xlu0 %4227
        %4231 = vset.pattern.permute.xlu0 0
        %4232 = vperm.xlu0 %4231, %v2263
        %v4233 = vpop.permute.xlu0 %4232
        %4236 = vset.pattern.permute.xlu0 0
        %4237 = vperm.xlu0 %4236, %v2265
        %v4238 = vpop.permute.xlu0 %4237
        %4241 = vset.pattern.permute.xlu0 0
        %4242 = vperm.xlu0 %4241, %v2267
        %v4243 = vpop.permute.xlu0 %4242
        %4246 = vset.pattern.permute.xlu0 0
        %4247 = vperm.xlu0 %4246, %v2269
        %v4248 = vpop.permute.xlu0 %4247
        %4251 = vset.pattern.permute.xlu0 0
        %4252 = vperm.xlu0 %4251, %v2271
        %v4253 = vpop.permute.xlu0 %4252
        %4256 = vset.pattern.permute.xlu0 0
        %4257 = vperm.xlu0 %4256, %v2273
        %v4258 = vpop.permute.xlu0 %4257
        %4261 = vset.pattern.permute.xlu0 0
        %4262 = vperm.xlu0 %4261, %v2275
        %v4263 = vpop.permute.xlu0 %4262
        %4266 = vset.pattern.permute.xlu0 0
        %4267 = vperm.xlu0 %4266, %v2277
        %v4268 = vpop.permute.xlu0 %4267
        %4271 = vset.pattern.permute.xlu0 0
        %4272 = vperm.xlu0 %4271, %v2279
        %v4273 = vpop.permute.xlu0 %4272
        %4276 = vset.pattern.permute.xlu0 0
        %4277 = vperm.xlu0 %4276, %v2281
        %v4278 = vpop.permute.xlu0 %4277
        %4281 = vset.pattern.permute.xlu0 0
        %4282 = vperm.xlu0 %4281, %v2283
        %v4283 = vpop.permute.xlu0 %4282
        %4286 = vset.pattern.permute.xlu0 0
        %4287 = vperm.xlu0 %4286, %v2285
        %v4288 = vpop.permute.xlu0 %4287
        %4291 = vset.pattern.permute.xlu0 0
        %4292 = vperm.xlu0 %4291, %v2287
        %v4293 = vpop.permute.xlu0 %4292
        %4296 = vset.pattern.permute.xlu0 0
        %4297 = vperm.xlu0 %4296, %v2289
        %v4298 = vpop.permute.xlu0 %4297
        %4301 = vset.pattern.permute.xlu0 0
        %4302 = vperm.xlu0 %4301, %v2291
        %v4303 = vpop.permute.xlu0 %4302
        %4306 = vset.pattern.permute.xlu0 0
        %4307 = vperm.xlu0 %4306, %v2293
        %v4308 = vpop.permute.xlu0 %4307
        %4311 = vset.pattern.permute.xlu0 0
        %4312 = vperm.xlu0 %4311, %v2295
        %v4313 = vpop.permute.xlu0 %4312
        %4316 = vset.pattern.permute.xlu0 0
        %4317 = vperm.xlu0 %4316, %v2297
        %v4318 = vpop.permute.xlu0 %4317
        %4321 = vset.pattern.permute.xlu0 0
        %4322 = vperm.xlu0 %4321, %v2299
        %v4323 = vpop.permute.xlu0 %4322
        %4326 = vset.pattern.permute.xlu0 0
        %4327 = vperm.xlu0 %4326, %v2301
        %v4328 = vpop.permute.xlu0 %4327
        %4331 = vset.pattern.permute.xlu0 0
        %4332 = vperm.xlu0 %4331, %v2303
        %v4333 = vpop.permute.xlu0 %4332
        %4336 = vset.pattern.permute.xlu0 0
        %4337 = vperm.xlu0 %4336, %v2305
        %v4338 = vpop.permute.xlu0 %4337
        %4341 = vset.pattern.permute.xlu0 0
        %4342 = vperm.xlu0 %4341, %v2307
        %v4343 = vpop.permute.xlu0 %4342
        %4346 = vset.pattern.permute.xlu0 0
        %4347 = vperm.xlu0 %4346, %v2309
        %v4348 = vpop.permute.xlu0 %4347
        %4351 = vset.pattern.permute.xlu0 0
        %4352 = vperm.xlu0 %4351, %v2311
        %v4353 = vpop.permute.xlu0 %4352
        %4356 = vset.pattern.permute.xlu0 0
        %4357 = vperm.xlu0 %4356, %v2313
        %v4358 = vpop.permute.xlu0 %4357
        %4361 = vset.pattern.permute.xlu0 0
        %4362 = vperm.xlu0 %4361, %v2315
        %v4363 = vpop.permute.xlu0 %4362
        %v4365 = vmul.f32 %v4048, %v3981
        %v4366 = vmul.f32 %v4053, %v3982
        %v4367 = vmul.f32 %v4058, %v3983
        %v4368 = vmul.f32 %v4063, %v3984
        %v4369 = vmul.f32 %v4068, %v3985
        %v4370 = vmul.f32 %v4073, %v3986
        %v4371 = vmul.f32 %v4078, %v3987
        %v4372 = vmul.f32 %v4083, %v3988
        %v4373 = vmul.f32 %v4088, %v3989
        %v4374 = vmul.f32 %v4093, %v3990
        %v4375 = vmul.f32 %v4098, %v3991
        %v4376 = vmul.f32 %v4103, %v3992
        %v4377 = vmul.f32 %v4108, %v3993
        %v4378 = vmul.f32 %v4113, %v3994
        %v4379 = vmul.f32 %v4118, %v3995
        %v4380 = vmul.f32 %v4123, %v3996
        %v4381 = vmul.f32 %v4128, %v3997
        %v4382 = vmul.f32 %v4133, %v3998
        %v4383 = vmul.f32 %v4138, %v3999
        %v4384 = vmul.f32 %v4143, %v4000
        %v4385 = vmul.f32 %v4148, %v4001
        %v4386 = vmul.f32 %v4153, %v4002
        %v4387 = vmul.f32 %v4158, %v4003
        %v4388 = vmul.f32 %v4163, %v4004
        %v4389 = vmul.f32 %v4168, %v4005
        %v4390 = vmul.f32 %v4173, %v4006
        %v4391 = vmul.f32 %v4178, %v4007
        %v4392 = vmul.f32 %v4183, %v4008
        %v4393 = vmul.f32 %v4188, %v4009
        %v4394 = vmul.f32 %v4193, %v4010
        %v4395 = vmul.f32 %v4198, %v4011
        %v4396 = vmul.f32 %v4203, %v4012
        %v4397 = vmul.f32 %v4208, %v4013
        %v4398 = vmul.f32 %v4213, %v4014
        %v4399 = vmul.f32 %v4218, %v4015
        %v4400 = vmul.f32 %v4223, %v4016
        %v4401 = vmul.f32 %v4228, %v4017
        %v4402 = vmul.f32 %v4233, %v4018
        %v4403 = vmul.f32 %v4238, %v4019
        %v4404 = vmul.f32 %v4243, %v4020
        %v4405 = vmul.f32 %v4248, %v4021
        %v4406 = vmul.f32 %v4253, %v4022
        %v4407 = vmul.f32 %v4258, %v4023
        %v4408 = vmul.f32 %v4263, %v4024
        %v4409 = vmul.f32 %v4268, %v4025
        %v4410 = vmul.f32 %v4273, %v4026
        %v4411 = vmul.f32 %v4278, %v4027
        %v4412 = vmul.f32 %v4283, %v4028
        %v4413 = vmul.f32 %v4288, %v4029
        %v4414 = vmul.f32 %v4293, %v4030
        %v4415 = vmul.f32 %v4298, %v4031
        %v4416 = vmul.f32 %v4303, %v4032
        %v4417 = vmul.f32 %v4308, %v4033
        %v4418 = vmul.f32 %v4313, %v4034
        %v4419 = vmul.f32 %v4318, %v4035
        %v4420 = vmul.f32 %v4323, %v4036
        %v4421 = vmul.f32 %v4328, %v4037
        %v4422 = vmul.f32 %v4333, %v4038
        %v4423 = vmul.f32 %v4338, %v4039
        %v4424 = vmul.f32 %v4343, %v4040
        %v4425 = vmul.f32 %v4348, %v4041
        %v4426 = vmul.f32 %v4353, %v4042
        %v4427 = vmul.f32 %v4358, %v4043
        %v4428 = vmul.f32 %v4363, %v4044
        %v4429 = vpack.c.bf16 %v2901, %v2893
        %v4430 = vpack.c.bf16 %v2903, %v2895
        %v4431 = vpack.c.bf16 %v2905, %v2897
        %v4432 = vpack.c.bf16 %v2907, %v2899
        %v4433 = vpack.c.bf16 %v2917, %v2909
        %v4434 = vpack.c.bf16 %v2919, %v2911
        %v4435 = vpack.c.bf16 %v2921, %v2913
        %v4436 = vpack.c.bf16 %v2923, %v2915
        %v4437 = vpack.c.bf16 %v2933, %v2925
        %v4438 = vpack.c.bf16 %v2935, %v2927
        %v4439 = vpack.c.bf16 %v2937, %v2929
        %v4440 = vpack.c.bf16 %v2939, %v2931
        %v4441 = vpack.c.bf16 %v2949, %v2941
        %v4442 = vpack.c.bf16 %v2951, %v2943
        %v4443 = vpack.c.bf16 %v2953, %v2945
        %v4444 = vpack.c.bf16 %v2955, %v2947
        %v4445 = vpack.c.bf16 %v2965, %v2957
        %v4446 = vpack.c.bf16 %v2967, %v2959
        %v4447 = vpack.c.bf16 %v2969, %v2961
        %v4448 = vpack.c.bf16 %v2971, %v2963
        %v4449 = vpack.c.bf16 %v2981, %v2973
        %v4450 = vpack.c.bf16 %v2983, %v2975
        %v4451 = vpack.c.bf16 %v2985, %v2977
        %v4452 = vpack.c.bf16 %v2987, %v2979
        %v4453 = vpack.c.bf16 %v2997, %v2989
        %v4454 = vpack.c.bf16 %v2999, %v2991
        %v4455 = vpack.c.bf16 %v3001, %v2993
        %v4456 = vpack.c.bf16 %v3003, %v2995
        %v4457 = vpack.c.bf16 %v3013, %v3005
        %v4458 = vpack.c.bf16 %v3015, %v3007
        %v4459 = vpack.c.bf16 %v3017, %v3009
        %v4460 = vpack.c.bf16 %v3019, %v3011
        %v4461 = vpack.c.bf16 %v3029, %v3021
        %v4462 = vpack.c.bf16 %v3031, %v3023
        %v4463 = vpack.c.bf16 %v3033, %v3025
        %v4464 = vpack.c.bf16 %v3035, %v3027
        %v4465 = vpack.c.bf16 %v3045, %v3037
        %v4466 = vpack.c.bf16 %v3047, %v3039
        %v4467 = vpack.c.bf16 %v3049, %v3041
        %v4468 = vpack.c.bf16 %v3051, %v3043
        %v4469 = vpack.c.bf16 %v3061, %v3053
        %v4470 = vpack.c.bf16 %v3063, %v3055
        %v4471 = vpack.c.bf16 %v3065, %v3057
        %v4472 = vpack.c.bf16 %v3067, %v3059
        %v4473 = vpack.c.bf16 %v3077, %v3069
        %v4474 = vpack.c.bf16 %v3079, %v3071
        %v4475 = vpack.c.bf16 %v3081, %v3073
        %v4476 = vpack.c.bf16 %v3083, %v3075
        %v4477 = vpack.c.bf16 %v3093, %v3085
        %v4478 = vpack.c.bf16 %v3095, %v3087
        %v4479 = vpack.c.bf16 %v3097, %v3089
        %v4480 = vpack.c.bf16 %v3099, %v3091
        %v4481 = vpack.c.bf16 %v3109, %v3101
        %v4482 = vpack.c.bf16 %v3111, %v3103
        %v4483 = vpack.c.bf16 %v3113, %v3105
        %v4484 = vpack.c.bf16 %v3115, %v3107
        %v4485 = vpack.c.bf16 %v3125, %v3117
        %v4486 = vpack.c.bf16 %v3127, %v3119
        %v4487 = vpack.c.bf16 %v3129, %v3121
        %v4488 = vpack.c.bf16 %v3131, %v3123
        %v4489 = vpack.c.bf16 %v3141, %v3133
        %v4490 = vpack.c.bf16 %v3143, %v3135
        %v4491 = vpack.c.bf16 %v3145, %v3137
        %v4492 = vpack.c.bf16 %v3147, %v3139
        %v4493 = vpack.c.bf16 %v3157, %v3149
        %v4494 = vpack.c.bf16 %v3159, %v3151
        %v4495 = vpack.c.bf16 %v3161, %v3153
        %v4496 = vpack.c.bf16 %v3163, %v3155
        %v4497 = vpack.c.bf16 %v3173, %v3165
        %v4498 = vpack.c.bf16 %v3175, %v3167
        %v4499 = vpack.c.bf16 %v3177, %v3169
        %v4500 = vpack.c.bf16 %v3179, %v3171
        %v4501 = vpack.c.bf16 %v3189, %v3181
        %v4502 = vpack.c.bf16 %v3191, %v3183
        %v4503 = vpack.c.bf16 %v3193, %v3185
        %v4504 = vpack.c.bf16 %v3195, %v3187
        %v4505 = vpack.c.bf16 %v3205, %v3197
        %v4506 = vpack.c.bf16 %v3207, %v3199
        %v4507 = vpack.c.bf16 %v3209, %v3201
        %v4508 = vpack.c.bf16 %v3211, %v3203
        %v4509 = vpack.c.bf16 %v3221, %v3213
        %v4510 = vpack.c.bf16 %v3223, %v3215
        %v4511 = vpack.c.bf16 %v3225, %v3217
        %v4512 = vpack.c.bf16 %v3227, %v3219
        %v4513 = vpack.c.bf16 %v3237, %v3229
        %v4514 = vpack.c.bf16 %v3239, %v3231
        %v4515 = vpack.c.bf16 %v3241, %v3233
        %v4516 = vpack.c.bf16 %v3243, %v3235
        %v4517 = vpack.c.bf16 %v3253, %v3245
        %v4518 = vpack.c.bf16 %v3255, %v3247
        %v4519 = vpack.c.bf16 %v3257, %v3249
        %v4520 = vpack.c.bf16 %v3259, %v3251
        %v4521 = vpack.c.bf16 %v3269, %v3261
        %v4522 = vpack.c.bf16 %v3271, %v3263
        %v4523 = vpack.c.bf16 %v3273, %v3265
        %v4524 = vpack.c.bf16 %v3275, %v3267
        %v4525 = vpack.c.bf16 %v3285, %v3277
        %v4526 = vpack.c.bf16 %v3287, %v3279
        %v4527 = vpack.c.bf16 %v3289, %v3281
        %v4528 = vpack.c.bf16 %v3291, %v3283
        %v4529 = vpack.c.bf16 %v3301, %v3293
        %v4530 = vpack.c.bf16 %v3303, %v3295
        %v4531 = vpack.c.bf16 %v3305, %v3297
        %v4532 = vpack.c.bf16 %v3307, %v3299
        %v4533 = vpack.c.bf16 %v3317, %v3309
        %v4534 = vpack.c.bf16 %v3319, %v3311
        %v4535 = vpack.c.bf16 %v3321, %v3313
        %v4536 = vpack.c.bf16 %v3323, %v3315
        %v4537 = vpack.c.bf16 %v3333, %v3325
        %v4538 = vpack.c.bf16 %v3335, %v3327
        %v4539 = vpack.c.bf16 %v3337, %v3329
        %v4540 = vpack.c.bf16 %v3339, %v3331
        %v4541 = vpack.c.bf16 %v3349, %v3341
        %v4542 = vpack.c.bf16 %v3351, %v3343
        %v4543 = vpack.c.bf16 %v3353, %v3345
        %v4544 = vpack.c.bf16 %v3355, %v3347
        %v4545 = vpack.c.bf16 %v3365, %v3357
        %v4546 = vpack.c.bf16 %v3367, %v3359
        %v4547 = vpack.c.bf16 %v3369, %v3361
        %v4548 = vpack.c.bf16 %v3371, %v3363
        %v4549 = vpack.c.bf16 %v3381, %v3373
        %v4550 = vpack.c.bf16 %v3383, %v3375
        %v4551 = vpack.c.bf16 %v3385, %v3377
        %v4552 = vpack.c.bf16 %v3387, %v3379
        %v4553 = vpack.c.bf16 %v3397, %v3389
        %v4554 = vpack.c.bf16 %v3399, %v3391
        %v4555 = vpack.c.bf16 %v3401, %v3393
        %v4556 = vpack.c.bf16 %v3403, %v3395
        %v4621 = vunpack.c.l.b16 %v584
        %v4622 = vunpack.c.l.b16 %v585
        %v4623 = vunpack.c.l.b16 %v586
        %v4624 = vunpack.c.l.b16 %v587
        %v4625 = vunpack.c.l.b16 %v588
        %v4626 = vunpack.c.l.b16 %v589
        %v4627 = vunpack.c.l.b16 %v590
        %v4628 = vunpack.c.l.b16 %v591
        %v4629 = vunpack.c.l.b16 %v592
        %v4630 = vunpack.c.l.b16 %v593
        %v4631 = vunpack.c.l.b16 %v594
        %v4632 = vunpack.c.l.b16 %v595
        %v4633 = vunpack.c.l.b16 %v596
        %v4634 = vunpack.c.l.b16 %v597
        %v4635 = vunpack.c.l.b16 %v598
        %v4636 = vunpack.c.l.b16 %v599
        %v4637 = vunpack.c.l.b16 %v600
        %v4638 = vunpack.c.l.b16 %v601
        %v4639 = vunpack.c.l.b16 %v602
        %v4640 = vunpack.c.l.b16 %v603
        %v4641 = vunpack.c.l.b16 %v604
        %v4642 = vunpack.c.l.b16 %v605
        %v4643 = vunpack.c.l.b16 %v606
        %v4644 = vunpack.c.l.b16 %v607
        %v4645 = vunpack.c.l.b16 %v608
        %v4646 = vunpack.c.l.b16 %v609
        %v4647 = vunpack.c.l.b16 %v610
        %v4648 = vunpack.c.l.b16 %v611
        %v4649 = vunpack.c.l.b16 %v612
        %v4650 = vunpack.c.l.b16 %v613
        %v4651 = vunpack.c.l.b16 %v614
        %v4652 = vunpack.c.l.b16 %v615
        %v4653 = vunpack.c.l.b16 %v616
        %v4654 = vunpack.c.l.b16 %v617
        %v4655 = vunpack.c.l.b16 %v618
        %v4656 = vunpack.c.l.b16 %v619
        %v4657 = vunpack.c.l.b16 %v620
        %v4658 = vunpack.c.l.b16 %v621
        %v4659 = vunpack.c.l.b16 %v622
        %v4660 = vunpack.c.l.b16 %v623
        %v4661 = vunpack.c.l.b16 %v624
        %v4662 = vunpack.c.l.b16 %v625
        %v4663 = vunpack.c.l.b16 %v626
        %v4664 = vunpack.c.l.b16 %v627
        %v4665 = vunpack.c.l.b16 %v628
        %v4666 = vunpack.c.l.b16 %v629
        %v4667 = vunpack.c.l.b16 %v630
        %v4668 = vunpack.c.l.b16 %v631
        %v4669 = vunpack.c.l.b16 %v632
        %v4670 = vunpack.c.l.b16 %v633
        %v4671 = vunpack.c.l.b16 %v634
        %v4672 = vunpack.c.l.b16 %v635
        %v4673 = vunpack.c.l.b16 %v636
        %v4674 = vunpack.c.l.b16 %v637
        %v4675 = vunpack.c.l.b16 %v638
        %v4676 = vunpack.c.l.b16 %v639
        %v4677 = vunpack.c.l.b16 %v640
        %v4678 = vunpack.c.l.b16 %v641
        %v4679 = vunpack.c.l.b16 %v642
        %v4680 = vunpack.c.l.b16 %v643
        %v4681 = vunpack.c.l.b16 %v644
        %v4682 = vunpack.c.l.b16 %v645
        %v4683 = vunpack.c.l.b16 %v646
        %v4684 = vunpack.c.l.b16 %v647
        %v4685 = vpack.c.b16 %v4622, %v4621
        %v4686 = vpack.c.b16 %v4624, %v4623
        %v4687 = vpack.c.b16 %v4626, %v4625
        %v4688 = vpack.c.b16 %v4628, %v4627
        %v4689 = vpack.c.b16 %v4630, %v4629
        %v4690 = vpack.c.b16 %v4632, %v4631
        %v4691 = vpack.c.b16 %v4634, %v4633
        %v4692 = vpack.c.b16 %v4636, %v4635
        %v4693 = vpack.c.b16 %v4638, %v4637
        %v4694 = vpack.c.b16 %v4640, %v4639
        %v4695 = vpack.c.b16 %v4642, %v4641
        %v4696 = vpack.c.b16 %v4644, %v4643
        %v4697 = vpack.c.b16 %v4646, %v4645
        %v4698 = vpack.c.b16 %v4648, %v4647
        %v4699 = vpack.c.b16 %v4650, %v4649
        %v4700 = vpack.c.b16 %v4652, %v4651
        %v4701 = vpack.c.b16 %v4654, %v4653
        %v4702 = vpack.c.b16 %v4656, %v4655
        %v4703 = vpack.c.b16 %v4658, %v4657
        %v4704 = vpack.c.b16 %v4660, %v4659
        %v4705 = vpack.c.b16 %v4662, %v4661
        %v4706 = vpack.c.b16 %v4664, %v4663
        %v4707 = vpack.c.b16 %v4666, %v4665
        %v4708 = vpack.c.b16 %v4668, %v4667
        %v4709 = vpack.c.b16 %v4670, %v4669
        %v4710 = vpack.c.b16 %v4672, %v4671
        %v4711 = vpack.c.b16 %v4674, %v4673
        %v4712 = vpack.c.b16 %v4676, %v4675
        %v4713 = vpack.c.b16 %v4678, %v4677
        %v4714 = vpack.c.b16 %v4680, %v4679
        %v4715 = vpack.c.b16 %v4682, %v4681
        %v4716 = vpack.c.b16 %v4684, %v4683
        %4749 = vmatpush.bf16.msra.mxu0 %v4692
        %4750 = vmatpush.bf16.msra.mxu0 %v4691
        %4751 = vmatpush.bf16.msra.mxu0 %v4690
        %4752 = vmatpush.bf16.msra.mxu0 %v4689
        %4753 = vmatpush.bf16.msra.mxu0 %v4688
        %4754 = vmatpush.bf16.msra.mxu0 %v4687
        %4755 = vmatpush.bf16.msra.mxu0 %v4686
        %4756 = vmatpush.bf16.msra.mxu0 %v4685
        %4757 = vmatmul.bf16.gmra.mxu0 %v4429
        %v4758 = vpop.f32.mrf.mxu0
        %v4759 = vadd.f32 0.0, %v4758
        %v4760 = vpop.f32.mrf.mxu0
        %v4761 = vadd.f32 0.0, %v4760
        %4762 = vmatmul.bf16.gmra.mxu0 %v4433
        %v4763 = vpop.f32.mrf.mxu0
        %v4764 = vadd.f32 0.0, %v4763
        %v4765 = vpop.f32.mrf.mxu0
        %v4766 = vadd.f32 0.0, %v4765
        %4767 = vmatmul.bf16.gmra.mxu0 %v4437
        %v4768 = vpop.f32.mrf.mxu0
        %v4769 = vadd.f32 0.0, %v4768
        %v4770 = vpop.f32.mrf.mxu0
        %v4771 = vadd.f32 0.0, %v4770
        %4772 = vmatmul.bf16.gmra.mxu0 %v4441
        %v4773 = vpop.f32.mrf.mxu0
        %v4774 = vadd.f32 0.0, %v4773
        %v4775 = vpop.f32.mrf.mxu0
        %v4776 = vadd.f32 0.0, %v4775
        %4777 = vmatmul.bf16.gmra.mxu0 %v4445
        %v4778 = vpop.f32.mrf.mxu0
        %v4779 = vadd.f32 0.0, %v4778
        %v4780 = vpop.f32.mrf.mxu0
        %v4781 = vadd.f32 0.0, %v4780
        %4782 = vmatmul.bf16.gmra.mxu0 %v4449
        %v4783 = vpop.f32.mrf.mxu0
        %v4784 = vadd.f32 0.0, %v4783
        %v4785 = vpop.f32.mrf.mxu0
        %v4786 = vadd.f32 0.0, %v4785
        %4787 = vmatmul.bf16.gmra.mxu0 %v4453
        %v4788 = vpop.f32.mrf.mxu0
        %v4789 = vadd.f32 0.0, %v4788
        %v4790 = vpop.f32.mrf.mxu0
        %v4791 = vadd.f32 0.0, %v4790
        %4792 = vmatmul.bf16.gmra.mxu0 %v4457
        %v4793 = vpop.f32.mrf.mxu0
        %v4794 = vadd.f32 0.0, %v4793
        %v4795 = vpop.f32.mrf.mxu0
        %v4796 = vadd.f32 0.0, %v4795
        %4797 = vmatmul.bf16.gmra.mxu0 %v4461
        %v4798 = vpop.f32.mrf.mxu0
        %v4799 = vadd.f32 0.0, %v4798
        %v4800 = vpop.f32.mrf.mxu0
        %v4801 = vadd.f32 0.0, %v4800
        %4802 = vmatmul.bf16.gmra.mxu0 %v4465
        %v4803 = vpop.f32.mrf.mxu0
        %v4804 = vadd.f32 0.0, %v4803
        %v4805 = vpop.f32.mrf.mxu0
        %v4806 = vadd.f32 0.0, %v4805
        %4807 = vmatmul.bf16.gmra.mxu0 %v4469
        %v4808 = vpop.f32.mrf.mxu0
        %v4809 = vadd.f32 0.0, %v4808
        %v4810 = vpop.f32.mrf.mxu0
        %v4811 = vadd.f32 0.0, %v4810
        %4812 = vmatmul.bf16.gmra.mxu0 %v4473
        %v4813 = vpop.f32.mrf.mxu0
        %v4814 = vadd.f32 0.0, %v4813
        %v4815 = vpop.f32.mrf.mxu0
        %v4816 = vadd.f32 0.0, %v4815
        %4817 = vmatmul.bf16.gmra.mxu0 %v4477
        %v4818 = vpop.f32.mrf.mxu0
        %v4819 = vadd.f32 0.0, %v4818
        %v4820 = vpop.f32.mrf.mxu0
        %v4821 = vadd.f32 0.0, %v4820
        %4822 = vmatmul.bf16.gmra.mxu0 %v4481
        %v4823 = vpop.f32.mrf.mxu0
        %v4824 = vadd.f32 0.0, %v4823
        %v4825 = vpop.f32.mrf.mxu0
        %v4826 = vadd.f32 0.0, %v4825
        %4827 = vmatmul.bf16.gmra.mxu0 %v4485
        %v4828 = vpop.f32.mrf.mxu0
        %v4829 = vadd.f32 0.0, %v4828
        %v4830 = vpop.f32.mrf.mxu0
        %v4831 = vadd.f32 0.0, %v4830
        %4832 = vmatmul.bf16.gmra.mxu0 %v4489
        %v4833 = vpop.f32.mrf.mxu0
        %v4834 = vadd.f32 0.0, %v4833
        %v4835 = vpop.f32.mrf.mxu0
        %v4836 = vadd.f32 0.0, %v4835
        %4837 = vmatmul.bf16.gmra.mxu0 %v4493
        %v4838 = vpop.f32.mrf.mxu0
        %v4839 = vadd.f32 0.0, %v4838
        %v4840 = vpop.f32.mrf.mxu0
        %v4841 = vadd.f32 0.0, %v4840
        %4842 = vmatmul.bf16.gmra.mxu0 %v4497
        %v4843 = vpop.f32.mrf.mxu0
        %v4844 = vadd.f32 0.0, %v4843
        %v4845 = vpop.f32.mrf.mxu0
        %v4846 = vadd.f32 0.0, %v4845
        %4847 = vmatmul.bf16.gmra.mxu0 %v4501
        %v4848 = vpop.f32.mrf.mxu0
        %v4849 = vadd.f32 0.0, %v4848
        %v4850 = vpop.f32.mrf.mxu0
        %v4851 = vadd.f32 0.0, %v4850
        %4852 = vmatmul.bf16.gmra.mxu0 %v4505
        %v4853 = vpop.f32.mrf.mxu0
        %v4854 = vadd.f32 0.0, %v4853
        %v4855 = vpop.f32.mrf.mxu0
        %v4856 = vadd.f32 0.0, %v4855
        %4857 = vmatmul.bf16.gmra.mxu0 %v4509
        %v4858 = vpop.f32.mrf.mxu0
        %v4859 = vadd.f32 0.0, %v4858
        %v4860 = vpop.f32.mrf.mxu0
        %v4861 = vadd.f32 0.0, %v4860
        %4862 = vmatmul.bf16.gmra.mxu0 %v4513
        %v4863 = vpop.f32.mrf.mxu0
        %v4864 = vadd.f32 0.0, %v4863
        %v4865 = vpop.f32.mrf.mxu0
        %v4866 = vadd.f32 0.0, %v4865
        %4867 = vmatmul.bf16.gmra.mxu0 %v4517
        %v4868 = vpop.f32.mrf.mxu0
        %v4869 = vadd.f32 0.0, %v4868
        %v4870 = vpop.f32.mrf.mxu0
        %v4871 = vadd.f32 0.0, %v4870
        %4872 = vmatmul.bf16.gmra.mxu0 %v4521
        %v4873 = vpop.f32.mrf.mxu0
        %v4874 = vadd.f32 0.0, %v4873
        %v4875 = vpop.f32.mrf.mxu0
        %v4876 = vadd.f32 0.0, %v4875
        %4877 = vmatmul.bf16.gmra.mxu0 %v4525
        %v4878 = vpop.f32.mrf.mxu0
        %v4879 = vadd.f32 0.0, %v4878
        %v4880 = vpop.f32.mrf.mxu0
        %v4881 = vadd.f32 0.0, %v4880
        %4882 = vmatmul.bf16.gmra.mxu0 %v4529
        %v4883 = vpop.f32.mrf.mxu0
        %v4884 = vadd.f32 0.0, %v4883
        %v4885 = vpop.f32.mrf.mxu0
        %v4886 = vadd.f32 0.0, %v4885
        %4887 = vmatmul.bf16.gmra.mxu0 %v4533
        %v4888 = vpop.f32.mrf.mxu0
        %v4889 = vadd.f32 0.0, %v4888
        %v4890 = vpop.f32.mrf.mxu0
        %v4891 = vadd.f32 0.0, %v4890
        %4892 = vmatmul.bf16.gmra.mxu0 %v4537
        %v4893 = vpop.f32.mrf.mxu0
        %v4894 = vadd.f32 0.0, %v4893
        %v4895 = vpop.f32.mrf.mxu0
        %v4896 = vadd.f32 0.0, %v4895
        %4897 = vmatmul.bf16.gmra.mxu0 %v4541
        %v4898 = vpop.f32.mrf.mxu0
        %v4899 = vadd.f32 0.0, %v4898
        %v4900 = vpop.f32.mrf.mxu0
        %v4901 = vadd.f32 0.0, %v4900
        %4902 = vmatmul.bf16.gmra.mxu0 %v4545
        %v4903 = vpop.f32.mrf.mxu0
        %v4904 = vadd.f32 0.0, %v4903
        %v4905 = vpop.f32.mrf.mxu0
        %v4906 = vadd.f32 0.0, %v4905
        %4907 = vmatmul.bf16.gmra.mxu0 %v4549
        %v4908 = vpop.f32.mrf.mxu0
        %v4909 = vadd.f32 0.0, %v4908
        %v4910 = vpop.f32.mrf.mxu0
        %v4911 = vadd.f32 0.0, %v4910
        %4912 = vmatmul.bf16.gmra.mxu0 %v4553
        %v4913 = vpop.f32.mrf.mxu0
        %v4914 = vadd.f32 0.0, %v4913
        %v4915 = vpop.f32.mrf.mxu0
        %v4916 = vadd.f32 0.0, %v4915
        %4917 = vdwg.mxu0
        %4918 = vmatpush.bf16.msra.mxu0 %v4700
        %4919 = vmatpush.bf16.msra.mxu0 %v4699
        %4920 = vmatpush.bf16.msra.mxu0 %v4698
        %4921 = vmatpush.bf16.msra.mxu0 %v4697
        %4922 = vmatpush.bf16.msra.mxu0 %v4696
        %4923 = vmatpush.bf16.msra.mxu0 %v4695
        %4924 = vmatpush.bf16.msra.mxu0 %v4694
        %4925 = vmatpush.bf16.msra.mxu0 %v4693
        %4926 = vmatmul.bf16.gmra.mxu0 %v4430
        %v4927 = vpop.f32.mrf.mxu0
        %v4928 = vadd.f32 %v4759, %v4927
        %v4929 = vpop.f32.mrf.mxu0
        %v4930 = vadd.f32 %v4761, %v4929
        %4931 = vmatmul.bf16.gmra.mxu0 %v4434
        %v4932 = vpop.f32.mrf.mxu0
        %v4933 = vadd.f32 %v4764, %v4932
        %v4934 = vpop.f32.mrf.mxu0
        %v4935 = vadd.f32 %v4766, %v4934
        %4936 = vmatmul.bf16.gmra.mxu0 %v4438
        %v4937 = vpop.f32.mrf.mxu0
        %v4938 = vadd.f32 %v4769, %v4937
        %v4939 = vpop.f32.mrf.mxu0
        %v4940 = vadd.f32 %v4771, %v4939
        %4941 = vmatmul.bf16.gmra.mxu0 %v4442
        %v4942 = vpop.f32.mrf.mxu0
        %v4943 = vadd.f32 %v4774, %v4942
        %v4944 = vpop.f32.mrf.mxu0
        %v4945 = vadd.f32 %v4776, %v4944
        %4946 = vmatmul.bf16.gmra.mxu0 %v4446
        %v4947 = vpop.f32.mrf.mxu0
        %v4948 = vadd.f32 %v4779, %v4947
        %v4949 = vpop.f32.mrf.mxu0
        %v4950 = vadd.f32 %v4781, %v4949
        %4951 = vmatmul.bf16.gmra.mxu0 %v4450
        %v4952 = vpop.f32.mrf.mxu0
        %v4953 = vadd.f32 %v4784, %v4952
        %v4954 = vpop.f32.mrf.mxu0
        %v4955 = vadd.f32 %v4786, %v4954
        %4956 = vmatmul.bf16.gmra.mxu0 %v4454
        %v4957 = vpop.f32.mrf.mxu0
        %v4958 = vadd.f32 %v4789, %v4957
        %v4959 = vpop.f32.mrf.mxu0
        %v4960 = vadd.f32 %v4791, %v4959
        %4961 = vmatmul.bf16.gmra.mxu0 %v4458
        %v4962 = vpop.f32.mrf.mxu0
        %v4963 = vadd.f32 %v4794, %v4962
        %v4964 = vpop.f32.mrf.mxu0
        %v4965 = vadd.f32 %v4796, %v4964
        %4966 = vmatmul.bf16.gmra.mxu0 %v4462
        %v4967 = vpop.f32.mrf.mxu0
        %v4968 = vadd.f32 %v4799, %v4967
        %v4969 = vpop.f32.mrf.mxu0
        %v4970 = vadd.f32 %v4801, %v4969
        %4971 = vmatmul.bf16.gmra.mxu0 %v4466
        %v4972 = vpop.f32.mrf.mxu0
        %v4973 = vadd.f32 %v4804, %v4972
        %v4974 = vpop.f32.mrf.mxu0
        %v4975 = vadd.f32 %v4806, %v4974
        %4976 = vmatmul.bf16.gmra.mxu0 %v4470
        %v4977 = vpop.f32.mrf.mxu0
        %v4978 = vadd.f32 %v4809, %v4977
        %v4979 = vpop.f32.mrf.mxu0
        %v4980 = vadd.f32 %v4811, %v4979
        %4981 = vmatmul.bf16.gmra.mxu0 %v4474
        %v4982 = vpop.f32.mrf.mxu0
        %v4983 = vadd.f32 %v4814, %v4982
        %v4984 = vpop.f32.mrf.mxu0
        %v4985 = vadd.f32 %v4816, %v4984
        %4986 = vmatmul.bf16.gmra.mxu0 %v4478
        %v4987 = vpop.f32.mrf.mxu0
        %v4988 = vadd.f32 %v4819, %v4987
        %v4989 = vpop.f32.mrf.mxu0
        %v4990 = vadd.f32 %v4821, %v4989
        %4991 = vmatmul.bf16.gmra.mxu0 %v4482
        %v4992 = vpop.f32.mrf.mxu0
        %v4993 = vadd.f32 %v4824, %v4992
        %v4994 = vpop.f32.mrf.mxu0
        %v4995 = vadd.f32 %v4826, %v4994
        %4996 = vmatmul.bf16.gmra.mxu0 %v4486
        %v4997 = vpop.f32.mrf.mxu0
        %v4998 = vadd.f32 %v4829, %v4997
        %v4999 = vpop.f32.mrf.mxu0
        %v5000 = vadd.f32 %v4831, %v4999
        %5001 = vmatmul.bf16.gmra.mxu0 %v4490
        %v5002 = vpop.f32.mrf.mxu0
        %v5003 = vadd.f32 %v4834, %v5002
        %v5004 = vpop.f32.mrf.mxu0
        %v5005 = vadd.f32 %v4836, %v5004
        %5006 = vmatmul.bf16.gmra.mxu0 %v4494
        %v5007 = vpop.f32.mrf.mxu0
        %v5008 = vadd.f32 %v4839, %v5007
        %v5009 = vpop.f32.mrf.mxu0
        %v5010 = vadd.f32 %v4841, %v5009
        %5011 = vmatmul.bf16.gmra.mxu0 %v4498
        %v5012 = vpop.f32.mrf.mxu0
        %v5013 = vadd.f32 %v4844, %v5012
        %v5014 = vpop.f32.mrf.mxu0
        %v5015 = vadd.f32 %v4846, %v5014
        %5016 = vmatmul.bf16.gmra.mxu0 %v4502
        %v5017 = vpop.f32.mrf.mxu0
        %v5018 = vadd.f32 %v4849, %v5017
        %v5019 = vpop.f32.mrf.mxu0
        %v5020 = vadd.f32 %v4851, %v5019
        %5021 = vmatmul.bf16.gmra.mxu0 %v4506
        %v5022 = vpop.f32.mrf.mxu0
        %v5023 = vadd.f32 %v4854, %v5022
        %v5024 = vpop.f32.mrf.mxu0
        %v5025 = vadd.f32 %v4856, %v5024
        %5026 = vmatmul.bf16.gmra.mxu0 %v4510
        %v5027 = vpop.f32.mrf.mxu0
        %v5028 = vadd.f32 %v4859, %v5027
        %v5029 = vpop.f32.mrf.mxu0
        %v5030 = vadd.f32 %v4861, %v5029
        %5031 = vmatmul.bf16.gmra.mxu0 %v4514
        %v5032 = vpop.f32.mrf.mxu0
        %v5033 = vadd.f32 %v4864, %v5032
        %v5034 = vpop.f32.mrf.mxu0
        %v5035 = vadd.f32 %v4866, %v5034
        %5036 = vmatmul.bf16.gmra.mxu0 %v4518
        %v5037 = vpop.f32.mrf.mxu0
        %v5038 = vadd.f32 %v4869, %v5037
        %v5039 = vpop.f32.mrf.mxu0
        %v5040 = vadd.f32 %v4871, %v5039
        %5041 = vmatmul.bf16.gmra.mxu0 %v4522
        %v5042 = vpop.f32.mrf.mxu0
        %v5043 = vadd.f32 %v4874, %v5042
        %v5044 = vpop.f32.mrf.mxu0
        %v5045 = vadd.f32 %v4876, %v5044
        %5046 = vmatmul.bf16.gmra.mxu0 %v4526
        %v5047 = vpop.f32.mrf.mxu0
        %v5048 = vadd.f32 %v4879, %v5047
        %v5049 = vpop.f32.mrf.mxu0
        %v5050 = vadd.f32 %v4881, %v5049
        %5051 = vmatmul.bf16.gmra.mxu0 %v4530
        %v5052 = vpop.f32.mrf.mxu0
        %v5053 = vadd.f32 %v4884, %v5052
        %v5054 = vpop.f32.mrf.mxu0
        %v5055 = vadd.f32 %v4886, %v5054
        %5056 = vmatmul.bf16.gmra.mxu0 %v4534
        %v5057 = vpop.f32.mrf.mxu0
        %v5058 = vadd.f32 %v4889, %v5057
        %v5059 = vpop.f32.mrf.mxu0
        %v5060 = vadd.f32 %v4891, %v5059
        %5061 = vmatmul.bf16.gmra.mxu0 %v4538
        %v5062 = vpop.f32.mrf.mxu0
        %v5063 = vadd.f32 %v4894, %v5062
        %v5064 = vpop.f32.mrf.mxu0
        %v5065 = vadd.f32 %v4896, %v5064
        %5066 = vmatmul.bf16.gmra.mxu0 %v4542
        %v5067 = vpop.f32.mrf.mxu0
        %v5068 = vadd.f32 %v4899, %v5067
        %v5069 = vpop.f32.mrf.mxu0
        %v5070 = vadd.f32 %v4901, %v5069
        %5071 = vmatmul.bf16.gmra.mxu0 %v4546
        %v5072 = vpop.f32.mrf.mxu0
        %v5073 = vadd.f32 %v4904, %v5072
        %v5074 = vpop.f32.mrf.mxu0
        %v5075 = vadd.f32 %v4906, %v5074
        %5076 = vmatmul.bf16.gmra.mxu0 %v4550
        %v5077 = vpop.f32.mrf.mxu0
        %v5078 = vadd.f32 %v4909, %v5077
        %v5079 = vpop.f32.mrf.mxu0
        %v5080 = vadd.f32 %v4911, %v5079
        %5081 = vmatmul.bf16.gmra.mxu0 %v4554
        %v5082 = vpop.f32.mrf.mxu0
        %v5083 = vadd.f32 %v4914, %v5082
        %v5084 = vpop.f32.mrf.mxu0
        %v5085 = vadd.f32 %v4916, %v5084
        %5086 = vdwg.mxu0
        %5087 = vmatpush.bf16.msra.mxu0 %v4708
        %5088 = vmatpush.bf16.msra.mxu0 %v4707
        %5089 = vmatpush.bf16.msra.mxu0 %v4706
        %5090 = vmatpush.bf16.msra.mxu0 %v4705
        %5091 = vmatpush.bf16.msra.mxu0 %v4704
        %5092 = vmatpush.bf16.msra.mxu0 %v4703
        %5093 = vmatpush.bf16.msra.mxu0 %v4702
        %5094 = vmatpush.bf16.msra.mxu0 %v4701
        %5095 = vmatmul.bf16.gmra.mxu0 %v4431
        %v5096 = vpop.f32.mrf.mxu0
        %v5097 = vadd.f32 %v4928, %v5096
        %v5098 = vpop.f32.mrf.mxu0
        %v5099 = vadd.f32 %v4930, %v5098
        %5100 = vmatmul.bf16.gmra.mxu0 %v4435
        %v5101 = vpop.f32.mrf.mxu0
        %v5102 = vadd.f32 %v4933, %v5101
        %v5103 = vpop.f32.mrf.mxu0
        %v5104 = vadd.f32 %v4935, %v5103
        %5105 = vmatmul.bf16.gmra.mxu0 %v4439
        %v5106 = vpop.f32.mrf.mxu0
        %v5107 = vadd.f32 %v4938, %v5106
        %v5108 = vpop.f32.mrf.mxu0
        %v5109 = vadd.f32 %v4940, %v5108
        %5110 = vmatmul.bf16.gmra.mxu0 %v4443
        %v5111 = vpop.f32.mrf.mxu0
        %v5112 = vadd.f32 %v4943, %v5111
        %v5113 = vpop.f32.mrf.mxu0
        %v5114 = vadd.f32 %v4945, %v5113
        %5115 = vmatmul.bf16.gmra.mxu0 %v4447
        %v5116 = vpop.f32.mrf.mxu0
        %v5117 = vadd.f32 %v4948, %v5116
        %v5118 = vpop.f32.mrf.mxu0
        %v5119 = vadd.f32 %v4950, %v5118
        %5120 = vmatmul.bf16.gmra.mxu0 %v4451
        %v5121 = vpop.f32.mrf.mxu0
        %v5122 = vadd.f32 %v4953, %v5121
        %v5123 = vpop.f32.mrf.mxu0
        %v5124 = vadd.f32 %v4955, %v5123
        %5125 = vmatmul.bf16.gmra.mxu0 %v4455
        %v5126 = vpop.f32.mrf.mxu0
        %v5127 = vadd.f32 %v4958, %v5126
        %v5128 = vpop.f32.mrf.mxu0
        %v5129 = vadd.f32 %v4960, %v5128
        %5130 = vmatmul.bf16.gmra.mxu0 %v4459
        %v5131 = vpop.f32.mrf.mxu0
        %v5132 = vadd.f32 %v4963, %v5131
        %v5133 = vpop.f32.mrf.mxu0
        %v5134 = vadd.f32 %v4965, %v5133
        %5135 = vmatmul.bf16.gmra.mxu0 %v4463
        %v5136 = vpop.f32.mrf.mxu0
        %v5137 = vadd.f32 %v4968, %v5136
        %v5138 = vpop.f32.mrf.mxu0
        %v5139 = vadd.f32 %v4970, %v5138
        %5140 = vmatmul.bf16.gmra.mxu0 %v4467
        %v5141 = vpop.f32.mrf.mxu0
        %v5142 = vadd.f32 %v4973, %v5141
        %v5143 = vpop.f32.mrf.mxu0
        %v5144 = vadd.f32 %v4975, %v5143
        %5145 = vmatmul.bf16.gmra.mxu0 %v4471
        %v5146 = vpop.f32.mrf.mxu0
        %v5147 = vadd.f32 %v4978, %v5146
        %v5148 = vpop.f32.mrf.mxu0
        %v5149 = vadd.f32 %v4980, %v5148
        %5150 = vmatmul.bf16.gmra.mxu0 %v4475
        %v5151 = vpop.f32.mrf.mxu0
        %v5152 = vadd.f32 %v4983, %v5151
        %v5153 = vpop.f32.mrf.mxu0
        %v5154 = vadd.f32 %v4985, %v5153
        %5155 = vmatmul.bf16.gmra.mxu0 %v4479
        %v5156 = vpop.f32.mrf.mxu0
        %v5157 = vadd.f32 %v4988, %v5156
        %v5158 = vpop.f32.mrf.mxu0
        %v5159 = vadd.f32 %v4990, %v5158
        %5160 = vmatmul.bf16.gmra.mxu0 %v4483
        %v5161 = vpop.f32.mrf.mxu0
        %v5162 = vadd.f32 %v4993, %v5161
        %v5163 = vpop.f32.mrf.mxu0
        %v5164 = vadd.f32 %v4995, %v5163
        %5165 = vmatmul.bf16.gmra.mxu0 %v4487
        %v5166 = vpop.f32.mrf.mxu0
        %v5167 = vadd.f32 %v4998, %v5166
        %v5168 = vpop.f32.mrf.mxu0
        %v5169 = vadd.f32 %v5000, %v5168
        %5170 = vmatmul.bf16.gmra.mxu0 %v4491
        %v5171 = vpop.f32.mrf.mxu0
        %v5172 = vadd.f32 %v5003, %v5171
        %v5173 = vpop.f32.mrf.mxu0
        %v5174 = vadd.f32 %v5005, %v5173
        %5175 = vmatmul.bf16.gmra.mxu0 %v4495
        %v5176 = vpop.f32.mrf.mxu0
        %v5177 = vadd.f32 %v5008, %v5176
        %v5178 = vpop.f32.mrf.mxu0
        %v5179 = vadd.f32 %v5010, %v5178
        %5180 = vmatmul.bf16.gmra.mxu0 %v4499
        %v5181 = vpop.f32.mrf.mxu0
        %v5182 = vadd.f32 %v5013, %v5181
        %v5183 = vpop.f32.mrf.mxu0
        %v5184 = vadd.f32 %v5015, %v5183
        %5185 = vmatmul.bf16.gmra.mxu0 %v4503
        %v5186 = vpop.f32.mrf.mxu0
        %v5187 = vadd.f32 %v5018, %v5186
        %v5188 = vpop.f32.mrf.mxu0
        %v5189 = vadd.f32 %v5020, %v5188
        %5190 = vmatmul.bf16.gmra.mxu0 %v4507
        %v5191 = vpop.f32.mrf.mxu0
        %v5192 = vadd.f32 %v5023, %v5191
        %v5193 = vpop.f32.mrf.mxu0
        %v5194 = vadd.f32 %v5025, %v5193
        %5195 = vmatmul.bf16.gmra.mxu0 %v4511
        %v5196 = vpop.f32.mrf.mxu0
        %v5197 = vadd.f32 %v5028, %v5196
        %v5198 = vpop.f32.mrf.mxu0
        %v5199 = vadd.f32 %v5030, %v5198
        %5200 = vmatmul.bf16.gmra.mxu0 %v4515
        %v5201 = vpop.f32.mrf.mxu0
        %v5202 = vadd.f32 %v5033, %v5201
        %v5203 = vpop.f32.mrf.mxu0
        %v5204 = vadd.f32 %v5035, %v5203
        %5205 = vmatmul.bf16.gmra.mxu0 %v4519
        %v5206 = vpop.f32.mrf.mxu0
        %v5207 = vadd.f32 %v5038, %v5206
        %v5208 = vpop.f32.mrf.mxu0
        %v5209 = vadd.f32 %v5040, %v5208
        %5210 = vmatmul.bf16.gmra.mxu0 %v4523
        %v5211 = vpop.f32.mrf.mxu0
        %v5212 = vadd.f32 %v5043, %v5211
        %v5213 = vpop.f32.mrf.mxu0
        %v5214 = vadd.f32 %v5045, %v5213
        %5215 = vmatmul.bf16.gmra.mxu0 %v4527
        %v5216 = vpop.f32.mrf.mxu0
        %v5217 = vadd.f32 %v5048, %v5216
        %v5218 = vpop.f32.mrf.mxu0
        %v5219 = vadd.f32 %v5050, %v5218
        %5220 = vmatmul.bf16.gmra.mxu0 %v4531
        %v5221 = vpop.f32.mrf.mxu0
        %v5222 = vadd.f32 %v5053, %v5221
        %v5223 = vpop.f32.mrf.mxu0
        %v5224 = vadd.f32 %v5055, %v5223
        %5225 = vmatmul.bf16.gmra.mxu0 %v4535
        %v5226 = vpop.f32.mrf.mxu0
        %v5227 = vadd.f32 %v5058, %v5226
        %v5228 = vpop.f32.mrf.mxu0
        %v5229 = vadd.f32 %v5060, %v5228
        %5230 = vmatmul.bf16.gmra.mxu0 %v4539
        %v5231 = vpop.f32.mrf.mxu0
        %v5232 = vadd.f32 %v5063, %v5231
        %v5233 = vpop.f32.mrf.mxu0
        %v5234 = vadd.f32 %v5065, %v5233
        %5235 = vmatmul.bf16.gmra.mxu0 %v4543
        %v5236 = vpop.f32.mrf.mxu0
        %v5237 = vadd.f32 %v5068, %v5236
        %v5238 = vpop.f32.mrf.mxu0
        %v5239 = vadd.f32 %v5070, %v5238
        %5240 = vmatmul.bf16.gmra.mxu0 %v4547
        %v5241 = vpop.f32.mrf.mxu0
        %v5242 = vadd.f32 %v5073, %v5241
        %v5243 = vpop.f32.mrf.mxu0
        %v5244 = vadd.f32 %v5075, %v5243
        %5245 = vmatmul.bf16.gmra.mxu0 %v4551
        %v5246 = vpop.f32.mrf.mxu0
        %v5247 = vadd.f32 %v5078, %v5246
        %v5248 = vpop.f32.mrf.mxu0
        %v5249 = vadd.f32 %v5080, %v5248
        %5250 = vmatmul.bf16.gmra.mxu0 %v4555
        %v5251 = vpop.f32.mrf.mxu0
        %v5252 = vadd.f32 %v5083, %v5251
        %v5253 = vpop.f32.mrf.mxu0
        %v5254 = vadd.f32 %v5085, %v5253
        %5255 = vdwg.mxu0
        %5256 = vmatpush.bf16.msra.mxu0 %v4716
        %5257 = vmatpush.bf16.msra.mxu0 %v4715
        %5258 = vmatpush.bf16.msra.mxu0 %v4714
        %5259 = vmatpush.bf16.msra.mxu0 %v4713
        %5260 = vmatpush.bf16.msra.mxu0 %v4712
        %5261 = vmatpush.bf16.msra.mxu0 %v4711
        %5262 = vmatpush.bf16.msra.mxu0 %v4710
        %5263 = vmatpush.bf16.msra.mxu0 %v4709
        %5264 = vmatmul.bf16.gmra.mxu0 %v4432
        %v5265 = vpop.f32.mrf.mxu0
        %v5266 = vadd.f32 %v5097, %v5265
        %v5267 = vpop.f32.mrf.mxu0
        %v5268 = vadd.f32 %v5099, %v5267
        %5269 = vmatmul.bf16.gmra.mxu0 %v4436
        %v5270 = vpop.f32.mrf.mxu0
        %v5271 = vadd.f32 %v5102, %v5270
        %v5272 = vpop.f32.mrf.mxu0
        %v5273 = vadd.f32 %v5104, %v5272
        %5274 = vmatmul.bf16.gmra.mxu0 %v4440
        %v5275 = vpop.f32.mrf.mxu0
        %v5276 = vadd.f32 %v5107, %v5275
        %v5277 = vpop.f32.mrf.mxu0
        %v5278 = vadd.f32 %v5109, %v5277
        %5279 = vmatmul.bf16.gmra.mxu0 %v4444
        %v5280 = vpop.f32.mrf.mxu0
        %v5281 = vadd.f32 %v5112, %v5280
        %v5282 = vpop.f32.mrf.mxu0
        %v5283 = vadd.f32 %v5114, %v5282
        %5284 = vmatmul.bf16.gmra.mxu0 %v4448
        %v5285 = vpop.f32.mrf.mxu0
        %v5286 = vadd.f32 %v5117, %v5285
        %v5287 = vpop.f32.mrf.mxu0
        %v5288 = vadd.f32 %v5119, %v5287
        %5289 = vmatmul.bf16.gmra.mxu0 %v4452
        %v5290 = vpop.f32.mrf.mxu0
        %v5291 = vadd.f32 %v5122, %v5290
        %v5292 = vpop.f32.mrf.mxu0
        %v5293 = vadd.f32 %v5124, %v5292
        %5294 = vmatmul.bf16.gmra.mxu0 %v4456
        %v5295 = vpop.f32.mrf.mxu0
        %v5296 = vadd.f32 %v5127, %v5295
        %v5297 = vpop.f32.mrf.mxu0
        %v5298 = vadd.f32 %v5129, %v5297
        %5299 = vmatmul.bf16.gmra.mxu0 %v4460
        %v5300 = vpop.f32.mrf.mxu0
        %v5301 = vadd.f32 %v5132, %v5300
        %v5302 = vpop.f32.mrf.mxu0
        %v5303 = vadd.f32 %v5134, %v5302
        %5304 = vmatmul.bf16.gmra.mxu0 %v4464
        %v5305 = vpop.f32.mrf.mxu0
        %v5306 = vadd.f32 %v5137, %v5305
        %v5307 = vpop.f32.mrf.mxu0
        %v5308 = vadd.f32 %v5139, %v5307
        %5309 = vmatmul.bf16.gmra.mxu0 %v4468
        %v5310 = vpop.f32.mrf.mxu0
        %v5311 = vadd.f32 %v5142, %v5310
        %v5312 = vpop.f32.mrf.mxu0
        %v5313 = vadd.f32 %v5144, %v5312
        %5314 = vmatmul.bf16.gmra.mxu0 %v4472
        %v5315 = vpop.f32.mrf.mxu0
        %v5316 = vadd.f32 %v5147, %v5315
        %v5317 = vpop.f32.mrf.mxu0
        %v5318 = vadd.f32 %v5149, %v5317
        %5319 = vmatmul.bf16.gmra.mxu0 %v4476
        %v5320 = vpop.f32.mrf.mxu0
        %v5321 = vadd.f32 %v5152, %v5320
        %v5322 = vpop.f32.mrf.mxu0
        %v5323 = vadd.f32 %v5154, %v5322
        %5324 = vmatmul.bf16.gmra.mxu0 %v4480
        %v5325 = vpop.f32.mrf.mxu0
        %v5326 = vadd.f32 %v5157, %v5325
        %v5327 = vpop.f32.mrf.mxu0
        %v5328 = vadd.f32 %v5159, %v5327
        %5329 = vmatmul.bf16.gmra.mxu0 %v4484
        %v5330 = vpop.f32.mrf.mxu0
        %v5331 = vadd.f32 %v5162, %v5330
        %v5332 = vpop.f32.mrf.mxu0
        %v5333 = vadd.f32 %v5164, %v5332
        %5334 = vmatmul.bf16.gmra.mxu0 %v4488
        %v5335 = vpop.f32.mrf.mxu0
        %v5336 = vadd.f32 %v5167, %v5335
        %v5337 = vpop.f32.mrf.mxu0
        %v5338 = vadd.f32 %v5169, %v5337
        %5339 = vmatmul.bf16.gmra.mxu0 %v4492
        %v5340 = vpop.f32.mrf.mxu0
        %v5341 = vadd.f32 %v5172, %v5340
        %v5342 = vpop.f32.mrf.mxu0
        %v5343 = vadd.f32 %v5174, %v5342
        %5344 = vmatmul.bf16.gmra.mxu0 %v4496
        %v5345 = vpop.f32.mrf.mxu0
        %v5346 = vadd.f32 %v5177, %v5345
        %v5347 = vpop.f32.mrf.mxu0
        %v5348 = vadd.f32 %v5179, %v5347
        %5349 = vmatmul.bf16.gmra.mxu0 %v4500
        %v5350 = vpop.f32.mrf.mxu0
        %v5351 = vadd.f32 %v5182, %v5350
        %v5352 = vpop.f32.mrf.mxu0
        %v5353 = vadd.f32 %v5184, %v5352
        %5354 = vmatmul.bf16.gmra.mxu0 %v4504
        %v5355 = vpop.f32.mrf.mxu0
        %v5356 = vadd.f32 %v5187, %v5355
        %v5357 = vpop.f32.mrf.mxu0
        %v5358 = vadd.f32 %v5189, %v5357
        %5359 = vmatmul.bf16.gmra.mxu0 %v4508
        %v5360 = vpop.f32.mrf.mxu0
        %v5361 = vadd.f32 %v5192, %v5360
        %v5362 = vpop.f32.mrf.mxu0
        %v5363 = vadd.f32 %v5194, %v5362
        %5364 = vmatmul.bf16.gmra.mxu0 %v4512
        %v5365 = vpop.f32.mrf.mxu0
        %v5366 = vadd.f32 %v5197, %v5365
        %v5367 = vpop.f32.mrf.mxu0
        %v5368 = vadd.f32 %v5199, %v5367
        %5369 = vmatmul.bf16.gmra.mxu0 %v4516
        %v5370 = vpop.f32.mrf.mxu0
        %v5371 = vadd.f32 %v5202, %v5370
        %v5372 = vpop.f32.mrf.mxu0
        %v5373 = vadd.f32 %v5204, %v5372
        %5374 = vmatmul.bf16.gmra.mxu0 %v4520
        %v5375 = vpop.f32.mrf.mxu0
        %v5376 = vadd.f32 %v5207, %v5375
        %v5377 = vpop.f32.mrf.mxu0
        %v5378 = vadd.f32 %v5209, %v5377
        %5379 = vmatmul.bf16.gmra.mxu0 %v4524
        %v5380 = vpop.f32.mrf.mxu0
        %v5381 = vadd.f32 %v5212, %v5380
        %v5382 = vpop.f32.mrf.mxu0
        %v5383 = vadd.f32 %v5214, %v5382
        %5384 = vmatmul.bf16.gmra.mxu0 %v4528
        %v5385 = vpop.f32.mrf.mxu0
        %v5386 = vadd.f32 %v5217, %v5385
        %v5387 = vpop.f32.mrf.mxu0
        %v5388 = vadd.f32 %v5219, %v5387
        %5389 = vmatmul.bf16.gmra.mxu0 %v4532
        %v5390 = vpop.f32.mrf.mxu0
        %v5391 = vadd.f32 %v5222, %v5390
        %v5392 = vpop.f32.mrf.mxu0
        %v5393 = vadd.f32 %v5224, %v5392
        %5394 = vmatmul.bf16.gmra.mxu0 %v4536
        %v5395 = vpop.f32.mrf.mxu0
        %v5396 = vadd.f32 %v5227, %v5395
        %v5397 = vpop.f32.mrf.mxu0
        %v5398 = vadd.f32 %v5229, %v5397
        %5399 = vmatmul.bf16.gmra.mxu0 %v4540
        %v5400 = vpop.f32.mrf.mxu0
        %v5401 = vadd.f32 %v5232, %v5400
        %v5402 = vpop.f32.mrf.mxu0
        %v5403 = vadd.f32 %v5234, %v5402
        %5404 = vmatmul.bf16.gmra.mxu0 %v4544
        %v5405 = vpop.f32.mrf.mxu0
        %v5406 = vadd.f32 %v5237, %v5405
        %v5407 = vpop.f32.mrf.mxu0
        %v5408 = vadd.f32 %v5239, %v5407
        %5409 = vmatmul.bf16.gmra.mxu0 %v4548
        %v5410 = vpop.f32.mrf.mxu0
        %v5411 = vadd.f32 %v5242, %v5410
        %v5412 = vpop.f32.mrf.mxu0
        %v5413 = vadd.f32 %v5244, %v5412
        %5414 = vmatmul.bf16.gmra.mxu0 %v4552
        %v5415 = vpop.f32.mrf.mxu0
        %v5416 = vadd.f32 %v5247, %v5415
        %v5417 = vpop.f32.mrf.mxu0
        %v5418 = vadd.f32 %v5249, %v5417
        %5419 = vmatmul.bf16.gmra.mxu0 %v4556
        %v5420 = vpop.f32.mrf.mxu0
        %v5421 = vadd.f32 %v5252, %v5420
        %v5422 = vpop.f32.mrf.mxu0
        %v5423 = vadd.f32 %v5254, %v5422
        %5424 = vdwg.mxu0
        %v5425 = vadd.f32 %v4365, %v5266
        %v5426 = vadd.f32 %v4366, %v5268
        %v5427 = vadd.f32 %v4367, %v5271
        %v5428 = vadd.f32 %v4368, %v5273
        %v5429 = vadd.f32 %v4369, %v5276
        %v5430 = vadd.f32 %v4370, %v5278
        %v5431 = vadd.f32 %v4371, %v5281
        %v5432 = vadd.f32 %v4372, %v5283
        %v5433 = vadd.f32 %v4373, %v5286
        %v5434 = vadd.f32 %v4374, %v5288
        %v5435 = vadd.f32 %v4375, %v5291
        %v5436 = vadd.f32 %v4376, %v5293
        %v5437 = vadd.f32 %v4377, %v5296
        %v5438 = vadd.f32 %v4378, %v5298
        %v5439 = vadd.f32 %v4379, %v5301
        %v5440 = vadd.f32 %v4380, %v5303
        %v5441 = vadd.f32 %v4381, %v5306
        %v5442 = vadd.f32 %v4382, %v5308
        %v5443 = vadd.f32 %v4383, %v5311
        %v5444 = vadd.f32 %v4384, %v5313
        %v5445 = vadd.f32 %v4385, %v5316
        %v5446 = vadd.f32 %v4386, %v5318
        %v5447 = vadd.f32 %v4387, %v5321
        %v5448 = vadd.f32 %v4388, %v5323
        %v5449 = vadd.f32 %v4389, %v5326
        %v5450 = vadd.f32 %v4390, %v5328
        %v5451 = vadd.f32 %v4391, %v5331
        %v5452 = vadd.f32 %v4392, %v5333
        %v5453 = vadd.f32 %v4393, %v5336
        %v5454 = vadd.f32 %v4394, %v5338
        %v5455 = vadd.f32 %v4395, %v5341
        %v5456 = vadd.f32 %v4396, %v5343
        %v5457 = vadd.f32 %v4397, %v5346
        %v5458 = vadd.f32 %v4398, %v5348
        %v5459 = vadd.f32 %v4399, %v5351
        %v5460 = vadd.f32 %v4400, %v5353
        %v5461 = vadd.f32 %v4401, %v5356
        %v5462 = vadd.f32 %v4402, %v5358
        %v5463 = vadd.f32 %v4403, %v5361
        %v5464 = vadd.f32 %v4404, %v5363
        %v5465 = vadd.f32 %v4405, %v5366
        %v5466 = vadd.f32 %v4406, %v5368
        %v5467 = vadd.f32 %v4407, %v5371
        %v5468 = vadd.f32 %v4408, %v5373
        %v5469 = vadd.f32 %v4409, %v5376
        %v5470 = vadd.f32 %v4410, %v5378
        %v5471 = vadd.f32 %v4411, %v5381
        %v5472 = vadd.f32 %v4412, %v5383
        %v5473 = vadd.f32 %v4413, %v5386
        %v5474 = vadd.f32 %v4414, %v5388
        %v5475 = vadd.f32 %v4415, %v5391
        %v5476 = vadd.f32 %v4416, %v5393
        %v5477 = vadd.f32 %v4417, %v5396
        %v5478 = vadd.f32 %v4418, %v5398
        %v5479 = vadd.f32 %v4419, %v5401
        %v5480 = vadd.f32 %v4420, %v5403
        %v5481 = vadd.f32 %v4421, %v5406
        %v5482 = vadd.f32 %v4422, %v5408
        %v5483 = vadd.f32 %v4423, %v5411
        %v5484 = vadd.f32 %v4424, %v5413
        %v5485 = vadd.f32 %v4425, %v5416
        %v5486 = vadd.f32 %v4426, %v5418
        %v5487 = vadd.f32 %v4427, %v5421
        %v5488 = vadd.f32 %v4428, %v5423
        %vm5489 = vcmask 130048
        %5490 = vst.msk [vmem:[#allocation4] sm:$0xff] %vm5489, %v5425
        %5491 = vst.msk [vmem:[#allocation4 + $0x8] sm:$0xff] %vm5489, %v5426
        %5492 = vst.msk [vmem:[#allocation4 + $0x10] sm:$0xff] %vm5489, %v5427
        %5493 = vst.msk [vmem:[#allocation4 + $0x18] sm:$0xff] %vm5489, %v5428
        %5494 = vst.msk [vmem:[#allocation4 + $0x20] sm:$0xff] %vm5489, %v5429
        %5495 = vst.msk [vmem:[#allocation4 + $0x28] sm:$0xff] %vm5489, %v5430
        %5496 = vst.msk [vmem:[#allocation4 + $0x30] sm:$0xff] %vm5489, %v5431
        %5497 = vst.msk [vmem:[#allocation4 + $0x38] sm:$0xff] %vm5489, %v5432
        %5498 = vst.msk [vmem:[#allocation4 + $0x40] sm:$0xff] %vm5489, %v5433
        %5499 = vst.msk [vmem:[#allocation4 + $0x48] sm:$0xff] %vm5489, %v5434
        %5500 = vst.msk [vmem:[#allocation4 + $0x50] sm:$0xff] %vm5489, %v5435
        %5501 = vst.msk [vmem:[#allocation4 + $0x58] sm:$0xff] %vm5489, %v5436
        %5502 = vst.msk [vmem:[#allocation4 + $0x60] sm:$0xff] %vm5489, %v5437
        %5503 = vst.msk [vmem:[#allocation4 + $0x68] sm:$0xff] %vm5489, %v5438
        %5504 = vst.msk [vmem:[#allocation4 + $0x70] sm:$0xff] %vm5489, %v5439
        %5505 = vst.msk [vmem:[#allocation4 + $0x78] sm:$0xff] %vm5489, %v5440
        %5506 = vst.msk [vmem:[#allocation4 + $0x80] sm:$0xff] %vm5489, %v5441
        %5507 = vst.msk [vmem:[#allocation4 + $0x88] sm:$0xff] %vm5489, %v5442
        %5508 = vst.msk [vmem:[#allocation4 + $0x90] sm:$0xff] %vm5489, %v5443
        %5509 = vst.msk [vmem:[#allocation4 + $0x98] sm:$0xff] %vm5489, %v5444
        %5510 = vst.msk [vmem:[#allocation4 + $0xa0] sm:$0xff] %vm5489, %v5445
        %5511 = vst.msk [vmem:[#allocation4 + $0xa8] sm:$0xff] %vm5489, %v5446
        %5512 = vst.msk [vmem:[#allocation4 + $0xb0] sm:$0xff] %vm5489, %v5447
        %5513 = vst.msk [vmem:[#allocation4 + $0xb8] sm:$0xff] %vm5489, %v5448
        %5514 = vst.msk [vmem:[#allocation4 + $0xc0] sm:$0xff] %vm5489, %v5449
        %5515 = vst.msk [vmem:[#allocation4 + $0xc8] sm:$0xff] %vm5489, %v5450
        %5516 = vst.msk [vmem:[#allocation4 + $0xd0] sm:$0xff] %vm5489, %v5451
        %5517 = vst.msk [vmem:[#allocation4 + $0xd8] sm:$0xff] %vm5489, %v5452
        %5518 = vst.msk [vmem:[#allocation4 + $0xe0] sm:$0xff] %vm5489, %v5453
        %5519 = vst.msk [vmem:[#allocation4 + $0xe8] sm:$0xff] %vm5489, %v5454
        %5520 = vst.msk [vmem:[#allocation4 + $0xf0] sm:$0xff] %vm5489, %v5455
        %5521 = vst.msk [vmem:[#allocation4 + $0xf8] sm:$0xff] %vm5489, %v5456
        %5522 = vst.msk [vmem:[#allocation4 + $0x100] sm:$0xff] %vm5489, %v5457
        %5523 = vst.msk [vmem:[#allocation4 + $0x108] sm:$0xff] %vm5489, %v5458
        %5524 = vst.msk [vmem:[#allocation4 + $0x110] sm:$0xff] %vm5489, %v5459
        %5525 = vst.msk [vmem:[#allocation4 + $0x118] sm:$0xff] %vm5489, %v5460
        %5526 = vst.msk [vmem:[#allocation4 + $0x120] sm:$0xff] %vm5489, %v5461
        %5527 = vst.msk [vmem:[#allocation4 + $0x128] sm:$0xff] %vm5489, %v5462
        %5528 = vst.msk [vmem:[#allocation4 + $0x130] sm:$0xff] %vm5489, %v5463
        %5529 = vst.msk [vmem:[#allocation4 + $0x138] sm:$0xff] %vm5489, %v5464
        %5530 = vst.msk [vmem:[#allocation4 + $0x140] sm:$0xff] %vm5489, %v5465
        %5531 = vst.msk [vmem:[#allocation4 + $0x148] sm:$0xff] %vm5489, %v5466
        %5532 = vst.msk [vmem:[#allocation4 + $0x150] sm:$0xff] %vm5489, %v5467
        %5533 = vst.msk [vmem:[#allocation4 + $0x158] sm:$0xff] %vm5489, %v5468
        %5534 = vst.msk [vmem:[#allocation4 + $0x160] sm:$0xff] %vm5489, %v5469
        %5535 = vst.msk [vmem:[#allocation4 + $0x168] sm:$0xff] %vm5489, %v5470
        %5536 = vst.msk [vmem:[#allocation4 + $0x170] sm:$0xff] %vm5489, %v5471
        %5537 = vst.msk [vmem:[#allocation4 + $0x178] sm:$0xff] %vm5489, %v5472
        %5538 = vst.msk [vmem:[#allocation4 + $0x180] sm:$0xff] %vm5489, %v5473
        %5539 = vst.msk [vmem:[#allocation4 + $0x188] sm:$0xff] %vm5489, %v5474
        %5540 = vst.msk [vmem:[#allocation4 + $0x190] sm:$0xff] %vm5489, %v5475
        %5541 = vst.msk [vmem:[#allocation4 + $0x198] sm:$0xff] %vm5489, %v5476
        %5542 = vst.msk [vmem:[#allocation4 + $0x1a0] sm:$0xff] %vm5489, %v5477
        %5543 = vst.msk [vmem:[#allocation4 + $0x1a8] sm:$0xff] %vm5489, %v5478
        %5544 = vst.msk [vmem:[#allocation4 + $0x1b0] sm:$0xff] %vm5489, %v5479
        %5545 = vst.msk [vmem:[#allocation4 + $0x1b8] sm:$0xff] %vm5489, %v5480
        %5546 = vst.msk [vmem:[#allocation4 + $0x1c0] sm:$0xff] %vm5489, %v5481
        %5547 = vst.msk [vmem:[#allocation4 + $0x1c8] sm:$0xff] %vm5489, %v5482
        %5548 = vst.msk [vmem:[#allocation4 + $0x1d0] sm:$0xff] %vm5489, %v5483
        %5549 = vst.msk [vmem:[#allocation4 + $0x1d8] sm:$0xff] %vm5489, %v5484
        %5550 = vst.msk [vmem:[#allocation4 + $0x1e0] sm:$0xff] %vm5489, %v5485
        %5551 = vst.msk [vmem:[#allocation4 + $0x1e8] sm:$0xff] %vm5489, %v5486
        %5552 = vst.msk [vmem:[#allocation4 + $0x1f0] sm:$0xff] %vm5489, %v5487
        %5553 = vst.msk [vmem:[#allocation4 + $0x1f8] sm:$0xff] %vm5489, %v5488
        %5554 = vst.msk [vmem:[#allocation2] sm:$0xff] %vm3916, %v2060
        %5555 = vst.msk [vmem:[#allocation2 + $0x8] sm:$0xff] %vm3916, %v2061
        %5556 = vst.msk [vmem:[#allocation2 + $0x10] sm:$0xff] %vm3916, %v2062
        %5557 = vst.msk [vmem:[#allocation2 + $0x18] sm:$0xff] %vm3916, %v2063
        %5558 = vst.msk [vmem:[#allocation2 + $0x20] sm:$0xff] %vm3916, %v2064
        %5559 = vst.msk [vmem:[#allocation2 + $0x28] sm:$0xff] %vm3916, %v2065
        %5560 = vst.msk [vmem:[#allocation2 + $0x30] sm:$0xff] %vm3916, %v2066
        %5561 = vst.msk [vmem:[#allocation2 + $0x38] sm:$0xff] %vm3916, %v2067
        %5562 = vst.msk [vmem:[#allocation2 + $0x40] sm:$0xff] %vm3916, %v2068
        %5563 = vst.msk [vmem:[#allocation2 + $0x48] sm:$0xff] %vm3916, %v2069
        %5564 = vst.msk [vmem:[#allocation2 + $0x50] sm:$0xff] %vm3916, %v2070
        %5565 = vst.msk [vmem:[#allocation2 + $0x58] sm:$0xff] %vm3916, %v2071
        %5566 = vst.msk [vmem:[#allocation2 + $0x60] sm:$0xff] %vm3916, %v2072
        %5567 = vst.msk [vmem:[#allocation2 + $0x68] sm:$0xff] %vm3916, %v2073
        %5568 = vst.msk [vmem:[#allocation2 + $0x70] sm:$0xff] %vm3916, %v2074
        %5569 = vst.msk [vmem:[#allocation2 + $0x78] sm:$0xff] %vm3916, %v2075
        %5570 = vst.msk [vmem:[#allocation2 + $0x80] sm:$0xff] %vm3916, %v2076
        %5571 = vst.msk [vmem:[#allocation2 + $0x88] sm:$0xff] %vm3916, %v2077
        %5572 = vst.msk [vmem:[#allocation2 + $0x90] sm:$0xff] %vm3916, %v2078
        %5573 = vst.msk [vmem:[#allocation2 + $0x98] sm:$0xff] %vm3916, %v2079
        %5574 = vst.msk [vmem:[#allocation2 + $0xa0] sm:$0xff] %vm3916, %v2080
        %5575 = vst.msk [vmem:[#allocation2 + $0xa8] sm:$0xff] %vm3916, %v2081
        %5576 = vst.msk [vmem:[#allocation2 + $0xb0] sm:$0xff] %vm3916, %v2082
        %5577 = vst.msk [vmem:[#allocation2 + $0xb8] sm:$0xff] %vm3916, %v2083
        %5578 = vst.msk [vmem:[#allocation2 + $0xc0] sm:$0xff] %vm3916, %v2084
        %5579 = vst.msk [vmem:[#allocation2 + $0xc8] sm:$0xff] %vm3916, %v2085
        %5580 = vst.msk [vmem:[#allocation2 + $0xd0] sm:$0xff] %vm3916, %v2086
        %5581 = vst.msk [vmem:[#allocation2 + $0xd8] sm:$0xff] %vm3916, %v2087
        %5582 = vst.msk [vmem:[#allocation2 + $0xe0] sm:$0xff] %vm3916, %v2088
        %5583 = vst.msk [vmem:[#allocation2 + $0xe8] sm:$0xff] %vm3916, %v2089
        %5584 = vst.msk [vmem:[#allocation2 + $0xf0] sm:$0xff] %vm3916, %v2090
        %5585 = vst.msk [vmem:[#allocation2 + $0xf8] sm:$0xff] %vm3916, %v2091
        %5586 = vst.msk [vmem:[#allocation2 + $0x100] sm:$0xff] %vm3916, %v2092
        %5587 = vst.msk [vmem:[#allocation2 + $0x108] sm:$0xff] %vm3916, %v2093
        %5588 = vst.msk [vmem:[#allocation2 + $0x110] sm:$0xff] %vm3916, %v2094
        %5589 = vst.msk [vmem:[#allocation2 + $0x118] sm:$0xff] %vm3916, %v2095
        %5590 = vst.msk [vmem:[#allocation2 + $0x120] sm:$0xff] %vm3916, %v2096
        %5591 = vst.msk [vmem:[#allocation2 + $0x128] sm:$0xff] %vm3916, %v2097
        %5592 = vst.msk [vmem:[#allocation2 + $0x130] sm:$0xff] %vm3916, %v2098
        %5593 = vst.msk [vmem:[#allocation2 + $0x138] sm:$0xff] %vm3916, %v2099
        %5594 = vst.msk [vmem:[#allocation2 + $0x140] sm:$0xff] %vm3916, %v2100
        %5595 = vst.msk [vmem:[#allocation2 + $0x148] sm:$0xff] %vm3916, %v2101
        %5596 = vst.msk [vmem:[#allocation2 + $0x150] sm:$0xff] %vm3916, %v2102
        %5597 = vst.msk [vmem:[#allocation2 + $0x158] sm:$0xff] %vm3916, %v2103
        %5598 = vst.msk [vmem:[#allocation2 + $0x160] sm:$0xff] %vm3916, %v2104
        %5599 = vst.msk [vmem:[#allocation2 + $0x168] sm:$0xff] %vm3916, %v2105
        %5600 = vst.msk [vmem:[#allocation2 + $0x170] sm:$0xff] %vm3916, %v2106
        %5601 = vst.msk [vmem:[#allocation2 + $0x178] sm:$0xff] %vm3916, %v2107
        %5602 = vst.msk [vmem:[#allocation2 + $0x180] sm:$0xff] %vm3916, %v2108
        %5603 = vst.msk [vmem:[#allocation2 + $0x188] sm:$0xff] %vm3916, %v2109
        %5604 = vst.msk [vmem:[#allocation2 + $0x190] sm:$0xff] %vm3916, %v2110
        %5605 = vst.msk [vmem:[#allocation2 + $0x198] sm:$0xff] %vm3916, %v2111
        %5606 = vst.msk [vmem:[#allocation2 + $0x1a0] sm:$0xff] %vm3916, %v2112
        %5607 = vst.msk [vmem:[#allocation2 + $0x1a8] sm:$0xff] %vm3916, %v2113
        %5608 = vst.msk [vmem:[#allocation2 + $0x1b0] sm:$0xff] %vm3916, %v2114
        %5609 = vst.msk [vmem:[#allocation2 + $0x1b8] sm:$0xff] %vm3916, %v2115
        %5610 = vst.msk [vmem:[#allocation2 + $0x1c0] sm:$0xff] %vm3916, %v2116
        %5611 = vst.msk [vmem:[#allocation2 + $0x1c8] sm:$0xff] %vm3916, %v2117
        %5612 = vst.msk [vmem:[#allocation2 + $0x1d0] sm:$0xff] %vm3916, %v2118
        %5613 = vst.msk [vmem:[#allocation2 + $0x1d8] sm:$0xff] %vm3916, %v2119
        %5614 = vst.msk [vmem:[#allocation2 + $0x1e0] sm:$0xff] %vm3916, %v2120
        %5615 = vst.msk [vmem:[#allocation2 + $0x1e8] sm:$0xff] %vm3916, %v2121
        %5616 = vst.msk [vmem:[#allocation2 + $0x1f0] sm:$0xff] %vm3916, %v2122
        %5617 = vst.msk [vmem:[#allocation2 + $0x1f8] sm:$0xff] %vm3916, %v2123
        %p5618 = scmp.eq.s32.totalorder %s27, 1
        // Predicated region
        $region41: #{tpu_custom_call.1} parent=31 // pred_check
          %p5619 = pneg %p5618
        $region42: #{tpu_custom_call.1} parent=31 // pred_check_branch
          %5621 = sbr.rel (%p5619) target = $region44
        $region43: #{tpu_custom_call.1} parent=31 // pred_region
          %v5622 = vld [vmem:[#allocation3] sm:$0xff]
          %v5623 = vld [vmem:[#allocation3 + $0x8] sm:$0xff]
          %v5624 = vld [vmem:[#allocation3 + $0x10] sm:$0xff]
          %v5625 = vld [vmem:[#allocation3 + $0x18] sm:$0xff]
          %v5626 = vld [vmem:[#allocation3 + $0x20] sm:$0xff]
          %v5627 = vld [vmem:[#allocation3 + $0x28] sm:$0xff]
          %v5628 = vld [vmem:[#allocation3 + $0x30] sm:$0xff]
          %v5629 = vld [vmem:[#allocation3 + $0x38] sm:$0xff]
          %v5630 = vld [vmem:[#allocation3 + $0x40] sm:$0xff]
          %v5631 = vld [vmem:[#allocation3 + $0x48] sm:$0xff]
          %v5632 = vld [vmem:[#allocation3 + $0x50] sm:$0xff]
          %v5633 = vld [vmem:[#allocation3 + $0x58] sm:$0xff]
          %v5634 = vld [vmem:[#allocation3 + $0x60] sm:$0xff]
          %v5635 = vld [vmem:[#allocation3 + $0x68] sm:$0xff]
          %v5636 = vld [vmem:[#allocation3 + $0x70] sm:$0xff]
          %v5637 = vld [vmem:[#allocation3 + $0x78] sm:$0xff]
          %v5638 = vld [vmem:[#allocation3 + $0x80] sm:$0xff]
          %v5639 = vld [vmem:[#allocation3 + $0x88] sm:$0xff]
          %v5640 = vld [vmem:[#allocation3 + $0x90] sm:$0xff]
          %v5641 = vld [vmem:[#allocation3 + $0x98] sm:$0xff]
          %v5642 = vld [vmem:[#allocation3 + $0xa0] sm:$0xff]
          %v5643 = vld [vmem:[#allocation3 + $0xa8] sm:$0xff]
          %v5644 = vld [vmem:[#allocation3 + $0xb0] sm:$0xff]
          %v5645 = vld [vmem:[#allocation3 + $0xb8] sm:$0xff]
          %v5646 = vld [vmem:[#allocation3 + $0xc0] sm:$0xff]
          %v5647 = vld [vmem:[#allocation3 + $0xc8] sm:$0xff]
          %v5648 = vld [vmem:[#allocation3 + $0xd0] sm:$0xff]
          %v5649 = vld [vmem:[#allocation3 + $0xd8] sm:$0xff]
          %v5650 = vld [vmem:[#allocation3 + $0xe0] sm:$0xff]
          %v5651 = vld [vmem:[#allocation3 + $0xe8] sm:$0xff]
          %v5652 = vld [vmem:[#allocation3 + $0xf0] sm:$0xff]
          %v5653 = vld [vmem:[#allocation3 + $0xf8] sm:$0xff]
          %v5654 = vld [vmem:[#allocation3 + $0x100] sm:$0xff]
          %v5655 = vld [vmem:[#allocation3 + $0x108] sm:$0xff]
          %v5656 = vld [vmem:[#allocation3 + $0x110] sm:$0xff]
          %v5657 = vld [vmem:[#allocation3 + $0x118] sm:$0xff]
          %v5658 = vld [vmem:[#allocation3 + $0x120] sm:$0xff]
          %v5659 = vld [vmem:[#allocation3 + $0x128] sm:$0xff]
          %v5660 = vld [vmem:[#allocation3 + $0x130] sm:$0xff]
          %v5661 = vld [vmem:[#allocation3 + $0x138] sm:$0xff]
          %v5662 = vld [vmem:[#allocation3 + $0x140] sm:$0xff]
          %v5663 = vld [vmem:[#allocation3 + $0x148] sm:$0xff]
          %v5664 = vld [vmem:[#allocation3 + $0x150] sm:$0xff]
          %v5665 = vld [vmem:[#allocation3 + $0x158] sm:$0xff]
          %v5666 = vld [vmem:[#allocation3 + $0x160] sm:$0xff]
          %v5667 = vld [vmem:[#allocation3 + $0x168] sm:$0xff]
          %v5668 = vld [vmem:[#allocation3 + $0x170] sm:$0xff]
          %v5669 = vld [vmem:[#allocation3 + $0x178] sm:$0xff]
          %v5670 = vld [vmem:[#allocation3 + $0x180] sm:$0xff]
          %v5671 = vld [vmem:[#allocation3 + $0x188] sm:$0xff]
          %v5672 = vld [vmem:[#allocation3 + $0x190] sm:$0xff]
          %v5673 = vld [vmem:[#allocation3 + $0x198] sm:$0xff]
          %v5674 = vld [vmem:[#allocation3 + $0x1a0] sm:$0xff]
          %v5675 = vld [vmem:[#allocation3 + $0x1a8] sm:$0xff]
          %v5676 = vld [vmem:[#allocation3 + $0x1b0] sm:$0xff]
          %v5677 = vld [vmem:[#allocation3 + $0x1b8] sm:$0xff]
          %v5678 = vld [vmem:[#allocation3 + $0x1c0] sm:$0xff]
          %v5679 = vld [vmem:[#allocation3 + $0x1c8] sm:$0xff]
          %v5680 = vld [vmem:[#allocation3 + $0x1d0] sm:$0xff]
          %v5681 = vld [vmem:[#allocation3 + $0x1d8] sm:$0xff]
          %v5682 = vld [vmem:[#allocation3 + $0x1e0] sm:$0xff]
          %v5683 = vld [vmem:[#allocation3 + $0x1e8] sm:$0xff]
          %v5684 = vld [vmem:[#allocation3 + $0x1f0] sm:$0xff]
          %v5685 = vld [vmem:[#allocation3 + $0x1f8] sm:$0xff]
          %v5686 = vrcp.pop %v5622
          %v5687 = vrcp.pop %v5623
          %v5688 = vrcp.pop %v5624
          %v5689 = vrcp.pop %v5625
          %v5690 = vrcp.pop %v5626
          %v5691 = vrcp.pop %v5627
          %v5692 = vrcp.pop %v5628
          %v5693 = vrcp.pop %v5629
          %v5694 = vrcp.pop %v5630
          %v5695 = vrcp.pop %v5631
          %v5696 = vrcp.pop %v5632
          %v5697 = vrcp.pop %v5633
          %v5698 = vrcp.pop %v5634
          %v5699 = vrcp.pop %v5635
          %v5700 = vrcp.pop %v5636
          %v5701 = vrcp.pop %v5637
          %v5702 = vrcp.pop %v5638
          %v5703 = vrcp.pop %v5639
          %v5704 = vrcp.pop %v5640
          %v5705 = vrcp.pop %v5641
          %v5706 = vrcp.pop %v5642
          %v5707 = vrcp.pop %v5643
          %v5708 = vrcp.pop %v5644
          %v5709 = vrcp.pop %v5645
          %v5710 = vrcp.pop %v5646
          %v5711 = vrcp.pop %v5647
          %v5712 = vrcp.pop %v5648
          %v5713 = vrcp.pop %v5649
          %v5714 = vrcp.pop %v5650
          %v5715 = vrcp.pop %v5651
          %v5716 = vrcp.pop %v5652
          %v5717 = vrcp.pop %v5653
          %v5718 = vrcp.pop %v5654
          %v5719 = vrcp.pop %v5655
          %v5720 = vrcp.pop %v5656
          %v5721 = vrcp.pop %v5657
          %v5722 = vrcp.pop %v5658
          %v5723 = vrcp.pop %v5659
          %v5724 = vrcp.pop %v5660
          %v5725 = vrcp.pop %v5661
          %v5726 = vrcp.pop %v5662
          %v5727 = vrcp.pop %v5663
          %v5728 = vrcp.pop %v5664
          %v5729 = vrcp.pop %v5665
          %v5730 = vrcp.pop %v5666
          %v5731 = vrcp.pop %v5667
          %v5732 = vrcp.pop %v5668
          %v5733 = vrcp.pop %v5669
          %v5734 = vrcp.pop %v5670
          %v5735 = vrcp.pop %v5671
          %v5736 = vrcp.pop %v5672
          %v5737 = vrcp.pop %v5673
          %v5738 = vrcp.pop %v5674
          %v5739 = vrcp.pop %v5675
          %v5740 = vrcp.pop %v5676
          %v5741 = vrcp.pop %v5677
          %v5742 = vrcp.pop %v5678
          %v5743 = vrcp.pop %v5679
          %v5744 = vrcp.pop %v5680
          %v5745 = vrcp.pop %v5681
          %v5746 = vrcp.pop %v5682
          %v5747 = vrcp.pop %v5683
          %v5748 = vrcp.pop %v5684
          %v5749 = vrcp.pop %v5685
          %v5750 = vld [vmem:[#allocation4] sm:$0xff]
          %v5751 = vld [vmem:[#allocation4 + $0x8] sm:$0xff]
          %v5752 = vld [vmem:[#allocation4 + $0x10] sm:$0xff]
          %v5753 = vld [vmem:[#allocation4 + $0x18] sm:$0xff]
          %v5754 = vld [vmem:[#allocation4 + $0x20] sm:$0xff]
          %v5755 = vld [vmem:[#allocation4 + $0x28] sm:$0xff]
          %v5756 = vld [vmem:[#allocation4 + $0x30] sm:$0xff]
          %v5757 = vld [vmem:[#allocation4 + $0x38] sm:$0xff]
          %v5758 = vld [vmem:[#allocation4 + $0x40] sm:$0xff]
          %v5759 = vld [vmem:[#allocation4 + $0x48] sm:$0xff]
          %v5760 = vld [vmem:[#allocation4 + $0x50] sm:$0xff]
          %v5761 = vld [vmem:[#allocation4 + $0x58] sm:$0xff]
          %v5762 = vld [vmem:[#allocation4 + $0x60] sm:$0xff]
          %v5763 = vld [vmem:[#allocation4 + $0x68] sm:$0xff]
          %v5764 = vld [vmem:[#allocation4 + $0x70] sm:$0xff]
          %v5765 = vld [vmem:[#allocation4 + $0x78] sm:$0xff]
          %v5766 = vld [vmem:[#allocation4 + $0x80] sm:$0xff]
          %v5767 = vld [vmem:[#allocation4 + $0x88] sm:$0xff]
          %v5768 = vld [vmem:[#allocation4 + $0x90] sm:$0xff]
          %v5769 = vld [vmem:[#allocation4 + $0x98] sm:$0xff]
          %v5770 = vld [vmem:[#allocation4 + $0xa0] sm:$0xff]
          %v5771 = vld [vmem:[#allocation4 + $0xa8] sm:$0xff]
          %v5772 = vld [vmem:[#allocation4 + $0xb0] sm:$0xff]
          %v5773 = vld [vmem:[#allocation4 + $0xb8] sm:$0xff]
          %v5774 = vld [vmem:[#allocation4 + $0xc0] sm:$0xff]
          %v5775 = vld [vmem:[#allocation4 + $0xc8] sm:$0xff]
          %v5776 = vld [vmem:[#allocation4 + $0xd0] sm:$0xff]
          %v5777 = vld [vmem:[#allocation4 + $0xd8] sm:$0xff]
          %v5778 = vld [vmem:[#allocation4 + $0xe0] sm:$0xff]
          %v5779 = vld [vmem:[#allocation4 + $0xe8] sm:$0xff]
          %v5780 = vld [vmem:[#allocation4 + $0xf0] sm:$0xff]
          %v5781 = vld [vmem:[#allocation4 + $0xf8] sm:$0xff]
          %v5782 = vld [vmem:[#allocation4 + $0x100] sm:$0xff]
          %v5783 = vld [vmem:[#allocation4 + $0x108] sm:$0xff]
          %v5784 = vld [vmem:[#allocation4 + $0x110] sm:$0xff]
          %v5785 = vld [vmem:[#allocation4 + $0x118] sm:$0xff]
          %v5786 = vld [vmem:[#allocation4 + $0x120] sm:$0xff]
          %v5787 = vld [vmem:[#allocation4 + $0x128] sm:$0xff]
          %v5788 = vld [vmem:[#allocation4 + $0x130] sm:$0xff]
          %v5789 = vld [vmem:[#allocation4 + $0x138] sm:$0xff]
          %v5790 = vld [vmem:[#allocation4 + $0x140] sm:$0xff]
          %v5791 = vld [vmem:[#allocation4 + $0x148] sm:$0xff]
          %v5792 = vld [vmem:[#allocation4 + $0x150] sm:$0xff]
          %v5793 = vld [vmem:[#allocation4 + $0x158] sm:$0xff]
          %v5794 = vld [vmem:[#allocation4 + $0x160] sm:$0xff]
          %v5795 = vld [vmem:[#allocation4 + $0x168] sm:$0xff]
          %v5796 = vld [vmem:[#allocation4 + $0x170] sm:$0xff]
          %v5797 = vld [vmem:[#allocation4 + $0x178] sm:$0xff]
          %v5798 = vld [vmem:[#allocation4 + $0x180] sm:$0xff]
          %v5799 = vld [vmem:[#allocation4 + $0x188] sm:$0xff]
          %v5800 = vld [vmem:[#allocation4 + $0x190] sm:$0xff]
          %v5801 = vld [vmem:[#allocation4 + $0x198] sm:$0xff]
          %v5802 = vld [vmem:[#allocation4 + $0x1a0] sm:$0xff]
          %v5803 = vld [vmem:[#allocation4 + $0x1a8] sm:$0xff]
          %v5804 = vld [vmem:[#allocation4 + $0x1b0] sm:$0xff]
          %v5805 = vld [vmem:[#allocation4 + $0x1b8] sm:$0xff]
          %v5806 = vld [vmem:[#allocation4 + $0x1c0] sm:$0xff]
          %v5807 = vld [vmem:[#allocation4 + $0x1c8] sm:$0xff]
          %v5808 = vld [vmem:[#allocation4 + $0x1d0] sm:$0xff]
          %v5809 = vld [vmem:[#allocation4 + $0x1d8] sm:$0xff]
          %v5810 = vld [vmem:[#allocation4 + $0x1e0] sm:$0xff]
          %v5811 = vld [vmem:[#allocation4 + $0x1e8] sm:$0xff]
          %v5812 = vld [vmem:[#allocation4 + $0x1f0] sm:$0xff]
          %v5813 = vld [vmem:[#allocation4 + $0x1f8] sm:$0xff]
          %5815 = vset.pattern.permute.xlu0 0
          %5816 = vperm.xlu0 %5815, %v5686
          %v5817 = vpop.permute.xlu0 %5816
          %5820 = vset.pattern.permute.xlu0 0
          %5821 = vperm.xlu0 %5820, %v5687
          %v5822 = vpop.permute.xlu0 %5821
          %5825 = vset.pattern.permute.xlu0 0
          %5826 = vperm.xlu0 %5825, %v5688
          %v5827 = vpop.permute.xlu0 %5826
          %5830 = vset.pattern.permute.xlu0 0
          %5831 = vperm.xlu0 %5830, %v5689
          %v5832 = vpop.permute.xlu0 %5831
          %5835 = vset.pattern.permute.xlu0 0
          %5836 = vperm.xlu0 %5835, %v5690
          %v5837 = vpop.permute.xlu0 %5836
          %5840 = vset.pattern.permute.xlu0 0
          %5841 = vperm.xlu0 %5840, %v5691
          %v5842 = vpop.permute.xlu0 %5841
          %5845 = vset.pattern.permute.xlu0 0
          %5846 = vperm.xlu0 %5845, %v5692
          %v5847 = vpop.permute.xlu0 %5846
          %5850 = vset.pattern.permute.xlu0 0
          %5851 = vperm.xlu0 %5850, %v5693
          %v5852 = vpop.permute.xlu0 %5851
          %5855 = vset.pattern.permute.xlu0 0
          %5856 = vperm.xlu0 %5855, %v5694
          %v5857 = vpop.permute.xlu0 %5856
          %5860 = vset.pattern.permute.xlu0 0
          %5861 = vperm.xlu0 %5860, %v5695
          %v5862 = vpop.permute.xlu0 %5861
          %5865 = vset.pattern.permute.xlu0 0
          %5866 = vperm.xlu0 %5865, %v5696
          %v5867 = vpop.permute.xlu0 %5866
          %5870 = vset.pattern.permute.xlu0 0
          %5871 = vperm.xlu0 %5870, %v5697
          %v5872 = vpop.permute.xlu0 %5871
          %5875 = vset.pattern.permute.xlu0 0
          %5876 = vperm.xlu0 %5875, %v5698
          %v5877 = vpop.permute.xlu0 %5876
          %5880 = vset.pattern.permute.xlu0 0
          %5881 = vperm.xlu0 %5880, %v5699
          %v5882 = vpop.permute.xlu0 %5881
          %5885 = vset.pattern.permute.xlu0 0
          %5886 = vperm.xlu0 %5885, %v5700
          %v5887 = vpop.permute.xlu0 %5886
          %5890 = vset.pattern.permute.xlu0 0
          %5891 = vperm.xlu0 %5890, %v5701
          %v5892 = vpop.permute.xlu0 %5891
          %5895 = vset.pattern.permute.xlu0 0
          %5896 = vperm.xlu0 %5895, %v5702
          %v5897 = vpop.permute.xlu0 %5896
          %5900 = vset.pattern.permute.xlu0 0
          %5901 = vperm.xlu0 %5900, %v5703
          %v5902 = vpop.permute.xlu0 %5901
          %5905 = vset.pattern.permute.xlu0 0
          %5906 = vperm.xlu0 %5905, %v5704
          %v5907 = vpop.permute.xlu0 %5906
          %5910 = vset.pattern.permute.xlu0 0
          %5911 = vperm.xlu0 %5910, %v5705
          %v5912 = vpop.permute.xlu0 %5911
          %5915 = vset.pattern.permute.xlu0 0
          %5916 = vperm.xlu0 %5915, %v5706
          %v5917 = vpop.permute.xlu0 %5916
          %5920 = vset.pattern.permute.xlu0 0
          %5921 = vperm.xlu0 %5920, %v5707
          %v5922 = vpop.permute.xlu0 %5921
          %5925 = vset.pattern.permute.xlu0 0
          %5926 = vperm.xlu0 %5925, %v5708
          %v5927 = vpop.permute.xlu0 %5926
          %5930 = vset.pattern.permute.xlu0 0
          %5931 = vperm.xlu0 %5930, %v5709
          %v5932 = vpop.permute.xlu0 %5931
          %5935 = vset.pattern.permute.xlu0 0
          %5936 = vperm.xlu0 %5935, %v5710
          %v5937 = vpop.permute.xlu0 %5936
          %5940 = vset.pattern.permute.xlu0 0
          %5941 = vperm.xlu0 %5940, %v5711
          %v5942 = vpop.permute.xlu0 %5941
          %5945 = vset.pattern.permute.xlu0 0
          %5946 = vperm.xlu0 %5945, %v5712
          %v5947 = vpop.permute.xlu0 %5946
          %5950 = vset.pattern.permute.xlu0 0
          %5951 = vperm.xlu0 %5950, %v5713
          %v5952 = vpop.permute.xlu0 %5951
          %5955 = vset.pattern.permute.xlu0 0
          %5956 = vperm.xlu0 %5955, %v5714
          %v5957 = vpop.permute.xlu0 %5956
          %5960 = vset.pattern.permute.xlu0 0
          %5961 = vperm.xlu0 %5960, %v5715
          %v5962 = vpop.permute.xlu0 %5961
          %5965 = vset.pattern.permute.xlu0 0
          %5966 = vperm.xlu0 %5965, %v5716
          %v5967 = vpop.permute.xlu0 %5966
          %5970 = vset.pattern.permute.xlu0 0
          %5971 = vperm.xlu0 %5970, %v5717
          %v5972 = vpop.permute.xlu0 %5971
          %5975 = vset.pattern.permute.xlu0 0
          %5976 = vperm.xlu0 %5975, %v5718
          %v5977 = vpop.permute.xlu0 %5976
          %5980 = vset.pattern.permute.xlu0 0
          %5981 = vperm.xlu0 %5980, %v5719
          %v5982 = vpop.permute.xlu0 %5981
          %5985 = vset.pattern.permute.xlu0 0
          %5986 = vperm.xlu0 %5985, %v5720
          %v5987 = vpop.permute.xlu0 %5986
          %5990 = vset.pattern.permute.xlu0 0
          %5991 = vperm.xlu0 %5990, %v5721
          %v5992 = vpop.permute.xlu0 %5991
          %5995 = vset.pattern.permute.xlu0 0
          %5996 = vperm.xlu0 %5995, %v5722
          %v5997 = vpop.permute.xlu0 %5996
          %6000 = vset.pattern.permute.xlu0 0
          %6001 = vperm.xlu0 %6000, %v5723
          %v6002 = vpop.permute.xlu0 %6001
          %6005 = vset.pattern.permute.xlu0 0
          %6006 = vperm.xlu0 %6005, %v5724
          %v6007 = vpop.permute.xlu0 %6006
          %6010 = vset.pattern.permute.xlu0 0
          %6011 = vperm.xlu0 %6010, %v5725
          %v6012 = vpop.permute.xlu0 %6011
          %6015 = vset.pattern.permute.xlu0 0
          %6016 = vperm.xlu0 %6015, %v5726
          %v6017 = vpop.permute.xlu0 %6016
          %6020 = vset.pattern.permute.xlu0 0
          %6021 = vperm.xlu0 %6020, %v5727
          %v6022 = vpop.permute.xlu0 %6021
          %6025 = vset.pattern.permute.xlu0 0
          %6026 = vperm.xlu0 %6025, %v5728
          %v6027 = vpop.permute.xlu0 %6026
          %6030 = vset.pattern.permute.xlu0 0
          %6031 = vperm.xlu0 %6030, %v5729
          %v6032 = vpop.permute.xlu0 %6031
          %6035 = vset.pattern.permute.xlu0 0
          %6036 = vperm.xlu0 %6035, %v5730
          %v6037 = vpop.permute.xlu0 %6036
          %6040 = vset.pattern.permute.xlu0 0
          %6041 = vperm.xlu0 %6040, %v5731
          %v6042 = vpop.permute.xlu0 %6041
          %6045 = vset.pattern.permute.xlu0 0
          %6046 = vperm.xlu0 %6045, %v5732
          %v6047 = vpop.permute.xlu0 %6046
          %6050 = vset.pattern.permute.xlu0 0
          %6051 = vperm.xlu0 %6050, %v5733
          %v6052 = vpop.permute.xlu0 %6051
          %6055 = vset.pattern.permute.xlu0 0
          %6056 = vperm.xlu0 %6055, %v5734
          %v6057 = vpop.permute.xlu0 %6056
          %6060 = vset.pattern.permute.xlu0 0
          %6061 = vperm.xlu0 %6060, %v5735
          %v6062 = vpop.permute.xlu0 %6061
          %6065 = vset.pattern.permute.xlu0 0
          %6066 = vperm.xlu0 %6065, %v5736
          %v6067 = vpop.permute.xlu0 %6066
          %6070 = vset.pattern.permute.xlu0 0
          %6071 = vperm.xlu0 %6070, %v5737
          %v6072 = vpop.permute.xlu0 %6071
          %6075 = vset.pattern.permute.xlu0 0
          %6076 = vperm.xlu0 %6075, %v5738
          %v6077 = vpop.permute.xlu0 %6076
          %6080 = vset.pattern.permute.xlu0 0
          %6081 = vperm.xlu0 %6080, %v5739
          %v6082 = vpop.permute.xlu0 %6081
          %6085 = vset.pattern.permute.xlu0 0
          %6086 = vperm.xlu0 %6085, %v5740
          %v6087 = vpop.permute.xlu0 %6086
          %6090 = vset.pattern.permute.xlu0 0
          %6091 = vperm.xlu0 %6090, %v5741
          %v6092 = vpop.permute.xlu0 %6091
          %6095 = vset.pattern.permute.xlu0 0
          %6096 = vperm.xlu0 %6095, %v5742
          %v6097 = vpop.permute.xlu0 %6096
          %6100 = vset.pattern.permute.xlu0 0
          %6101 = vperm.xlu0 %6100, %v5743
          %v6102 = vpop.permute.xlu0 %6101
          %6105 = vset.pattern.permute.xlu0 0
          %6106 = vperm.xlu0 %6105, %v5744
          %v6107 = vpop.permute.xlu0 %6106
          %6110 = vset.pattern.permute.xlu0 0
          %6111 = vperm.xlu0 %6110, %v5745
          %v6112 = vpop.permute.xlu0 %6111
          %6115 = vset.pattern.permute.xlu0 0
          %6116 = vperm.xlu0 %6115, %v5746
          %v6117 = vpop.permute.xlu0 %6116
          %6120 = vset.pattern.permute.xlu0 0
          %6121 = vperm.xlu0 %6120, %v5747
          %v6122 = vpop.permute.xlu0 %6121
          %6125 = vset.pattern.permute.xlu0 0
          %6126 = vperm.xlu0 %6125, %v5748
          %v6127 = vpop.permute.xlu0 %6126
          %6130 = vset.pattern.permute.xlu0 0
          %6131 = vperm.xlu0 %6130, %v5749
          %v6132 = vpop.permute.xlu0 %6131
          %v6134 = vmul.f32 %v5750, %v5817
          %v6135 = vmul.f32 %v5751, %v5822
          %v6136 = vmul.f32 %v5752, %v5827
          %v6137 = vmul.f32 %v5753, %v5832
          %v6138 = vmul.f32 %v5754, %v5837
          %v6139 = vmul.f32 %v5755, %v5842
          %v6140 = vmul.f32 %v5756, %v5847
          %v6141 = vmul.f32 %v5757, %v5852
          %v6142 = vmul.f32 %v5758, %v5857
          %v6143 = vmul.f32 %v5759, %v5862
          %v6144 = vmul.f32 %v5760, %v5867
          %v6145 = vmul.f32 %v5761, %v5872
          %v6146 = vmul.f32 %v5762, %v5877
          %v6147 = vmul.f32 %v5763, %v5882
          %v6148 = vmul.f32 %v5764, %v5887
          %v6149 = vmul.f32 %v5765, %v5892
          %v6150 = vmul.f32 %v5766, %v5897
          %v6151 = vmul.f32 %v5767, %v5902
          %v6152 = vmul.f32 %v5768, %v5907
          %v6153 = vmul.f32 %v5769, %v5912
          %v6154 = vmul.f32 %v5770, %v5917
          %v6155 = vmul.f32 %v5771, %v5922
          %v6156 = vmul.f32 %v5772, %v5927
          %v6157 = vmul.f32 %v5773, %v5932
          %v6158 = vmul.f32 %v5774, %v5937
          %v6159 = vmul.f32 %v5775, %v5942
          %v6160 = vmul.f32 %v5776, %v5947
          %v6161 = vmul.f32 %v5777, %v5952
          %v6162 = vmul.f32 %v5778, %v5957
          %v6163 = vmul.f32 %v5779, %v5962
          %v6164 = vmul.f32 %v5780, %v5967
          %v6165 = vmul.f32 %v5781, %v5972
          %v6166 = vmul.f32 %v5782, %v5977
          %v6167 = vmul.f32 %v5783, %v5982
          %v6168 = vmul.f32 %v5784, %v5987
          %v6169 = vmul.f32 %v5785, %v5992
          %v6170 = vmul.f32 %v5786, %v5997
          %v6171 = vmul.f32 %v5787, %v6002
          %v6172 = vmul.f32 %v5788, %v6007
          %v6173 = vmul.f32 %v5789, %v6012
          %v6174 = vmul.f32 %v5790, %v6017
          %v6175 = vmul.f32 %v5791, %v6022
          %v6176 = vmul.f32 %v5792, %v6027
          %v6177 = vmul.f32 %v5793, %v6032
          %v6178 = vmul.f32 %v5794, %v6037
          %v6179 = vmul.f32 %v5795, %v6042
          %v6180 = vmul.f32 %v5796, %v6047
          %v6181 = vmul.f32 %v5797, %v6052
          %v6182 = vmul.f32 %v5798, %v6057
          %v6183 = vmul.f32 %v5799, %v6062
          %v6184 = vmul.f32 %v5800, %v6067
          %v6185 = vmul.f32 %v5801, %v6072
          %v6186 = vmul.f32 %v5802, %v6077
          %v6187 = vmul.f32 %v5803, %v6082
          %v6188 = vmul.f32 %v5804, %v6087
          %v6189 = vmul.f32 %v5805, %v6092
          %v6190 = vmul.f32 %v5806, %v6097
          %v6191 = vmul.f32 %v5807, %v6102
          %v6192 = vmul.f32 %v5808, %v6107
          %v6193 = vmul.f32 %v5809, %v6112
          %v6194 = vmul.f32 %v5810, %v6117
          %v6195 = vmul.f32 %v5811, %v6122
          %v6196 = vmul.f32 %v5812, %v6127
          %v6197 = vmul.f32 %v5813, %v6132
          %6198 = vxpose.xlu0.b32.start [1/16] %v6134, 128
          %6199 = vxpose.xlu0.b32.cont [2/16] %v6135, 128
          %6200 = vxpose.xlu0.b32.cont [3/16] %v6136, 128
          %6201 = vxpose.xlu0.b32.cont [4/16] %v6137, 128
          %6202 = vxpose.xlu0.b32.cont [5/16] %v6138, 128
          %6203 = vxpose.xlu0.b32.cont [6/16] %v6139, 128
          %6204 = vxpose.xlu0.b32.cont [7/16] %v6140, 128
          %6205 = vxpose.xlu0.b32.cont [8/16] %v6141, 128
          %6206 = vxpose.xlu0.b32.cont [9/16] %v6142, 128
          %6207 = vxpose.xlu0.b32.cont [10/16] %v6143, 128
          %6208 = vxpose.xlu0.b32.cont [11/16] %v6144, 128
          %6209 = vxpose.xlu0.b32.cont [12/16] %v6145, 128
          %6210 = vxpose.xlu0.b32.cont [13/16] %v6146, 128
          %6211 = vxpose.xlu0.b32.cont [14/16] %v6147, 128
          %6212 = vxpose.xlu0.b32.cont [15/16] %v6148, 128
          %6213 = vxpose.xlu0.b32.end [16/16] %v6149, 128
          %v6214 = vpop.trf.xlu0
          %v6215 = vpop.trf.xlu0
          %v6216 = vpop.trf.xlu0
          %v6217 = vpop.trf.xlu0
          %v6218 = vpop.trf.xlu0
          %v6219 = vpop.trf.xlu0
          %v6220 = vpop.trf.xlu0
          %v6221 = vpop.trf.xlu0
          %v6222 = vpop.trf.xlu0
          %v6223 = vpop.trf.xlu0
          %v6224 = vpop.trf.xlu0
          %v6225 = vpop.trf.xlu0
          %v6226 = vpop.trf.xlu0
          %v6227 = vpop.trf.xlu0
          %v6228 = vpop.trf.xlu0
          %v6229 = vpop.trf.xlu0
          %6230 = vxpose.xlu0.b32.start [1/16] %v6150, 128
          %6231 = vxpose.xlu0.b32.cont [2/16] %v6151, 128
          %6232 = vxpose.xlu0.b32.cont [3/16] %v6152, 128
          %6233 = vxpose.xlu0.b32.cont [4/16] %v6153, 128
          %6234 = vxpose.xlu0.b32.cont [5/16] %v6154, 128
          %6235 = vxpose.xlu0.b32.cont [6/16] %v6155, 128
          %6236 = vxpose.xlu0.b32.cont [7/16] %v6156, 128
          %6237 = vxpose.xlu0.b32.cont [8/16] %v6157, 128
          %6238 = vxpose.xlu0.b32.cont [9/16] %v6158, 128
          %6239 = vxpose.xlu0.b32.cont [10/16] %v6159, 128
          %6240 = vxpose.xlu0.b32.cont [11/16] %v6160, 128
          %6241 = vxpose.xlu0.b32.cont [12/16] %v6161, 128
          %6242 = vxpose.xlu0.b32.cont [13/16] %v6162, 128
          %6243 = vxpose.xlu0.b32.cont [14/16] %v6163, 128
          %6244 = vxpose.xlu0.b32.cont [15/16] %v6164, 128
          %6245 = vxpose.xlu0.b32.end [16/16] %v6165, 128
          %v6246 = vpop.trf.xlu0
          %v6247 = vpop.trf.xlu0
          %v6248 = vpop.trf.xlu0
          %v6249 = vpop.trf.xlu0
          %v6250 = vpop.trf.xlu0
          %v6251 = vpop.trf.xlu0
          %v6252 = vpop.trf.xlu0
          %v6253 = vpop.trf.xlu0
          %v6254 = vpop.trf.xlu0
          %v6255 = vpop.trf.xlu0
          %v6256 = vpop.trf.xlu0
          %v6257 = vpop.trf.xlu0
          %v6258 = vpop.trf.xlu0
          %v6259 = vpop.trf.xlu0
          %v6260 = vpop.trf.xlu0
          %v6261 = vpop.trf.xlu0
          %6262 = vxpose.xlu0.b32.start [1/16] %v6166, 128
          %6263 = vxpose.xlu0.b32.cont [2/16] %v6167, 128
          %6264 = vxpose.xlu0.b32.cont [3/16] %v6168, 128
          %6265 = vxpose.xlu0.b32.cont [4/16] %v6169, 128
          %6266 = vxpose.xlu0.b32.cont [5/16] %v6170, 128
          %6267 = vxpose.xlu0.b32.cont [6/16] %v6171, 128
          %6268 = vxpose.xlu0.b32.cont [7/16] %v6172, 128
          %6269 = vxpose.xlu0.b32.cont [8/16] %v6173, 128
          %6270 = vxpose.xlu0.b32.cont [9/16] %v6174, 128
          %6271 = vxpose.xlu0.b32.cont [10/16] %v6175, 128
          %6272 = vxpose.xlu0.b32.cont [11/16] %v6176, 128
          %6273 = vxpose.xlu0.b32.cont [12/16] %v6177, 128
          %6274 = vxpose.xlu0.b32.cont [13/16] %v6178, 128
          %6275 = vxpose.xlu0.b32.cont [14/16] %v6179, 128
          %6276 = vxpose.xlu0.b32.cont [15/16] %v6180, 128
          %6277 = vxpose.xlu0.b32.end [16/16] %v6181, 128
          %v6278 = vpop.trf.xlu0
          %v6279 = vpop.trf.xlu0
          %v6280 = vpop.trf.xlu0
          %v6281 = vpop.trf.xlu0
          %v6282 = vpop.trf.xlu0
          %v6283 = vpop.trf.xlu0
          %v6284 = vpop.trf.xlu0
          %v6285 = vpop.trf.xlu0
          %v6286 = vpop.trf.xlu0
          %v6287 = vpop.trf.xlu0
          %v6288 = vpop.trf.xlu0
          %v6289 = vpop.trf.xlu0
          %v6290 = vpop.trf.xlu0
          %v6291 = vpop.trf.xlu0
          %v6292 = vpop.trf.xlu0
          %v6293 = vpop.trf.xlu0
          %6294 = vxpose.xlu0.b32.start [1/16] %v6182, 128
          %6295 = vxpose.xlu0.b32.cont [2/16] %v6183, 128
          %6296 = vxpose.xlu0.b32.cont [3/16] %v6184, 128
          %6297 = vxpose.xlu0.b32.cont [4/16] %v6185, 128
          %6298 = vxpose.xlu0.b32.cont [5/16] %v6186, 128
          %6299 = vxpose.xlu0.b32.cont [6/16] %v6187, 128
          %6300 = vxpose.xlu0.b32.cont [7/16] %v6188, 128
          %6301 = vxpose.xlu0.b32.cont [8/16] %v6189, 128
          %6302 = vxpose.xlu0.b32.cont [9/16] %v6190, 128
          %6303 = vxpose.xlu0.b32.cont [10/16] %v6191, 128
          %6304 = vxpose.xlu0.b32.cont [11/16] %v6192, 128
          %6305 = vxpose.xlu0.b32.cont [12/16] %v6193, 128
          %6306 = vxpose.xlu0.b32.cont [13/16] %v6194, 128
          %6307 = vxpose.xlu0.b32.cont [14/16] %v6195, 128
          %6308 = vxpose.xlu0.b32.cont [15/16] %v6196, 128
          %6309 = vxpose.xlu0.b32.end [16/16] %v6197, 128
          %v6310 = vpop.trf.xlu0
          %v6311 = vpop.trf.xlu0
          %v6312 = vpop.trf.xlu0
          %v6313 = vpop.trf.xlu0
          %v6314 = vpop.trf.xlu0
          %v6315 = vpop.trf.xlu0
          %v6316 = vpop.trf.xlu0
          %v6317 = vpop.trf.xlu0
          %v6318 = vpop.trf.xlu0
          %v6319 = vpop.trf.xlu0
          %v6320 = vpop.trf.xlu0
          %v6321 = vpop.trf.xlu0
          %v6322 = vpop.trf.xlu0
          %v6323 = vpop.trf.xlu0
          %v6324 = vpop.trf.xlu0
          %v6325 = vpop.trf.xlu0
          %6326 = vst [vmem:[%s267] sm:$0xff] %v6214
          %6327 = vst [vmem:[%s267 + $0x8] sm:$0xff] %v6246
          %6328 = vst [vmem:[%s267 + $0x10] sm:$0xff] %v6278
          %6329 = vst [vmem:[%s267 + $0x18] sm:$0xff] %v6310
          %6330 = vst [vmem:[%s267 + $0x20] sm:$0xff] %v6215
          %6331 = vst [vmem:[%s267 + $0x28] sm:$0xff] %v6247
          %6332 = vst [vmem:[%s267 + $0x30] sm:$0xff] %v6279
          %6333 = vst [vmem:[%s267 + $0x38] sm:$0xff] %v6311
        $region44: #{tpu_custom_call.1} parent=31 // pred_fallthru
          _
        %s6334 = sand.u32 %s133, 1
        %s6335 = scalar_lea.sflag [#allocation7], %s6334
        %s6336 = sand.u32 %s133, 1
        %s6337 = smul.addr %s6336, 64
        %s6338 = scalar_lea.vmem [#allocation8], %s6337
        // Predicated region
        $region45: #{tpu_custom_call.1} parent=31 // pred_check
          %p6339 = pneg %p143
        $region46: #{tpu_custom_call.1} parent=31 // pred_check_branch
          %6341 = sbr.rel (%p6339) target = $region48
        $region47: #{tpu_custom_call.1} parent=31 // pred_region
          %s6342 = smul.u32 4, %s26
          %6344 = vsyncadd %s6335, 0
          %s6345 = smul.addr %s25, 16
          %s6346 = sadd.s32 %s6342, %s6345
          %s6347 = smul.addr %s6346, 8
          %s6348 = scalar_lea.hbm %s3, %s6347
          %s6349 = sshll.u32 %s6338, 4
          %s6350 = int_to_ptr.vmem [resolvable:$true] %s6349
          %s6351 = sshll.u32 %s6348, 4
          %s6352 = int_to_ptr.hbm [resolvable:$true] %s6351
          %6357 = dma.vmem_to_hbm [thread:$0]  %s6350, 1024, %s6352, %s6335, 512, 1024, 32
        $region48: #{tpu_custom_call.1} parent=31 // pred_fallthru
          _
      $region32: #{tpu_custom_call.1} parent=5 // pred_fallthru
        _
      %p6358 = scmp.le.s32.totalorder 2, %s15
      // Predicated region
      $region49: #{tpu_custom_call.1} parent=5 // pred_check
        %p6359 = pneg %p6358
      $region50: #{tpu_custom_call.1} parent=5 // pred_check_branch
        %6361 = sbr.rel (%p6359) target = $region52
      $region51: #{tpu_custom_call.1} parent=5 // pred_region
        %s6362 = ssub.s32 %s15, 2
        // Predicated region
        $region53: #{tpu_custom_call.1} parent=51 // pred_check
          %p6363 = pneg %p149
        $region54: #{tpu_custom_call.1} parent=51 // pred_check_branch
          %6365 = sbr.rel (%p6363) target = $region56
        $region55: #{tpu_custom_call.1} parent=51 // pred_region
          %s6366 = sand.u32 %s134, 1
          %s6367 = scalar_lea.sflag [#allocation7], %s6366
          %s6368 = sand.u32 %s134, 1
          %s6369 = smul.addr %s6368, 64
          %s6370 = scalar_lea.vmem [#allocation8], %s6369
          %6372 = dma.done %s6367, 1024
        $region56: #{tpu_custom_call.1} parent=51 // pred_fallthru
          _
      $region52: #{tpu_custom_call.1} parent=5 // pred_fallthru
        _
    $region6: #{tpu_custom_call.1} parent=1 // loop_footer
      %s19 = sadd.s32 1, %s15
    $region7: #{tpu_custom_call.1} parent=1 // loop_footer_branch
      %14 = sbr.rel target = $region3
    $region8: #{tpu_custom_call.1} parent=1 // loop_exit
      _
    %6373 = vsyncpa [#allocation6], 1
    %s6374 = scalar_lea.sflag [#allocation6], 1
    %6375 = vsyncpa %s6374, 1
    %6376 = vsyncpa [#allocation7], 1
    %s6377 = scalar_lea.sflag [#allocation7], 1
    %6378 = vsyncpa %s6377, 1

</llo_original>
